<compile_context>
chip_gen: v7x
topology: tpu7x:2x2x1
jax: 0.10.0
libtpu: 0.0.40
codegen_flags: <defaults>
</compile_context>

<pallas_src>
import jax
import jax.numpy as jnp
from jax.experimental import pallas as pl
from jax.experimental.pallas import tpu as pltpu


def _round_up(x: int, m: int) -> int:
    return (x + m - 1) // m * m


_UNROLL_T_MAX = 16  # fully unroll the recurrence only for short sequences


# --------------------------- fused GRU + head kernel -------------------------

def fused_gru_head_kernel(tok_ref, wih_ref, whh_ref, bih_ref, bhh_ref,
                          wlin_ref, blin_ref, h0_ref,
                          out_ref, hN_ref, gi_scr, y_scr):
    """Whole forward pass in one invocation.

    tok_ref : (T*Bp, 1)  int32    time-major flattened tokens (batch-padded)
    wih_ref : (Vk, 3*Hp) mxu_dt   input->gates weights (pre-transposed, padded)
    whh_ref : (Hp, 3*Hp) mxu_dt   hidden->gates weights (pre-transposed, padded)
    bih_ref/bhh_ref : (1, 3*Hp) f32
    wlin_ref: (Hp, Vp)  mxu_dt    linear head weights (pre-transposed, padded)
    blin_ref: (1, Vp)   f32
    h0_ref  : (Bp, Hp)  f32
    out_ref : (T*Bp, Vp) f32      logits (lane-dense, sliced in wrapper)
    hN_ref  : (Bp, Hp)   f32      final hidden state
    gi_scr  : VMEM (T, Bp, 3*Hp) f32   staged input projections
    y_scr   : VMEM (T, Bp, Hp)   f32   per-step hidden states for the head
    """
    T, Bp, Hp3 = gi_scr.shape
    Hp = y_scr.shape[2]
    Vk = wih_ref.shape[0]
    mxu_dtype = whh_ref.dtype           # bf16 (full-rate MXU) or f32

    # ---- hoisted input projection: one matmul covers every timestep --------
    tok = tok_ref[...]                                              # (T*Bp, 1)
    onehot = (jax.lax.broadcasted_iota(jnp.int32, (T * Bp, Vk), 1)
              == tok).astype(mxu_dtype)                             # exact in bf16
    gi_all = jnp.dot(onehot, wih_ref[...],
                     preferred_element_type=jnp.float32) + bih_ref[...]
    # Stage in VMEM so the serial recurrence below does not carry gi_all live
    # across every step (bounded live ranges -> no spills).
    gi_scr[...] = gi_all.reshape(T, Bp, Hp3)

    bhh = bhh_ref[...]                                              # (1, 3Hp): tiny

    def step(t, h):
        # W_hh is re-read from VMEM each step instead of being pinned live
        # (128x384 = ~48 vregs) across the whole loop.
        # TODO(synk): drive the MXU weight-stationary (pltpu.matmul_push_rhs
        # once before the loop, matmul_acc_lhs/matmul_pop per step) to also
        # drop the per-step reload + weight push.
        gi = gi_scr[t]                                              # (Bp, 3Hp)
        gh = jnp.dot(h.astype(mxu_dtype), whh_ref[...],
                     preferred_element_type=jnp.float32) + bhh      # (Bp, 3Hp)
        r = jax.nn.sigmoid(gi[:, 0:Hp] + gh[:, 0:Hp])               # f32 gate math
        z = jax.nn.sigmoid(gi[:, Hp:2 * Hp] + gh[:, Hp:2 * Hp])
        n = jnp.tanh(gi[:, 2 * Hp:3 * Hp] + r * gh[:, 2 * Hp:3 * Hp])
        h = (1.0 - z) * n + z * h
        y_scr[t] = h                                                # one aligned vst
        return h

    h = h0_ref[...]                                                 # (Bp, Hp)
    if T <= _UNROLL_T_MAX:
        for t in range(T):                                          # static unroll
            h = step(t, h)
    else:
        # Long sequences: bound live ranges / code size with a real loop.
        h = jax.lax.fori_loop(0, T, step, h, unroll=2)

    # ---- fused linear head: single (T*Bp, Hp) @ (Hp, Vp) matmul ------------
    y_flat = y_scr[...].reshape(T * Bp, Hp).astype(mxu_dtype)
    out_ref[...] = (jnp.dot(y_flat, wlin_ref[...],
                            preferred_element_type=jnp.float32) + blin_ref[...])
    hN_ref[...] = h                                                 # written once


# ------------------------------- RNNModel wrapper ---------------------------

def rnn_model_forward(tokens, state, params, vocab_size,
                      mxu_dtype=jnp.bfloat16):
    """tokens: [batch, num_steps] int32, state: [1, batch, hidden].
    Returns (output [num_steps*batch, vocab], new_state [1, batch, hidden]).
    mxu_dtype: dtype of the matmul operands (bf16 for full-rate MXU, or f32
    for bit-exact matmuls).  Gate math is always f32."""
    B, T = tokens.shape
    H = params["w_hh"].shape[1]
    V = vocab_size
    Bp = _round_up(max(B, 8), 8)   # f32 sublane minimum
    # TODO(synk): for large H on v6e/v7x, size per-gate Hp in multiples of 256
    # to fill the 256x256 MXU tile (128 is exact for v5e's 128x128 MXU).
    Hp = _round_up(H, 128)         # lane-aligned gate blocks
    Vk = _round_up(V, 128)         # padded K dim of the input projection
    Vp = _round_up(V, 128)         # lane-dense output store
    TBp = T * Bp

    def split_gates(w):
        return w[0:H], w[H:2 * H], w[2 * H:3 * H]

    # W_ih: (3H, V) -> per-gate (H,V) -> pad to (Hp,Vk) -> concat -> T -> (Vk, 3Hp)
    wih_t = jnp.concatenate(
        [jnp.pad(g, ((0, Hp - H), (0, Vk - V))) for g in split_gates(params["w_ih"])],
        axis=0).T.astype(mxu_dtype)

    # W_hh: (3H, H) -> per-gate (H,H) -> pad to (Hp,Hp) -> concat -> T -> (Hp, 3Hp)
    whh_t = jnp.concatenate(
        [jnp.pad(g, ((0, Hp - H), (0, Hp - H))) for g in split_gates(params["w_hh"])],
        axis=0).T.astype(mxu_dtype)

    def pad_bias(b):
        return jnp.concatenate(
            [jnp.pad(g, (0, Hp - H)) for g in split_gates(b)])[None, :]

    bih = pad_bias(params["b_ih"]).astype(jnp.float32)               # (1, 3Hp)
    bhh = pad_bias(params["b_hh"]).astype(jnp.float32)               # (1, 3Hp)

    wlin_t = jnp.pad(params["w_lin"].T,
                     ((0, Hp - H), (0, Vp - V))).astype(mxu_dtype)   # (Hp, Vp)
    blin = jnp.pad(params["b_lin"], (0, Vp - V))[None, :].astype(jnp.float32)

    h0 = jnp.pad(state[0], ((0, Bp - B), (0, Hp - H)))               # (Bp, Hp)

    # Time-major tokens, batch-padded with an out-of-range token (all-zero
    # one-hot row -> padded batch rows stay inert and are sliced away below).
    tok_tm = jnp.pad(tokens.T.astype(jnp.int32), ((0, 0), (0, Bp - B)),
                     constant_values=V)                              # (T, Bp)
    tok = tok_tm.reshape(TBp, 1)

    # Explicit VMEM budget (v7x only has 64 MiB physical VMEM).
    itm = jnp.dtype(mxu_dtype).itemsize
    vmem_bytes = (TBp * 4                          # tokens
                  + Vk * 3 * Hp * itm              # W_ih
                  + Hp * 3 * Hp * itm              # W_hh
                  + 2 * 3 * Hp * 4                 # biases
                  + Hp * Vp * itm + Vp * 4         # head weights/bias
                  + Bp * Hp * 4                    # h0
                  + TBp * Vp * 4 + Bp * Hp * 4     # outputs
                  + T * Bp * 3 * Hp * 4            # gi_scr
                  + T * Bp * Hp * 4)               # y_scr
    vmem_limit = int(min(64 * 1024 * 1024,
                         max(4 * vmem_bytes, 8 * 1024 * 1024)))

    out_p, hN_p = pl.pallas_call(
        fused_gru_head_kernel,
        out_shape=(jax.ShapeDtypeStruct((TBp, Vp), jnp.float32),
                   jax.ShapeDtypeStruct((Bp, Hp), jnp.float32)),
        grid=(1,),
        in_specs=[
            pl.BlockSpec((TBp, 1), lambda i: (0, 0)),         # tokens
            pl.BlockSpec((Vk, 3 * Hp), lambda i: (0, 0)),     # W_ih^T
            pl.BlockSpec((Hp, 3 * Hp), lambda i: (0, 0)),     # W_hh^T
            pl.BlockSpec((1, 3 * Hp), lambda i: (0, 0)),      # b_ih
            pl.BlockSpec((1, 3 * Hp), lambda i: (0, 0)),      # b_hh
            pl.BlockSpec((Hp, Vp), lambda i: (0, 0)),         # W_lin^T
            pl.BlockSpec((1, Vp), lambda i: (0, 0)),          # b_lin
            pl.BlockSpec((Bp, Hp), lambda i: (0, 0)),         # h_0
        ],
        out_specs=(
            pl.BlockSpec((TBp, Vp), lambda i: (0, 0)),        # logits (lane-dense)
            pl.BlockSpec((Bp, Hp), lambda i: (0, 0)),         # h_N
        ),
        scratch_shapes=[pltpu.VMEM((T, Bp, 3 * Hp), jnp.float32),   # gi staging
                        pltpu.VMEM((T, Bp, Hp), jnp.float32)],      # per-step h
        compiler_params=pltpu.CompilerParams(
            dimension_semantics=("arbitrary",),
            vmem_limit_bytes=vmem_limit),
    )(tok, wih_t, whh_t, bih, bhh, wlin_t, blin, h0)

    # Strip batch/vocab/hidden padding (small XLA slice; keep Vp downstream if
    # the consumer can take lane-padded logits).
    out = out_p.reshape(T, Bp, Vp)[:, :B, :V].reshape(T * B, V)
    hN = hN_p[:B, :H][None]
    return out, hN


# ------------------------------- Pure-JAX reference -------------------------

def rnn_model_reference(tokens, state, params, vocab_size):
    x = jax.nn.one_hot(tokens.T, vocab_size, dtype=jnp.float32)  # (T, B, V)
    w_ih, w_hh, b_ih, b_hh = params["w_ih"], params["w_hh"], params["b_ih"], params["b_hh"]
    H = w_hh.shape[1]

    def step(h, x_t):
        gi = x_t @ w_ih.T + b_ih
        gh = h @ w_hh.T + b_hh
        r = jax.nn.sigmoid(gi[:, :H] + gh[:, :H])
        z = jax.nn.sigmoid(gi[:, H:2 * H] + gh[:, H:2 * H])
        n = jnp.tanh(gi[:, 2 * H:] + r * gh[:, 2 * H:])
        h_new = (1.0 - z) * n + z * h
        return h_new, h_new

    h_n, y = jax.lax.scan(step, state[0], x)
    out = y.reshape(-1, H) @ params["w_lin"].T + params["b_lin"]
    return out, h_n[None]


# ------------------------------------ main -----------------------------------

if __name__ == "__main__":
    batch_size, num_steps = 4, 8
    vocab_size, num_hiddens = 32, 64

    key = jax.random.PRNGKey(0)
    ks = jax.random.split(key, 7)
    k_scale = 1.0 / jnp.sqrt(num_hiddens)

    # nn.GRU(vocab_size, num_hiddens) + nn.Linear(num_hiddens, vocab_size) params
    params = {
        "w_ih": jax.random.uniform(ks[0], (3 * num_hiddens, vocab_size),
                                   jnp.float32, -k_scale, k_scale),
        "w_hh": jax.random.uniform(ks[1], (3 * num_hiddens, num_hiddens),
                                   jnp.float32, -k_scale, k_scale),
        "b_ih": jax.random.uniform(ks[2], (3 * num_hiddens,),
                                   jnp.float32, -k_scale, k_scale),
        "b_hh": jax.random.uniform(ks[3], (3 * num_hiddens,),
                                   jnp.float32, -k_scale, k_scale),
        "w_lin": jax.random.uniform(ks[4], (vocab_size, num_hiddens),
                                    jnp.float32, -k_scale, k_scale),
        "b_lin": jax.random.uniform(ks[5], (vocab_size,),
                                    jnp.float32, -k_scale, k_scale),
    }

    tokens = jax.random.randint(ks[6], (batch_size, num_steps), 0, vocab_size,
                                dtype=jnp.int32)
    # begin_state: zeros [num_directions*num_layers=1, batch, hidden]
    state = jnp.zeros((1, batch_size, num_hiddens), jnp.float32)

    ref_out, ref_state = rnn_model_reference(tokens, state, params, vocab_size)

    # f32 MXU operands: bit-faithful path, tight tolerance.
    out32, st32 = rnn_model_forward(tokens, state, params, vocab_size,
                                    mxu_dtype=jnp.float32)
    out32 = jax.block_until_ready(out32)
    st32 = jax.block_until_ready(st32)
    assert out32.shape == (batch_size * num_steps, vocab_size)
    assert st32.shape == (1, batch_size, num_hiddens)
    assert jnp.allclose(out32, ref_out, atol=1e-5, rtol=1e-5)
    assert jnp.allclose(st32, ref_state, atol=1e-5, rtol=1e-5)

    # bf16 MXU operands (f32 accumulation, f32 gate math): looser tolerance
    # confined to the matmul contributions.
    out16, st16 = rnn_model_forward(tokens, state, params, vocab_size,
                                    mxu_dtype=jnp.bfloat16)
    out16 = jax.block_until_ready(out16)
    st16 = jax.block_until_ready(st16)
    assert out16.shape == (batch_size * num_steps, vocab_size)
    assert st16.shape == (1, batch_size, num_hiddens)
    assert jnp.allclose(out16, ref_out, atol=5e-2, rtol=5e-2)
    assert jnp.allclose(st16, ref_state, atol=5e-2, rtol=5e-2)

    print("KERNEL_OK")
</pallas_src>

<mosaic_0001>
module attributes {stable_mosaic.version = 11 : i64} {
  func.func @fused_gru_head_kernel(%arg0: i32, %arg1: memref<64x1xi32, #tpu.memory_space<vmem>>, %arg2: memref<128x384xf32, #tpu.memory_space<vmem>>, %arg3: memref<128x384xf32, #tpu.memory_space<vmem>>, %arg4: memref<1x384xf32, #tpu.memory_space<vmem>>, %arg5: memref<1x384xf32, #tpu.memory_space<vmem>>, %arg6: memref<128x128xf32, #tpu.memory_space<vmem>>, %arg7: memref<1x128xf32, #tpu.memory_space<vmem>>, %arg8: memref<8x128xf32, #tpu.memory_space<vmem>>, %arg9: memref<64x128xf32, #tpu.memory_space<vmem>>, %arg10: memref<8x128xf32, #tpu.memory_space<vmem>>, %arg11: memref<8x8x384xf32, #tpu.memory_space<vmem>>, %arg12: memref<8x8x128xf32, #tpu.memory_space<vmem>>) attributes {dimension_semantics = [#tpu.dimension_semantics<arbitrary>], iteration_bounds = array<i64: 1>, scalar_prefetch = 0 : i64, scratch_operands = 2 : i64, tpu.core_type = #tpu.core_type<tc>, window_params = [{pipeline_mode = #tpu.pipeline_mode<synchronous>, transform_indices = @transform_0, window_bounds = array<i64: 64, 1>}, {pipeline_mode = #tpu.pipeline_mode<synchronous>, transform_indices = @transform_1, window_bounds = array<i64: 128, 384>}, {pipeline_mode = #tpu.pipeline_mode<synchronous>, transform_indices = @transform_2, window_bounds = array<i64: 128, 384>}, {pipeline_mode = #tpu.pipeline_mode<synchronous>, transform_indices = @transform_3, window_bounds = array<i64: 1, 384>}, {pipeline_mode = #tpu.pipeline_mode<synchronous>, transform_indices = @transform_4, window_bounds = array<i64: 1, 384>}, {pipeline_mode = #tpu.pipeline_mode<synchronous>, transform_indices = @transform_5, window_bounds = array<i64: 128, 128>}, {pipeline_mode = #tpu.pipeline_mode<synchronous>, transform_indices = @transform_6, window_bounds = array<i64: 1, 128>}, {pipeline_mode = #tpu.pipeline_mode<synchronous>, transform_indices = @transform_7, window_bounds = array<i64: 8, 128>}, {pipeline_mode = #tpu.pipeline_mode<synchronous>, transform_indices = @transform_8, window_bounds = array<i64: 64, 128>}, {pipeline_mode = #tpu.pipeline_mode<synchronous>, transform_indices = @transform_9, window_bounds = array<i64: 8, 128>}]} {
    %c0 = arith.constant 0 : index
    %c0_0 = arith.constant 0 : index
    %0 = vector.load %arg1[%c0, %c0_0] : memref<64x1xi32, #tpu.memory_space<vmem>>, vector<64x1xi32>
    %1 = tpu.iota {dimensions = array<i32: 1>} : vector<64x128xi32>
    %2 = vector.broadcast %0 : vector<64x1xi32> to vector<64x128xi32>
    %3 = arith.cmpi eq, %1, %2 : vector<64x128xi32>
    %4 = arith.extui %3 : vector<64x128xi1> to vector<64x128xi32>
    %5 = arith.sitofp %4 : vector<64x128xi32> to vector<64x128xf32>
    %c0_1 = arith.constant 0 : index
    %c0_2 = arith.constant 0 : index
    %6 = vector.load %arg2[%c0_1, %c0_2] : memref<128x384xf32, #tpu.memory_space<vmem>>, vector<128x384xf32>
    %cst = arith.constant dense<0.000000e+00> : vector<64x384xf32>
    %7 = tpu.matmul %5, %6, %cst {dimension_numbers = #tpu.dot_dimension_numbers<[1], [0], [0], [1], [0, 0, 1, 1], [], []>} : vector<64x128xf32>, vector<128x384xf32>, vector<64x384xf32> -> vector<64x384xf32>
    %c0_3 = arith.constant 0 : index
    %c0_4 = arith.constant 0 : index
    %8 = vector.load %arg4[%c0_3, %c0_4] : memref<1x384xf32, #tpu.memory_space<vmem>>, vector<1x384xf32>
    %9 = vector.broadcast %8 : vector<1x384xf32> to vector<64x384xf32>
    %10 = arith.addf %7, %9 : vector<64x384xf32>
    %11 = vector.shape_cast %10 : vector<64x384xf32> to vector<8x8x384xf32>
    %c0_5 = arith.constant 0 : index
    %c0_6 = arith.constant 0 : index
    %c0_7 = arith.constant 0 : index
    %12 = vector.load %arg11[%c0_5, %c0_6, %c0_7] : memref<8x8x384xf32, #tpu.memory_space<vmem>>, vector<8x8x384xf32>
    tpu.vector_store %arg11[%c0_5, %c0_6, %c0_7], %11 {strides = array<i32>} : memref<8x8x384xf32, #tpu.memory_space<vmem>>, vector<8x8x384xf32>,
    %c0_8 = arith.constant 0 : index
    %c0_9 = arith.constant 0 : index
    %13 = vector.load %arg5[%c0_8, %c0_9] : memref<1x384xf32, #tpu.memory_space<vmem>>, vector<1x384xf32>
    %c0_10 = arith.constant 0 : index
    %c0_11 = arith.constant 0 : index
    %14 = vector.load %arg8[%c0_10, %c0_11] : memref<8x128xf32, #tpu.memory_space<vmem>>, vector<8x128xf32>
    %c0_12 = arith.constant 0 : index
    %c0_13 = arith.constant 0 : index
    %c0_14 = arith.constant 0 : index
    %15 = vector.load %arg11[%c0_12, %c0_13, %c0_14] : memref<8x8x384xf32, #tpu.memory_space<vmem>>, vector<1x8x384xf32>
    %16 = vector.shape_cast %15 : vector<1x8x384xf32> to vector<8x384xf32>
    %c0_15 = arith.constant 0 : index
    %c0_16 = arith.constant 0 : index
    %17 = vector.load %arg3[%c0_15, %c0_16] : memref<128x384xf32, #tpu.memory_space<vmem>>, vector<128x384xf32>
    %cst_17 = arith.constant dense<0.000000e+00> : vector<8x384xf32>
    %18 = tpu.matmul %14, %17, %cst_17 {dimension_numbers = #tpu.dot_dimension_numbers<[1], [0], [0], [1], [0, 0, 1, 1], [], []>} : vector<8x128xf32>, vector<128x384xf32>, vector<8x384xf32> -> vector<8x384xf32>
    %19 = vector.broadcast %13 : vector<1x384xf32> to vector<8x384xf32>
    %20 = arith.addf %18, %19 : vector<8x384xf32>
    %21 = vector.extract_strided_slice %16 {offsets = [0, 0], sizes = [8, 128], strides = [1, 1]} : vector<8x384xf32> to vector<8x128xf32>
    %22 = vector.extract_strided_slice %20 {offsets = [0, 0], sizes = [8, 128], strides = [1, 1]} : vector<8x384xf32> to vector<8x128xf32>
    %23 = arith.addf %21, %22 : vector<8x128xf32>
    %24 = arith.negf %23 : vector<8x128xf32>
    %25 = math.exp %24 : vector<8x128xf32>
    %cst_18 = arith.constant 1.000000e+00 : f32
    %26 = vector.broadcast %cst_18 : f32 to vector<8x128xf32>
    %27 = arith.addf %26, %25 : vector<8x128xf32>
    %28 = arith.divf %26, %27 : vector<8x128xf32>
    %29 = vector.extract_strided_slice %16 {offsets = [0, 128], sizes = [8, 128], strides = [1, 1]} : vector<8x384xf32> to vector<8x128xf32>
    %30 = vector.extract_strided_slice %20 {offsets = [0, 128], sizes = [8, 128], strides = [1, 1]} : vector<8x384xf32> to vector<8x128xf32>
    %31 = arith.addf %29, %30 : vector<8x128xf32>
    %32 = arith.negf %31 : vector<8x128xf32>
    %33 = math.exp %32 : vector<8x128xf32>
    %cst_19 = arith.constant 1.000000e+00 : f32
    %34 = vector.broadcast %cst_19 : f32 to vector<8x128xf32>
    %35 = arith.addf %34, %33 : vector<8x128xf32>
    %36 = arith.divf %34, %35 : vector<8x128xf32>
    %37 = vector.extract_strided_slice %16 {offsets = [0, 256], sizes = [8, 128], strides = [1, 1]} : vector<8x384xf32> to vector<8x128xf32>
    %38 = vector.extract_strided_slice %20 {offsets = [0, 256], sizes = [8, 128], strides = [1, 1]} : vector<8x384xf32> to vector<8x128xf32>
    %39 = arith.mulf %28, %38 : vector<8x128xf32>
    %40 = arith.addf %37, %39 : vector<8x128xf32>
    %41 = math.tanh %40 : vector<8x128xf32>
    %cst_20 = arith.constant 1.000000e+00 : f32
    %42 = vector.broadcast %cst_20 : f32 to vector<8x128xf32>
    %43 = arith.subf %42, %36 : vector<8x128xf32>
    %44 = arith.mulf %43, %41 : vector<8x128xf32>
    %45 = arith.mulf %36, %14 : vector<8x128xf32>
    %46 = arith.addf %44, %45 : vector<8x128xf32>
    %c0_21 = arith.constant 0 : index
    %c0_22 = arith.constant 0 : index
    %c0_23 = arith.constant 0 : index
    %47 = vector.load %arg12[%c0_21, %c0_22, %c0_23] : memref<8x8x128xf32, #tpu.memory_space<vmem>>, vector<1x8x128xf32>
    %48 = vector.shape_cast %47 : vector<1x8x128xf32> to vector<8x128xf32>
    %49 = vector.shape_cast %46 : vector<8x128xf32> to vector<1x8x128xf32>
    tpu.vector_store %arg12[%c0_21, %c0_22, %c0_23], %49 {strides = array<i32>} : memref<8x8x128xf32, #tpu.memory_space<vmem>>, vector<1x8x128xf32>,
    %c1 = arith.constant 1 : index
    %c0_24 = arith.constant 0 : index
    %c0_25 = arith.constant 0 : index
    %50 = vector.load %arg11[%c1, %c0_24, %c0_25] : memref<8x8x384xf32, #tpu.memory_space<vmem>>, vector<1x8x384xf32>
    %51 = vector.shape_cast %50 : vector<1x8x384xf32> to vector<8x384xf32>
    %c0_26 = arith.constant 0 : index
    %c0_27 = arith.constant 0 : index
    %52 = vector.load %arg3[%c0_26, %c0_27] : memref<128x384xf32, #tpu.memory_space<vmem>>, vector<128x384xf32>
    %cst_28 = arith.constant dense<0.000000e+00> : vector<8x384xf32>
    %53 = tpu.matmul %46, %52, %cst_28 {dimension_numbers = #tpu.dot_dimension_numbers<[1], [0], [0], [1], [0, 0, 1, 1], [], []>} : vector<8x128xf32>, vector<128x384xf32>, vector<8x384xf32> -> vector<8x384xf32>
    %54 = vector.broadcast %13 : vector<1x384xf32> to vector<8x384xf32>
    %55 = arith.addf %53, %54 : vector<8x384xf32>
    %56 = vector.extract_strided_slice %51 {offsets = [0, 0], sizes = [8, 128], strides = [1, 1]} : vector<8x384xf32> to vector<8x128xf32>
    %57 = vector.extract_strided_slice %55 {offsets = [0, 0], sizes = [8, 128], strides = [1, 1]} : vector<8x384xf32> to vector<8x128xf32>
    %58 = arith.addf %56, %57 : vector<8x128xf32>
    %59 = arith.negf %58 : vector<8x128xf32>
    %60 = math.exp %59 : vector<8x128xf32>
    %cst_29 = arith.constant 1.000000e+00 : f32
    %61 = vector.broadcast %cst_29 : f32 to vector<8x128xf32>
    %62 = arith.addf %61, %60 : vector<8x128xf32>
    %63 = arith.divf %61, %62 : vector<8x128xf32>
    %64 = vector.extract_strided_slice %51 {offsets = [0, 128], sizes = [8, 128], strides = [1, 1]} : vector<8x384xf32> to vector<8x128xf32>
    %65 = vector.extract_strided_slice %55 {offsets = [0, 128], sizes = [8, 128], strides = [1, 1]} : vector<8x384xf32> to vector<8x128xf32>
    %66 = arith.addf %64, %65 : vector<8x128xf32>
    %67 = arith.negf %66 : vector<8x128xf32>
    %68 = math.exp %67 : vector<8x128xf32>
    %cst_30 = arith.constant 1.000000e+00 : f32
    %69 = vector.broadcast %cst_30 : f32 to vector<8x128xf32>
    %70 = arith.addf %69, %68 : vector<8x128xf32>
    %71 = arith.divf %69, %70 : vector<8x128xf32>
    %72 = vector.extract_strided_slice %51 {offsets = [0, 256], sizes = [8, 128], strides = [1, 1]} : vector<8x384xf32> to vector<8x128xf32>
    %73 = vector.extract_strided_slice %55 {offsets = [0, 256], sizes = [8, 128], strides = [1, 1]} : vector<8x384xf32> to vector<8x128xf32>
    %74 = arith.mulf %63, %73 : vector<8x128xf32>
    %75 = arith.addf %72, %74 : vector<8x128xf32>
    %76 = math.tanh %75 : vector<8x128xf32>
    %cst_31 = arith.constant 1.000000e+00 : f32
    %77 = vector.broadcast %cst_31 : f32 to vector<8x128xf32>
    %78 = arith.subf %77, %71 : vector<8x128xf32>
    %79 = arith.mulf %78, %76 : vector<8x128xf32>
    %80 = arith.mulf %71, %46 : vector<8x128xf32>
    %81 = arith.addf %79, %80 : vector<8x128xf32>
    %c1_32 = arith.constant 1 : index
    %c0_33 = arith.constant 0 : index
    %c0_34 = arith.constant 0 : index
    %82 = vector.load %arg12[%c1_32, %c0_33, %c0_34] : memref<8x8x128xf32, #tpu.memory_space<vmem>>, vector<1x8x128xf32>
    %83 = vector.shape_cast %82 : vector<1x8x128xf32> to vector<8x128xf32>
    %84 = vector.shape_cast %81 : vector<8x128xf32> to vector<1x8x128xf32>
    tpu.vector_store %arg12[%c1_32, %c0_33, %c0_34], %84 {strides = array<i32>} : memref<8x8x128xf32, #tpu.memory_space<vmem>>, vector<1x8x128xf32>,
    %c2 = arith.constant 2 : index
    %c0_35 = arith.constant 0 : index
    %c0_36 = arith.constant 0 : index
    %85 = vector.load %arg11[%c2, %c0_35, %c0_36] : memref<8x8x384xf32, #tpu.memory_space<vmem>>, vector<1x8x384xf32>
    %86 = vector.shape_cast %85 : vector<1x8x384xf32> to vector<8x384xf32>
    %c0_37 = arith.constant 0 : index
    %c0_38 = arith.constant 0 : index
    %87 = vector.load %arg3[%c0_37, %c0_38] : memref<128x384xf32, #tpu.memory_space<vmem>>, vector<128x384xf32>
    %cst_39 = arith.constant dense<0.000000e+00> : vector<8x384xf32>
    %88 = tpu.matmul %81, %87, %cst_39 {dimension_numbers = #tpu.dot_dimension_numbers<[1], [0], [0], [1], [0, 0, 1, 1], [], []>} : vector<8x128xf32>, vector<128x384xf32>, vector<8x384xf32> -> vector<8x384xf32>
    %89 = vector.broadcast %13 : vector<1x384xf32> to vector<8x384xf32>
    %90 = arith.addf %88, %89 : vector<8x384xf32>
    %91 = vector.extract_strided_slice %86 {offsets = [0, 0], sizes = [8, 128], strides = [1, 1]} : vector<8x384xf32> to vector<8x128xf32>
    %92 = vector.extract_strided_slice %90 {offsets = [0, 0], sizes = [8, 128], strides = [1, 1]} : vector<8x384xf32> to vector<8x128xf32>
    %93 = arith.addf %91, %92 : vector<8x128xf32>
    %94 = arith.negf %93 : vector<8x128xf32>
    %95 = math.exp %94 : vector<8x128xf32>
    %cst_40 = arith.constant 1.000000e+00 : f32
    %96 = vector.broadcast %cst_40 : f32 to vector<8x128xf32>
    %97 = arith.addf %96, %95 : vector<8x128xf32>
    %98 = arith.divf %96, %97 : vector<8x128xf32>
    %99 = vector.extract_strided_slice %86 {offsets = [0, 128], sizes = [8, 128], strides = [1, 1]} : vector<8x384xf32> to vector<8x128xf32>
    %100 = vector.extract_strided_slice %90 {offsets = [0, 128], sizes = [8, 128], strides = [1, 1]} : vector<8x384xf32> to vector<8x128xf32>
    %101 = arith.addf %99, %100 : vector<8x128xf32>
    %102 = arith.negf %101 : vector<8x128xf32>
    %103 = math.exp %102 : vector<8x128xf32>
    %cst_41 = arith.constant 1.000000e+00 : f32
    %104 = vector.broadcast %cst_41 : f32 to vector<8x128xf32>
    %105 = arith.addf %104, %103 : vector<8x128xf32>
    %106 = arith.divf %104, %105 : vector<8x128xf32>
    %107 = vector.extract_strided_slice %86 {offsets = [0, 256], sizes = [8, 128], strides = [1, 1]} : vector<8x384xf32> to vector<8x128xf32>
    %108 = vector.extract_strided_slice %90 {offsets = [0, 256], sizes = [8, 128], strides = [1, 1]} : vector<8x384xf32> to vector<8x128xf32>
    %109 = arith.mulf %98, %108 : vector<8x128xf32>
    %110 = arith.addf %107, %109 : vector<8x128xf32>
    %111 = math.tanh %110 : vector<8x128xf32>
    %cst_42 = arith.constant 1.000000e+00 : f32
    %112 = vector.broadcast %cst_42 : f32 to vector<8x128xf32>
    %113 = arith.subf %112, %106 : vector<8x128xf32>
    %114 = arith.mulf %113, %111 : vector<8x128xf32>
    %115 = arith.mulf %106, %81 : vector<8x128xf32>
    %116 = arith.addf %114, %115 : vector<8x128xf32>
    %c2_43 = arith.constant 2 : index
    %c0_44 = arith.constant 0 : index
    %c0_45 = arith.constant 0 : index
    %117 = vector.load %arg12[%c2_43, %c0_44, %c0_45] : memref<8x8x128xf32, #tpu.memory_space<vmem>>, vector<1x8x128xf32>
    %118 = vector.shape_cast %117 : vector<1x8x128xf32> to vector<8x128xf32>
    %119 = vector.shape_cast %116 : vector<8x128xf32> to vector<1x8x128xf32>
    tpu.vector_store %arg12[%c2_43, %c0_44, %c0_45], %119 {strides = array<i32>} : memref<8x8x128xf32, #tpu.memory_space<vmem>>, vector<1x8x128xf32>,
    %c3 = arith.constant 3 : index
    %c0_46 = arith.constant 0 : index
    %c0_47 = arith.constant 0 : index
    %120 = vector.load %arg11[%c3, %c0_46, %c0_47] : memref<8x8x384xf32, #tpu.memory_space<vmem>>, vector<1x8x384xf32>
    %121 = vector.shape_cast %120 : vector<1x8x384xf32> to vector<8x384xf32>
    %c0_48 = arith.constant 0 : index
    %c0_49 = arith.constant 0 : index
    %122 = vector.load %arg3[%c0_48, %c0_49] : memref<128x384xf32, #tpu.memory_space<vmem>>, vector<128x384xf32>
    %cst_50 = arith.constant dense<0.000000e+00> : vector<8x384xf32>
    %123 = tpu.matmul %116, %122, %cst_50 {dimension_numbers = #tpu.dot_dimension_numbers<[1], [0], [0], [1], [0, 0, 1, 1], [], []>} : vector<8x128xf32>, vector<128x384xf32>, vector<8x384xf32> -> vector<8x384xf32>
    %124 = vector.broadcast %13 : vector<1x384xf32> to vector<8x384xf32>
    %125 = arith.addf %123, %124 : vector<8x384xf32>
    %126 = vector.extract_strided_slice %121 {offsets = [0, 0], sizes = [8, 128], strides = [1, 1]} : vector<8x384xf32> to vector<8x128xf32>
    %127 = vector.extract_strided_slice %125 {offsets = [0, 0], sizes = [8, 128], strides = [1, 1]} : vector<8x384xf32> to vector<8x128xf32>
    %128 = arith.addf %126, %127 : vector<8x128xf32>
    %129 = arith.negf %128 : vector<8x128xf32>
    %130 = math.exp %129 : vector<8x128xf32>
    %cst_51 = arith.constant 1.000000e+00 : f32
    %131 = vector.broadcast %cst_51 : f32 to vector<8x128xf32>
    %132 = arith.addf %131, %130 : vector<8x128xf32>
    %133 = arith.divf %131, %132 : vector<8x128xf32>
    %134 = vector.extract_strided_slice %121 {offsets = [0, 128], sizes = [8, 128], strides = [1, 1]} : vector<8x384xf32> to vector<8x128xf32>
    %135 = vector.extract_strided_slice %125 {offsets = [0, 128], sizes = [8, 128], strides = [1, 1]} : vector<8x384xf32> to vector<8x128xf32>
    %136 = arith.addf %134, %135 : vector<8x128xf32>
    %137 = arith.negf %136 : vector<8x128xf32>
    %138 = math.exp %137 : vector<8x128xf32>
    %cst_52 = arith.constant 1.000000e+00 : f32
    %139 = vector.broadcast %cst_52 : f32 to vector<8x128xf32>
    %140 = arith.addf %139, %138 : vector<8x128xf32>
    %141 = arith.divf %139, %140 : vector<8x128xf32>
    %142 = vector.extract_strided_slice %121 {offsets = [0, 256], sizes = [8, 128], strides = [1, 1]} : vector<8x384xf32> to vector<8x128xf32>
    %143 = vector.extract_strided_slice %125 {offsets = [0, 256], sizes = [8, 128], strides = [1, 1]} : vector<8x384xf32> to vector<8x128xf32>
    %144 = arith.mulf %133, %143 : vector<8x128xf32>
    %145 = arith.addf %142, %144 : vector<8x128xf32>
    %146 = math.tanh %145 : vector<8x128xf32>
    %cst_53 = arith.constant 1.000000e+00 : f32
    %147 = vector.broadcast %cst_53 : f32 to vector<8x128xf32>
    %148 = arith.subf %147, %141 : vector<8x128xf32>
    %149 = arith.mulf %148, %146 : vector<8x128xf32>
    %150 = arith.mulf %141, %116 : vector<8x128xf32>
    %151 = arith.addf %149, %150 : vector<8x128xf32>
    %c3_54 = arith.constant 3 : index
    %c0_55 = arith.constant 0 : index
    %c0_56 = arith.constant 0 : index
    %152 = vector.load %arg12[%c3_54, %c0_55, %c0_56] : memref<8x8x128xf32, #tpu.memory_space<vmem>>, vector<1x8x128xf32>
    %153 = vector.shape_cast %152 : vector<1x8x128xf32> to vector<8x128xf32>
    %154 = vector.shape_cast %151 : vector<8x128xf32> to vector<1x8x128xf32>
    tpu.vector_store %arg12[%c3_54, %c0_55, %c0_56], %154 {strides = array<i32>} : memref<8x8x128xf32, #tpu.memory_space<vmem>>, vector<1x8x128xf32>,
    %c4 = arith.constant 4 : index
    %c0_57 = arith.constant 0 : index
    %c0_58 = arith.constant 0 : index
    %155 = vector.load %arg11[%c4, %c0_57, %c0_58] : memref<8x8x384xf32, #tpu.memory_space<vmem>>, vector<1x8x384xf32>
    %156 = vector.shape_cast %155 : vector<1x8x384xf32> to vector<8x384xf32>
    %c0_59 = arith.constant 0 : index
    %c0_60 = arith.constant 0 : index
    %157 = vector.load %arg3[%c0_59, %c0_60] : memref<128x384xf32, #tpu.memory_space<vmem>>, vector<128x384xf32>
    %cst_61 = arith.constant dense<0.000000e+00> : vector<8x384xf32>
    %158 = tpu.matmul %151, %157, %cst_61 {dimension_numbers = #tpu.dot_dimension_numbers<[1], [0], [0], [1], [0, 0, 1, 1], [], []>} : vector<8x128xf32>, vector<128x384xf32>, vector<8x384xf32> -> vector<8x384xf32>
    %159 = vector.broadcast %13 : vector<1x384xf32> to vector<8x384xf32>
    %160 = arith.addf %158, %159 : vector<8x384xf32>
    %161 = vector.extract_strided_slice %156 {offsets = [0, 0], sizes = [8, 128], strides = [1, 1]} : vector<8x384xf32> to vector<8x128xf32>
    %162 = vector.extract_strided_slice %160 {offsets = [0, 0], sizes = [8, 128], strides = [1, 1]} : vector<8x384xf32> to vector<8x128xf32>
    %163 = arith.addf %161, %162 : vector<8x128xf32>
    %164 = arith.negf %163 : vector<8x128xf32>
    %165 = math.exp %164 : vector<8x128xf32>
    %cst_62 = arith.constant 1.000000e+00 : f32
    %166 = vector.broadcast %cst_62 : f32 to vector<8x128xf32>
    %167 = arith.addf %166, %165 : vector<8x128xf32>
    %168 = arith.divf %166, %167 : vector<8x128xf32>
    %169 = vector.extract_strided_slice %156 {offsets = [0, 128], sizes = [8, 128], strides = [1, 1]} : vector<8x384xf32> to vector<8x128xf32>
    %170 = vector.extract_strided_slice %160 {offsets = [0, 128], sizes = [8, 128], strides = [1, 1]} : vector<8x384xf32> to vector<8x128xf32>
    %171 = arith.addf %169, %170 : vector<8x128xf32>
    %172 = arith.negf %171 : vector<8x128xf32>
    %173 = math.exp %172 : vector<8x128xf32>
    %cst_63 = arith.constant 1.000000e+00 : f32
    %174 = vector.broadcast %cst_63 : f32 to vector<8x128xf32>
    %175 = arith.addf %174, %173 : vector<8x128xf32>
    %176 = arith.divf %174, %175 : vector<8x128xf32>
    %177 = vector.extract_strided_slice %156 {offsets = [0, 256], sizes = [8, 128], strides = [1, 1]} : vector<8x384xf32> to vector<8x128xf32>
    %178 = vector.extract_strided_slice %160 {offsets = [0, 256], sizes = [8, 128], strides = [1, 1]} : vector<8x384xf32> to vector<8x128xf32>
    %179 = arith.mulf %168, %178 : vector<8x128xf32>
    %180 = arith.addf %177, %179 : vector<8x128xf32>
    %181 = math.tanh %180 : vector<8x128xf32>
    %cst_64 = arith.constant 1.000000e+00 : f32
    %182 = vector.broadcast %cst_64 : f32 to vector<8x128xf32>
    %183 = arith.subf %182, %176 : vector<8x128xf32>
    %184 = arith.mulf %183, %181 : vector<8x128xf32>
    %185 = arith.mulf %176, %151 : vector<8x128xf32>
    %186 = arith.addf %184, %185 : vector<8x128xf32>
    %c4_65 = arith.constant 4 : index
    %c0_66 = arith.constant 0 : index
    %c0_67 = arith.constant 0 : index
    %187 = vector.load %arg12[%c4_65, %c0_66, %c0_67] : memref<8x8x128xf32, #tpu.memory_space<vmem>>, vector<1x8x128xf32>
    %188 = vector.shape_cast %187 : vector<1x8x128xf32> to vector<8x128xf32>
    %189 = vector.shape_cast %186 : vector<8x128xf32> to vector<1x8x128xf32>
    tpu.vector_store %arg12[%c4_65, %c0_66, %c0_67], %189 {strides = array<i32>} : memref<8x8x128xf32, #tpu.memory_space<vmem>>, vector<1x8x128xf32>,
    %c5 = arith.constant 5 : index
    %c0_68 = arith.constant 0 : index
    %c0_69 = arith.constant 0 : index
    %190 = vector.load %arg11[%c5, %c0_68, %c0_69] : memref<8x8x384xf32, #tpu.memory_space<vmem>>, vector<1x8x384xf32>
    %191 = vector.shape_cast %190 : vector<1x8x384xf32> to vector<8x384xf32>
    %c0_70 = arith.constant 0 : index
    %c0_71 = arith.constant 0 : index
    %192 = vector.load %arg3[%c0_70, %c0_71] : memref<128x384xf32, #tpu.memory_space<vmem>>, vector<128x384xf32>
    %cst_72 = arith.constant dense<0.000000e+00> : vector<8x384xf32>
    %193 = tpu.matmul %186, %192, %cst_72 {dimension_numbers = #tpu.dot_dimension_numbers<[1], [0], [0], [1], [0, 0, 1, 1], [], []>} : vector<8x128xf32>, vector<128x384xf32>, vector<8x384xf32> -> vector<8x384xf32>
    %194 = vector.broadcast %13 : vector<1x384xf32> to vector<8x384xf32>
    %195 = arith.addf %193, %194 : vector<8x384xf32>
    %196 = vector.extract_strided_slice %191 {offsets = [0, 0], sizes = [8, 128], strides = [1, 1]} : vector<8x384xf32> to vector<8x128xf32>
    %197 = vector.extract_strided_slice %195 {offsets = [0, 0], sizes = [8, 128], strides = [1, 1]} : vector<8x384xf32> to vector<8x128xf32>
    %198 = arith.addf %196, %197 : vector<8x128xf32>
    %199 = arith.negf %198 : vector<8x128xf32>
    %200 = math.exp %199 : vector<8x128xf32>
    %cst_73 = arith.constant 1.000000e+00 : f32
    %201 = vector.broadcast %cst_73 : f32 to vector<8x128xf32>
    %202 = arith.addf %201, %200 : vector<8x128xf32>
    %203 = arith.divf %201, %202 : vector<8x128xf32>
    %204 = vector.extract_strided_slice %191 {offsets = [0, 128], sizes = [8, 128], strides = [1, 1]} : vector<8x384xf32> to vector<8x128xf32>
    %205 = vector.extract_strided_slice %195 {offsets = [0, 128], sizes = [8, 128], strides = [1, 1]} : vector<8x384xf32> to vector<8x128xf32>
    %206 = arith.addf %204, %205 : vector<8x128xf32>
    %207 = arith.negf %206 : vector<8x128xf32>
    %208 = math.exp %207 : vector<8x128xf32>
    %cst_74 = arith.constant 1.000000e+00 : f32
    %209 = vector.broadcast %cst_74 : f32 to vector<8x128xf32>
    %210 = arith.addf %209, %208 : vector<8x128xf32>
    %211 = arith.divf %209, %210 : vector<8x128xf32>
    %212 = vector.extract_strided_slice %191 {offsets = [0, 256], sizes = [8, 128], strides = [1, 1]} : vector<8x384xf32> to vector<8x128xf32>
    %213 = vector.extract_strided_slice %195 {offsets = [0, 256], sizes = [8, 128], strides = [1, 1]} : vector<8x384xf32> to vector<8x128xf32>
    %214 = arith.mulf %203, %213 : vector<8x128xf32>
    %215 = arith.addf %212, %214 : vector<8x128xf32>
    %216 = math.tanh %215 : vector<8x128xf32>
    %cst_75 = arith.constant 1.000000e+00 : f32
    %217 = vector.broadcast %cst_75 : f32 to vector<8x128xf32>
    %218 = arith.subf %217, %211 : vector<8x128xf32>
    %219 = arith.mulf %218, %216 : vector<8x128xf32>
    %220 = arith.mulf %211, %186 : vector<8x128xf32>
    %221 = arith.addf %219, %220 : vector<8x128xf32>
    %c5_76 = arith.constant 5 : index
    %c0_77 = arith.constant 0 : index
    %c0_78 = arith.constant 0 : index
    %222 = vector.load %arg12[%c5_76, %c0_77, %c0_78] : memref<8x8x128xf32, #tpu.memory_space<vmem>>, vector<1x8x128xf32>
    %223 = vector.shape_cast %222 : vector<1x8x128xf32> to vector<8x128xf32>
    %224 = vector.shape_cast %221 : vector<8x128xf32> to vector<1x8x128xf32>
    tpu.vector_store %arg12[%c5_76, %c0_77, %c0_78], %224 {strides = array<i32>} : memref<8x8x128xf32, #tpu.memory_space<vmem>>, vector<1x8x128xf32>,
    %c6 = arith.constant 6 : index
    %c0_79 = arith.constant 0 : index
    %c0_80 = arith.constant 0 : index
    %225 = vector.load %arg11[%c6, %c0_79, %c0_80] : memref<8x8x384xf32, #tpu.memory_space<vmem>>, vector<1x8x384xf32>
    %226 = vector.shape_cast %225 : vector<1x8x384xf32> to vector<8x384xf32>
    %c0_81 = arith.constant 0 : index
    %c0_82 = arith.constant 0 : index
    %227 = vector.load %arg3[%c0_81, %c0_82] : memref<128x384xf32, #tpu.memory_space<vmem>>, vector<128x384xf32>
    %cst_83 = arith.constant dense<0.000000e+00> : vector<8x384xf32>
    %228 = tpu.matmul %221, %227, %cst_83 {dimension_numbers = #tpu.dot_dimension_numbers<[1], [0], [0], [1], [0, 0, 1, 1], [], []>} : vector<8x128xf32>, vector<128x384xf32>, vector<8x384xf32> -> vector<8x384xf32>
    %229 = vector.broadcast %13 : vector<1x384xf32> to vector<8x384xf32>
    %230 = arith.addf %228, %229 : vector<8x384xf32>
    %231 = vector.extract_strided_slice %226 {offsets = [0, 0], sizes = [8, 128], strides = [1, 1]} : vector<8x384xf32> to vector<8x128xf32>
    %232 = vector.extract_strided_slice %230 {offsets = [0, 0], sizes = [8, 128], strides = [1, 1]} : vector<8x384xf32> to vector<8x128xf32>
    %233 = arith.addf %231, %232 : vector<8x128xf32>
    %234 = arith.negf %233 : vector<8x128xf32>
    %235 = math.exp %234 : vector<8x128xf32>
    %cst_84 = arith.constant 1.000000e+00 : f32
    %236 = vector.broadcast %cst_84 : f32 to vector<8x128xf32>
    %237 = arith.addf %236, %235 : vector<8x128xf32>
    %238 = arith.divf %236, %237 : vector<8x128xf32>
    %239 = vector.extract_strided_slice %226 {offsets = [0, 128], sizes = [8, 128], strides = [1, 1]} : vector<8x384xf32> to vector<8x128xf32>
    %240 = vector.extract_strided_slice %230 {offsets = [0, 128], sizes = [8, 128], strides = [1, 1]} : vector<8x384xf32> to vector<8x128xf32>
    %241 = arith.addf %239, %240 : vector<8x128xf32>
    %242 = arith.negf %241 : vector<8x128xf32>
    %243 = math.exp %242 : vector<8x128xf32>
    %cst_85 = arith.constant 1.000000e+00 : f32
    %244 = vector.broadcast %cst_85 : f32 to vector<8x128xf32>
    %245 = arith.addf %244, %243 : vector<8x128xf32>
    %246 = arith.divf %244, %245 : vector<8x128xf32>
    %247 = vector.extract_strided_slice %226 {offsets = [0, 256], sizes = [8, 128], strides = [1, 1]} : vector<8x384xf32> to vector<8x128xf32>
    %248 = vector.extract_strided_slice %230 {offsets = [0, 256], sizes = [8, 128], strides = [1, 1]} : vector<8x384xf32> to vector<8x128xf32>
    %249 = arith.mulf %238, %248 : vector<8x128xf32>
    %250 = arith.addf %247, %249 : vector<8x128xf32>
    %251 = math.tanh %250 : vector<8x128xf32>
    %cst_86 = arith.constant 1.000000e+00 : f32
    %252 = vector.broadcast %cst_86 : f32 to vector<8x128xf32>
    %253 = arith.subf %252, %246 : vector<8x128xf32>
    %254 = arith.mulf %253, %251 : vector<8x128xf32>
    %255 = arith.mulf %246, %221 : vector<8x128xf32>
    %256 = arith.addf %254, %255 : vector<8x128xf32>
    %c6_87 = arith.constant 6 : index
    %c0_88 = arith.constant 0 : index
    %c0_89 = arith.constant 0 : index
    %257 = vector.load %arg12[%c6_87, %c0_88, %c0_89] : memref<8x8x128xf32, #tpu.memory_space<vmem>>, vector<1x8x128xf32>
    %258 = vector.shape_cast %257 : vector<1x8x128xf32> to vector<8x128xf32>
    %259 = vector.shape_cast %256 : vector<8x128xf32> to vector<1x8x128xf32>
    tpu.vector_store %arg12[%c6_87, %c0_88, %c0_89], %259 {strides = array<i32>} : memref<8x8x128xf32, #tpu.memory_space<vmem>>, vector<1x8x128xf32>,
    %c7 = arith.constant 7 : index
    %c0_90 = arith.constant 0 : index
    %c0_91 = arith.constant 0 : index
    %260 = vector.load %arg11[%c7, %c0_90, %c0_91] : memref<8x8x384xf32, #tpu.memory_space<vmem>>, vector<1x8x384xf32>
    %261 = vector.shape_cast %260 : vector<1x8x384xf32> to vector<8x384xf32>
    %c0_92 = arith.constant 0 : index
    %c0_93 = arith.constant 0 : index
    %262 = vector.load %arg3[%c0_92, %c0_93] : memref<128x384xf32, #tpu.memory_space<vmem>>, vector<128x384xf32>
    %cst_94 = arith.constant dense<0.000000e+00> : vector<8x384xf32>
    %263 = tpu.matmul %256, %262, %cst_94 {dimension_numbers = #tpu.dot_dimension_numbers<[1], [0], [0], [1], [0, 0, 1, 1], [], []>} : vector<8x128xf32>, vector<128x384xf32>, vector<8x384xf32> -> vector<8x384xf32>
    %264 = vector.broadcast %13 : vector<1x384xf32> to vector<8x384xf32>
    %265 = arith.addf %263, %264 : vector<8x384xf32>
    %266 = vector.extract_strided_slice %261 {offsets = [0, 0], sizes = [8, 128], strides = [1, 1]} : vector<8x384xf32> to vector<8x128xf32>
    %267 = vector.extract_strided_slice %265 {offsets = [0, 0], sizes = [8, 128], strides = [1, 1]} : vector<8x384xf32> to vector<8x128xf32>
    %268 = arith.addf %266, %267 : vector<8x128xf32>
    %269 = arith.negf %268 : vector<8x128xf32>
    %270 = math.exp %269 : vector<8x128xf32>
    %cst_95 = arith.constant 1.000000e+00 : f32
    %271 = vector.broadcast %cst_95 : f32 to vector<8x128xf32>
    %272 = arith.addf %271, %270 : vector<8x128xf32>
    %273 = arith.divf %271, %272 : vector<8x128xf32>
    %274 = vector.extract_strided_slice %261 {offsets = [0, 128], sizes = [8, 128], strides = [1, 1]} : vector<8x384xf32> to vector<8x128xf32>
    %275 = vector.extract_strided_slice %265 {offsets = [0, 128], sizes = [8, 128], strides = [1, 1]} : vector<8x384xf32> to vector<8x128xf32>
    %276 = arith.addf %274, %275 : vector<8x128xf32>
    %277 = arith.negf %276 : vector<8x128xf32>
    %278 = math.exp %277 : vector<8x128xf32>
    %cst_96 = arith.constant 1.000000e+00 : f32
    %279 = vector.broadcast %cst_96 : f32 to vector<8x128xf32>
    %280 = arith.addf %279, %278 : vector<8x128xf32>
    %281 = arith.divf %279, %280 : vector<8x128xf32>
    %282 = vector.extract_strided_slice %261 {offsets = [0, 256], sizes = [8, 128], strides = [1, 1]} : vector<8x384xf32> to vector<8x128xf32>
    %283 = vector.extract_strided_slice %265 {offsets = [0, 256], sizes = [8, 128], strides = [1, 1]} : vector<8x384xf32> to vector<8x128xf32>
    %284 = arith.mulf %273, %283 : vector<8x128xf32>
    %285 = arith.addf %282, %284 : vector<8x128xf32>
    %286 = math.tanh %285 : vector<8x128xf32>
    %cst_97 = arith.constant 1.000000e+00 : f32
    %287 = vector.broadcast %cst_97 : f32 to vector<8x128xf32>
    %288 = arith.subf %287, %281 : vector<8x128xf32>
    %289 = arith.mulf %288, %286 : vector<8x128xf32>
    %290 = arith.mulf %281, %256 : vector<8x128xf32>
    %291 = arith.addf %289, %290 : vector<8x128xf32>
    %c7_98 = arith.constant 7 : index
    %c0_99 = arith.constant 0 : index
    %c0_100 = arith.constant 0 : index
    %292 = vector.load %arg12[%c7_98, %c0_99, %c0_100] : memref<8x8x128xf32, #tpu.memory_space<vmem>>, vector<1x8x128xf32>
    %293 = vector.shape_cast %292 : vector<1x8x128xf32> to vector<8x128xf32>
    %294 = vector.shape_cast %291 : vector<8x128xf32> to vector<1x8x128xf32>
    tpu.vector_store %arg12[%c7_98, %c0_99, %c0_100], %294 {strides = array<i32>} : memref<8x8x128xf32, #tpu.memory_space<vmem>>, vector<1x8x128xf32>,
    %c0_101 = arith.constant 0 : index
    %c0_102 = arith.constant 0 : index
    %c0_103 = arith.constant 0 : index
    %295 = vector.load %arg12[%c0_101, %c0_102, %c0_103] : memref<8x8x128xf32, #tpu.memory_space<vmem>>, vector<8x8x128xf32>
    %296 = vector.shape_cast %295 : vector<8x8x128xf32> to vector<64x128xf32>
    %c0_104 = arith.constant 0 : index
    %c0_105 = arith.constant 0 : index
    %297 = vector.load %arg6[%c0_104, %c0_105] : memref<128x128xf32, #tpu.memory_space<vmem>>, vector<128x128xf32>
    %cst_106 = arith.constant dense<0.000000e+00> : vector<64x128xf32>
    %298 = tpu.matmul %296, %297, %cst_106 {dimension_numbers = #tpu.dot_dimension_numbers<[1], [0], [0], [1], [0, 0, 1, 1], [], []>} : vector<64x128xf32>, vector<128x128xf32>, vector<64x128xf32> -> vector<64x128xf32>
    %c0_107 = arith.constant 0 : index
    %c0_108 = arith.constant 0 : index
    %299 = vector.load %arg7[%c0_107, %c0_108] : memref<1x128xf32, #tpu.memory_space<vmem>>, vector<1x128xf32>
    %300 = vector.broadcast %299 : vector<1x128xf32> to vector<64x128xf32>
    %301 = arith.addf %298, %300 : vector<64x128xf32>
    %c0_109 = arith.constant 0 : index
    %c0_110 = arith.constant 0 : index
    %302 = vector.load %arg9[%c0_109, %c0_110] : memref<64x128xf32, #tpu.memory_space<vmem>>, vector<64x128xf32>
    tpu.vector_store %arg9[%c0_109, %c0_110], %301 {strides = array<i32>} : memref<64x128xf32, #tpu.memory_space<vmem>>, vector<64x128xf32>,
    %c0_111 = arith.constant 0 : index
    %c0_112 = arith.constant 0 : index
    %303 = vector.load %arg10[%c0_111, %c0_112] : memref<8x128xf32, #tpu.memory_space<vmem>>, vector<8x128xf32>
    tpu.vector_store %arg10[%c0_111, %c0_112], %291 {strides = array<i32>} : memref<8x128xf32, #tpu.memory_space<vmem>>, vector<8x128xf32>,
    return
  }
  func.func @transform_0(%arg0: i32) -> (i32, i32) {
    %c0_i32 = arith.constant 0 : i32
    %c0_i32_0 = arith.constant 0 : i32
    %c0_i32_1 = arith.constant 0 : i32
    return %c0_i32, %c0_i32_0 : i32, i32
  }
  func.func @transform_1(%arg0: i32) -> (i32, i32) {
    %c0_i32 = arith.constant 0 : i32
    %c0_i32_0 = arith.constant 0 : i32
    %c0_i32_1 = arith.constant 0 : i32
    return %c0_i32, %c0_i32_0 : i32, i32
  }
  func.func @transform_2(%arg0: i32) -> (i32, i32) {
    %c0_i32 = arith.constant 0 : i32
    %c0_i32_0 = arith.constant 0 : i32
    %c0_i32_1 = arith.constant 0 : i32
    return %c0_i32, %c0_i32_0 : i32, i32
  }
  func.func @transform_3(%arg0: i32) -> (i32, i32) {
    %c0_i32 = arith.constant 0 : i32
    %c0_i32_0 = arith.constant 0 : i32
    %c0_i32_1 = arith.constant 0 : i32
    return %c0_i32, %c0_i32_0 : i32, i32
  }
  func.func @transform_4(%arg0: i32) -> (i32, i32) {
    %c0_i32 = arith.constant 0 : i32
    %c0_i32_0 = arith.constant 0 : i32
    %c0_i32_1 = arith.constant 0 : i32
    return %c0_i32, %c0_i32_0 : i32, i32
  }
  func.func @transform_5(%arg0: i32) -> (i32, i32) {
    %c0_i32 = arith.constant 0 : i32
    %c0_i32_0 = arith.constant 0 : i32
    %c0_i32_1 = arith.constant 0 : i32
    return %c0_i32, %c0_i32_0 : i32, i32
  }
  func.func @transform_6(%arg0: i32) -> (i32, i32) {
    %c0_i32 = arith.constant 0 : i32
    %c0_i32_0 = arith.constant 0 : i32
    %c0_i32_1 = arith.constant 0 : i32
    return %c0_i32, %c0_i32_0 : i32, i32
  }
  func.func @transform_7(%arg0: i32) -> (i32, i32) {
    %c0_i32 = arith.constant 0 : i32
    %c0_i32_0 = arith.constant 0 : i32
    %c0_i32_1 = arith.constant 0 : i32
    return %c0_i32, %c0_i32_0 : i32, i32
  }
  func.func @transform_8(%arg0: i32) -> (i32, i32) {
    %c0_i32 = arith.constant 0 : i32
    %c0_i32_0 = arith.constant 0 : i32
    %c0_i32_1 = arith.constant 0 : i32
    return %c0_i32, %c0_i32_0 : i32, i32
  }
  func.func @transform_9(%arg0: i32) -> (i32, i32) {
    %c0_i32 = arith.constant 0 : i32
    %c0_i32_0 = arith.constant 0 : i32
    %c0_i32_1 = arith.constant 0 : i32
    return %c0_i32, %c0_i32_0 : i32, i32
  }
}

</mosaic_0001>

<llo_original>
// kernel: tpu_custom_call.1
$region0: #{tpu_custom_call.1}
  #allocation0 [shape = 'u32[]', space=smem, size = 0x4, offset = 0x4, fixed_abs, tag = 'smem constant byte address 0x4 - core index']
  #allocation1 [shape = 'u32[144,128]{1,0:T(1,128)}', space=vmem, size = 0x12000, scoped, tag = 'internal scratch']
  #allocation2 [shape = 'f32[8,8,384]{2,1,0:T(8,128)}', space=vmem, size = 0x18000, scoped, tag = 'scratch operand']
  #allocation3 [shape = 'f32[8,8,128]{2,1,0:T(8,128)}', space=vmem, size = 0x8000, scoped, tag = 'scratch operand']
  %s0 = inlined_call_operand.vmem [shape: s32[64,1], index: 0, kind: input, shape index: {}]
  %s1 = inlined_call_operand.hbm [shape: f32[128,384], index: 1, kind: input, shape index: {}]
  %s2 = inlined_call_operand.hbm [shape: f32[128,384], index: 2, kind: input, shape index: {}]
  %s3 = inlined_call_operand.vmem [shape: f32[1,384], index: 3, kind: input, shape index: {}]
  %s4 = inlined_call_operand.vmem [shape: f32[1,384], index: 4, kind: input, shape index: {}]
  %s5 = inlined_call_operand.hbm [shape: f32[128,128], index: 5, kind: input, shape index: {}]
  %s6 = inlined_call_operand.vmem [shape: f32[1,128], index: 6, kind: input, shape index: {}]
  %s7 = inlined_call_operand.vmem [shape: f32[8,128], index: 7, kind: input, shape index: {}]
  %s8 = inlined_call_operand.hbm [shape: f32[64,128], index: 8, kind: output, shape index: {0}]
  %s9 = inlined_call_operand.hbm [shape: f32[8,128], index: 9, kind: output, shape index: {1}]
  %10 = xla_tuple %s8, %s9
  %s11 = sld [smem:[#allocation0]]
  $region62: #{tpu_custom_call.1} parent=0
    _
  %s13 = ssub.s32 1, %s11
  %s14 = scalar_select 0, %s13, %s11
  $region1: #{tpu_custom_call.1} parent=0
    #allocation4 [shape = 'u8[196608]{0}', space=vmem, size = 0x30000, scoped, tag = 'input window, operand 1, single buffered']
    #allocation5 [shape = 's32[1]{0}', space=sflag, size = 0x4, scoped, tag = 'scoped memory for tpu_custom_call.1']
    #allocation6 [shape = 's32[1]{0}', space=sflag, size = 0x4, scoped, tag = 'scoped memory for tpu_custom_call.1']
    #allocation7 [shape = 'u8[196608]{0}', space=vmem, size = 0x30000, scoped, tag = 'input window, operand 2, single buffered']
    #allocation8 [shape = 's32[1]{0}', space=sflag, size = 0x4, scoped, tag = 'scoped memory for tpu_custom_call.1']
    #allocation9 [shape = 'u8[65536]{0}', space=vmem, size = 0x10000, scoped, tag = 'input window, operand 5, single buffered']
    #allocation10 [shape = 'u8[32768]{0}', space=vmem, size = 0x8000, scoped, tag = 'output window, operand 0, single buffered']
    #allocation11 [shape = 'u8[4096]{0}', space=vmem, size = 0x1000, scoped, tag = 'output window, operand 1, single buffered']
    #allocation12 [shape = 's32[1]{0}', space=sflag, size = 0x4, scoped, tag = 'scoped memory for tpu_custom_call.1']
    %15 = vsyncpa [#allocation5], 0
    %16 = vsyncpa [#allocation8], 0
    %17 = vsyncpa [#allocation6], 0
    %18 = vsyncpa [#allocation12], 0
    // Predicated region
    $region2: #{tpu_custom_call.1} parent=1 // pred_check
      _
    $region3: #{tpu_custom_call.1} parent=1 // pred_check_branch
      %20 = sbr.rel (0) target = $region5
    $region4: #{tpu_custom_call.1} parent=1 // pred_region
      _
    $region5: #{tpu_custom_call.1} parent=1 // pred_fallthru
      _
    // Predicated region
    $region6: #{tpu_custom_call.1} parent=1 // pred_check
      _
    $region7: #{tpu_custom_call.1} parent=1 // pred_check_branch
      %22 = sbr.rel (0) target = $region9
    $region8: #{tpu_custom_call.1} parent=1 // pred_region
      %s24 = ssub.s32 6144, 6144
      %25 = vsyncadd [#allocation5], %s24
      %s26 = sshll.u32 [#allocation4], 4
      %s27 = int_to_ptr.vmem [resolvable:$true] %s26
      %32 = dma.hbm_to_vmem [thread:$0]  %s1, 6144, %s27, [#allocation5], 384, 384, 24
    $region9: #{tpu_custom_call.1} parent=1 // pred_fallthru
      _
    // Predicated region
    $region10: #{tpu_custom_call.1} parent=1 // pred_check
      _
    $region11: #{tpu_custom_call.1} parent=1 // pred_check_branch
      %34 = sbr.rel (0) target = $region13
    $region12: #{tpu_custom_call.1} parent=1 // pred_region
      %s36 = ssub.s32 6144, 6144
      %37 = vsyncadd [#allocation8], %s36
      %s38 = sshll.u32 [#allocation7], 4
      %s39 = int_to_ptr.vmem [resolvable:$true] %s38
      %44 = dma.hbm_to_vmem [thread:$0]  %s2, 6144, %s39, [#allocation8], 384, 384, 24
    $region13: #{tpu_custom_call.1} parent=1 // pred_fallthru
      _
    // Predicated region
    $region14: #{tpu_custom_call.1} parent=1 // pred_check
      _
    $region15: #{tpu_custom_call.1} parent=1 // pred_check_branch
      %46 = sbr.rel (0) target = $region17
    $region16: #{tpu_custom_call.1} parent=1 // pred_region
      _
    $region17: #{tpu_custom_call.1} parent=1 // pred_fallthru
      _
    // Predicated region
    $region18: #{tpu_custom_call.1} parent=1 // pred_check
      _
    $region19: #{tpu_custom_call.1} parent=1 // pred_check_branch
      %48 = sbr.rel (0) target = $region21
    $region20: #{tpu_custom_call.1} parent=1 // pred_region
      _
    $region21: #{tpu_custom_call.1} parent=1 // pred_fallthru
      _
    // Predicated region
    $region22: #{tpu_custom_call.1} parent=1 // pred_check
      _
    $region23: #{tpu_custom_call.1} parent=1 // pred_check_branch
      %50 = sbr.rel (0) target = $region25
    $region24: #{tpu_custom_call.1} parent=1 // pred_region
      %s52 = ssub.s32 2048, 2048
      %53 = vsyncadd [#allocation8], %s52
      %s54 = sshll.u32 [#allocation9], 4
      %s55 = int_to_ptr.vmem [resolvable:$true] %s54
      %60 = dma.hbm_to_vmem [thread:$0]  %s5, 2048, %s55, [#allocation8], 128, 128, 8
    $region25: #{tpu_custom_call.1} parent=1 // pred_fallthru
      _
    // Predicated region
    $region26: #{tpu_custom_call.1} parent=1 // pred_check
      _
    $region27: #{tpu_custom_call.1} parent=1 // pred_check_branch
      %62 = sbr.rel (0) target = $region29
    $region28: #{tpu_custom_call.1} parent=1 // pred_region
      _
    $region29: #{tpu_custom_call.1} parent=1 // pred_fallthru
      _
    // Predicated region
    $region30: #{tpu_custom_call.1} parent=1 // pred_check
      _
    $region31: #{tpu_custom_call.1} parent=1 // pred_check_branch
      %64 = sbr.rel (0) target = $region33
    $region32: #{tpu_custom_call.1} parent=1 // pred_region
      _
    $region33: #{tpu_custom_call.1} parent=1 // pred_fallthru
      _
    // Predicated region
    $region34: #{tpu_custom_call.1} parent=1 // pred_check
      _
    $region35: #{tpu_custom_call.1} parent=1 // pred_check_branch
      %66 = sbr.rel (0) target = $region37
    $region36: #{tpu_custom_call.1} parent=1 // pred_region
      %67 = dma.done [#allocation5], 6144
    $region37: #{tpu_custom_call.1} parent=1 // pred_fallthru
      _
    // Predicated region
    $region38: #{tpu_custom_call.1} parent=1 // pred_check
      _
    $region39: #{tpu_custom_call.1} parent=1 // pred_check_branch
      %69 = sbr.rel (0) target = $region41
    $region40: #{tpu_custom_call.1} parent=1 // pred_region
      %70 = dma.done [#allocation8], 6144
    $region41: #{tpu_custom_call.1} parent=1 // pred_fallthru
      _
    // Predicated region
    $region42: #{tpu_custom_call.1} parent=1 // pred_check
      _
    $region43: #{tpu_custom_call.1} parent=1 // pred_check_branch
      %72 = sbr.rel (0) target = $region45
    $region44: #{tpu_custom_call.1} parent=1 // pred_region
      %73 = dma.done [#allocation8], 2048
    $region45: #{tpu_custom_call.1} parent=1 // pred_fallthru
      _
    %v74 = vld [vmem:[%s0] sm:$0xff]
    %v75 = vld [vmem:[%s0 + $0x8] sm:$0xff]
    %v76 = vld [vmem:[%s0 + $0x10] sm:$0xff]
    %v77 = vld [vmem:[%s0 + $0x18] sm:$0xff]
    %v78 = vld [vmem:[%s0 + $0x20] sm:$0xff]
    %v79 = vld [vmem:[%s0 + $0x28] sm:$0xff]
    %v80 = vld [vmem:[%s0 + $0x30] sm:$0xff]
    %v81 = vld [vmem:[%s0 + $0x38] sm:$0xff]
    %v82 = vlaneseq
    %v83 = vand.u32 %v82, 127
    %84 = vset.pattern.permute.xlu0 0
    %85 = vperm.xlu0 %84, %v74
    %v86 = vpop.permute.xlu0 %85
    %87 = vset.pattern.permute.xlu0 0
    %88 = vperm.xlu0 %87, %v75
    %v89 = vpop.permute.xlu0 %88
    %90 = vset.pattern.permute.xlu0 0
    %91 = vperm.xlu0 %90, %v76
    %v92 = vpop.permute.xlu0 %91
    %93 = vset.pattern.permute.xlu0 0
    %94 = vperm.xlu0 %93, %v77
    %v95 = vpop.permute.xlu0 %94
    %96 = vset.pattern.permute.xlu0 0
    %97 = vperm.xlu0 %96, %v78
    %v98 = vpop.permute.xlu0 %97
    %99 = vset.pattern.permute.xlu0 0
    %100 = vperm.xlu0 %99, %v79
    %v101 = vpop.permute.xlu0 %100
    %102 = vset.pattern.permute.xlu0 0
    %103 = vperm.xlu0 %102, %v80
    %v104 = vpop.permute.xlu0 %103
    %105 = vset.pattern.permute.xlu0 0
    %106 = vperm.xlu0 %105, %v81
    %v107 = vpop.permute.xlu0 %106
    %vm108 = vcmp.eq.s32.totalorder %v83, %v86
    %vm109 = vcmp.eq.s32.totalorder %v83, %v89
    %vm110 = vcmp.eq.s32.totalorder %v83, %v92
    %vm111 = vcmp.eq.s32.totalorder %v83, %v95
    %vm112 = vcmp.eq.s32.totalorder %v83, %v98
    %vm113 = vcmp.eq.s32.totalorder %v83, %v101
    %vm114 = vcmp.eq.s32.totalorder %v83, %v104
    %vm115 = vcmp.eq.s32.totalorder %v83, %v107
    %v116 = vsel %vm108, 1, 0
    %v117 = vsel %vm109, 1, 0
    %v118 = vsel %vm110, 1, 0
    %v119 = vsel %vm111, 1, 0
    %v120 = vsel %vm112, 1, 0
    %v121 = vsel %vm113, 1, 0
    %v122 = vsel %vm114, 1, 0
    %v123 = vsel %vm115, 1, 0
    %v124 = vcvt.s32.f32 %v116
    %v125 = vcvt.s32.f32 %v117
    %v126 = vcvt.s32.f32 %v118
    %v127 = vcvt.s32.f32 %v119
    %v128 = vcvt.s32.f32 %v120
    %v129 = vcvt.s32.f32 %v121
    %v130 = vcvt.s32.f32 %v122
    %v131 = vcvt.s32.f32 %v123
    %v132 = vld [vmem:[#allocation4] sm:$0xff]
    %v133 = vld [vmem:[#allocation4 + $0x8] sm:$0xff]
    %v134 = vld [vmem:[#allocation4 + $0x10] sm:$0xff]
    %v135 = vld [vmem:[#allocation4 + $0x18] sm:$0xff]
    %v136 = vld [vmem:[#allocation4 + $0x20] sm:$0xff]
    %v137 = vld [vmem:[#allocation4 + $0x28] sm:$0xff]
    %v138 = vld [vmem:[#allocation4 + $0x30] sm:$0xff]
    %v139 = vld [vmem:[#allocation4 + $0x38] sm:$0xff]
    %v140 = vld [vmem:[#allocation4 + $0x40] sm:$0xff]
    %v141 = vld [vmem:[#allocation4 + $0x48] sm:$0xff]
    %v142 = vld [vmem:[#allocation4 + $0x50] sm:$0xff]
    %v143 = vld [vmem:[#allocation4 + $0x58] sm:$0xff]
    %v144 = vld [vmem:[#allocation4 + $0x60] sm:$0xff]
    %v145 = vld [vmem:[#allocation4 + $0x68] sm:$0xff]
    %v146 = vld [vmem:[#allocation4 + $0x70] sm:$0xff]
    %v147 = vld [vmem:[#allocation4 + $0x78] sm:$0xff]
    %v148 = vld [vmem:[#allocation4 + $0x80] sm:$0xff]
    %v149 = vld [vmem:[#allocation4 + $0x88] sm:$0xff]
    %v150 = vld [vmem:[#allocation4 + $0x90] sm:$0xff]
    %v151 = vld [vmem:[#allocation4 + $0x98] sm:$0xff]
    %v152 = vld [vmem:[#allocation4 + $0xa0] sm:$0xff]
    %v153 = vld [vmem:[#allocation4 + $0xa8] sm:$0xff]
    %v154 = vld [vmem:[#allocation4 + $0xb0] sm:$0xff]
    %v155 = vld [vmem:[#allocation4 + $0xb8] sm:$0xff]
    %v156 = vld [vmem:[#allocation4 + $0xc0] sm:$0xff]
    %v157 = vld [vmem:[#allocation4 + $0xc8] sm:$0xff]
    %v158 = vld [vmem:[#allocation4 + $0xd0] sm:$0xff]
    %v159 = vld [vmem:[#allocation4 + $0xd8] sm:$0xff]
    %v160 = vld [vmem:[#allocation4 + $0xe0] sm:$0xff]
    %v161 = vld [vmem:[#allocation4 + $0xe8] sm:$0xff]
    %v162 = vld [vmem:[#allocation4 + $0xf0] sm:$0xff]
    %v163 = vld [vmem:[#allocation4 + $0xf8] sm:$0xff]
    %v164 = vld [vmem:[#allocation4 + $0x100] sm:$0xff]
    %v165 = vld [vmem:[#allocation4 + $0x108] sm:$0xff]
    %v166 = vld [vmem:[#allocation4 + $0x110] sm:$0xff]
    %v167 = vld [vmem:[#allocation4 + $0x118] sm:$0xff]
    %v168 = vld [vmem:[#allocation4 + $0x120] sm:$0xff]
    %v169 = vld [vmem:[#allocation4 + $0x128] sm:$0xff]
    %v170 = vld [vmem:[#allocation4 + $0x130] sm:$0xff]
    %v171 = vld [vmem:[#allocation4 + $0x138] sm:$0xff]
    %v172 = vld [vmem:[#allocation4 + $0x140] sm:$0xff]
    %v173 = vld [vmem:[#allocation4 + $0x148] sm:$0xff]
    %v174 = vld [vmem:[#allocation4 + $0x150] sm:$0xff]
    %v175 = vld [vmem:[#allocation4 + $0x158] sm:$0xff]
    %v176 = vld [vmem:[#allocation4 + $0x160] sm:$0xff]
    %v177 = vld [vmem:[#allocation4 + $0x168] sm:$0xff]
    %v178 = vld [vmem:[#allocation4 + $0x170] sm:$0xff]
    %v179 = vld [vmem:[#allocation4 + $0x178] sm:$0xff]
    %v180 = vld [vmem:[%s3] sm:$0x7]
    %v182 = vlaneseq
    %v183 = vshrl.u32 %v182, 7
    %v184 = vsub.s32 0, %v183
    %v185 = vrot.slane %v180, %v184
    %v186 = vlaneseq
    %v187 = vshrl.u32 %v186, 7
    %v188 = vsub.s32 1, %v187
    %v189 = vrot.slane %v180, %v188
    %v190 = vlaneseq
    %v191 = vshrl.u32 %v190, 7
    %v192 = vsub.s32 2, %v191
    %v193 = vrot.slane %v180, %v192
    %197 = vmatprep.subr.mxu0 %v133
    %198 = vmatpush1.msra.mxu0 %v132
    %199 = vmatprep.subr.mxu0 %v136
    %200 = vmatpush1.msra.mxu0 %v135
    %201 = vmatprep.subr.mxu0 %v139
    %202 = vmatpush1.msra.mxu0 %v138
    %203 = vmatprep.subr.mxu0 %v142
    %204 = vmatpush1.msra.mxu0 %v141
    %205 = vmatprep.subr.mxu0 %v145
    %206 = vmatpush1.msra.mxu0 %v144
    %207 = vmatprep.subr.mxu0 %v148
    %208 = vmatpush1.msra.mxu0 %v147
    %209 = vmatprep.subr.mxu0 %v151
    %210 = vmatpush1.msra.mxu0 %v150
    %211 = vmatprep.subr.mxu0 %v154
    %212 = vmatpush1.msra.mxu0 %v153
    %213 = vmatprep.subr.mxu0 %v157
    %214 = vmatpush1.msra.mxu0 %v156
    %215 = vmatprep.subr.mxu0 %v160
    %216 = vmatpush1.msra.mxu0 %v159
    %217 = vmatprep.subr.mxu0 %v163
    %218 = vmatpush1.msra.mxu0 %v162
    %219 = vmatprep.subr.mxu0 %v166
    %220 = vmatpush1.msra.mxu0 %v165
    %221 = vmatprep.subr.mxu0 %v169
    %222 = vmatpush1.msra.mxu0 %v168
    %223 = vmatprep.subr.mxu0 %v172
    %224 = vmatpush1.msra.mxu0 %v171
    %225 = vmatprep.subr.mxu0 %v175
    %226 = vmatpush1.msra.mxu0 %v174
    %227 = vmatprep.subr.mxu0 %v178
    %228 = vmatpush1.msra.mxu0 %v177
    %229 = vmatprep.subr.mxu0 0.0
    %230 = vmatpush1.msra.mxu0 0.0
    %231 = vmatprep.subr.mxu0 0.0
    %232 = vmatpush1.msra.mxu0 0.0
    %233 = vmatprep.subr.mxu0 0.0
    %234 = vmatpush1.msra.mxu0 0.0
    %235 = vmatprep.subr.mxu0 0.0
    %236 = vmatpush1.msra.mxu0 0.0
    %237 = vmatprep.subr.mxu0 0.0
    %238 = vmatpush1.msra.mxu0 0.0
    %239 = vmatprep.subr.mxu0 0.0
    %240 = vmatpush1.msra.mxu0 0.0
    %241 = vmatprep.subr.mxu0 0.0
    %242 = vmatpush1.msra.mxu0 0.0
    %243 = vmatprep.subr.mxu0 0.0
    %244 = vmatpush1.msra.mxu0 0.0
    %245 = vmatprep.subr.mxu0 0.0
    %246 = vmatpush1.msra.mxu0 0.0
    %247 = vmatprep.subr.mxu0 0.0
    %248 = vmatpush1.msra.mxu0 0.0
    %249 = vmatprep.subr.mxu0 0.0
    %250 = vmatpush1.msra.mxu0 0.0
    %251 = vmatprep.subr.mxu0 0.0
    %252 = vmatpush1.msra.mxu0 0.0
    %253 = vmatprep.subr.mxu0 0.0
    %254 = vmatpush1.msra.mxu0 0.0
    %255 = vmatprep.subr.mxu0 0.0
    %256 = vmatpush1.msra.mxu0 0.0
    %257 = vmatprep.subr.mxu0 0.0
    %258 = vmatpush1.msra.mxu0 0.0
    %259 = vmatprep.subr.mxu0 0.0
    %260 = vmatpush1.msra.mxu0 0.0
    %261 = vmatprep.mubr.f32.mxu0 0.0
    %262 = vmatmul.mubr.f32.gmra.mrb[0].mxu0 %v124
    %v263 = vpop.f32.mrb[0].mxu0
    %v264 = vadd.f32 %v185, %v263
    %v265 = vpop.f32.mrb[0].mxu0
    %v266 = vadd.f32 %v189, %v265
    %267 = vmatprep.mubr.f32.mxu0 0.0
    %268 = vmatmul.mubr.f32.gmra.mrb[0].mxu0 %v125
    %v269 = vpop.f32.mrb[0].mxu0
    %v270 = vadd.f32 %v185, %v269
    %v271 = vpop.f32.mrb[0].mxu0
    %v272 = vadd.f32 %v189, %v271
    %273 = vmatprep.mubr.f32.mxu0 0.0
    %274 = vmatmul.mubr.f32.gmra.mrb[0].mxu0 %v126
    %v275 = vpop.f32.mrb[0].mxu0
    %v276 = vadd.f32 %v185, %v275
    %v277 = vpop.f32.mrb[0].mxu0
    %v278 = vadd.f32 %v189, %v277
    %279 = vmatprep.mubr.f32.mxu0 0.0
    %280 = vmatmul.mubr.f32.gmra.mrb[0].mxu0 %v127
    %v281 = vpop.f32.mrb[0].mxu0
    %v282 = vadd.f32 %v185, %v281
    %v283 = vpop.f32.mrb[0].mxu0
    %v284 = vadd.f32 %v189, %v283
    %285 = vmatprep.mubr.f32.mxu0 0.0
    %286 = vmatmul.mubr.f32.gmra.mrb[0].mxu0 %v128
    %v287 = vpop.f32.mrb[0].mxu0
    %v288 = vadd.f32 %v185, %v287
    %v289 = vpop.f32.mrb[0].mxu0
    %v290 = vadd.f32 %v189, %v289
    %291 = vmatprep.mubr.f32.mxu0 0.0
    %292 = vmatmul.mubr.f32.gmra.mrb[0].mxu0 %v129
    %v293 = vpop.f32.mrb[0].mxu0
    %v294 = vadd.f32 %v185, %v293
    %v295 = vpop.f32.mrb[0].mxu0
    %v296 = vadd.f32 %v189, %v295
    %297 = vmatprep.mubr.f32.mxu0 0.0
    %298 = vmatmul.mubr.f32.gmra.mrb[0].mxu0 %v130
    %v299 = vpop.f32.mrb[0].mxu0
    %v300 = vadd.f32 %v185, %v299
    %v301 = vpop.f32.mrb[0].mxu0
    %v302 = vadd.f32 %v189, %v301
    %303 = vmatprep.mubr.f32.mxu0 0.0
    %304 = vmatmul.mubr.f32.gmra.mrb[0].mxu0 %v131
    %v305 = vpop.f32.mrb[0].mxu0
    %v306 = vadd.f32 %v185, %v305
    %v307 = vpop.f32.mrb[0].mxu0
    %v308 = vadd.f32 %v189, %v307
    %309 = vdwg.mxu0
    %310 = vmatprep.subr.mxu0 0.0
    %311 = vmatpush1.msra.mxu0 %v134
    %312 = vmatprep.subr.mxu0 0.0
    %313 = vmatpush1.msra.mxu0 %v137
    %314 = vmatprep.subr.mxu0 0.0
    %315 = vmatpush1.msra.mxu0 %v140
    %316 = vmatprep.subr.mxu0 0.0
    %317 = vmatpush1.msra.mxu0 %v143
    %318 = vmatprep.subr.mxu0 0.0
    %319 = vmatpush1.msra.mxu0 %v146
    %320 = vmatprep.subr.mxu0 0.0
    %321 = vmatpush1.msra.mxu0 %v149
    %322 = vmatprep.subr.mxu0 0.0
    %323 = vmatpush1.msra.mxu0 %v152
    %324 = vmatprep.subr.mxu0 0.0
    %325 = vmatpush1.msra.mxu0 %v155
    %326 = vmatprep.subr.mxu0 0.0
    %327 = vmatpush1.msra.mxu0 %v158
    %328 = vmatprep.subr.mxu0 0.0
    %329 = vmatpush1.msra.mxu0 %v161
    %330 = vmatprep.subr.mxu0 0.0
    %331 = vmatpush1.msra.mxu0 %v164
    %332 = vmatprep.subr.mxu0 0.0
    %333 = vmatpush1.msra.mxu0 %v167
    %334 = vmatprep.subr.mxu0 0.0
    %335 = vmatpush1.msra.mxu0 %v170
    %336 = vmatprep.subr.mxu0 0.0
    %337 = vmatpush1.msra.mxu0 %v173
    %338 = vmatprep.subr.mxu0 0.0
    %339 = vmatpush1.msra.mxu0 %v176
    %340 = vmatprep.subr.mxu0 0.0
    %341 = vmatpush1.msra.mxu0 %v179
    %342 = vmatprep.subr.mxu0 0.0
    %343 = vmatpush1.msra.mxu0 0.0
    %344 = vmatprep.subr.mxu0 0.0
    %345 = vmatpush1.msra.mxu0 0.0
    %346 = vmatprep.subr.mxu0 0.0
    %347 = vmatpush1.msra.mxu0 0.0
    %348 = vmatprep.subr.mxu0 0.0
    %349 = vmatpush1.msra.mxu0 0.0
    %350 = vmatprep.subr.mxu0 0.0
    %351 = vmatpush1.msra.mxu0 0.0
    %352 = vmatprep.subr.mxu0 0.0
    %353 = vmatpush1.msra.mxu0 0.0
    %354 = vmatprep.subr.mxu0 0.0
    %355 = vmatpush1.msra.mxu0 0.0
    %356 = vmatprep.subr.mxu0 0.0
    %357 = vmatpush1.msra.mxu0 0.0
    %358 = vmatprep.subr.mxu0 0.0
    %359 = vmatpush1.msra.mxu0 0.0
    %360 = vmatprep.subr.mxu0 0.0
    %361 = vmatpush1.msra.mxu0 0.0
    %362 = vmatprep.subr.mxu0 0.0
    %363 = vmatpush1.msra.mxu0 0.0
    %364 = vmatprep.subr.mxu0 0.0
    %365 = vmatpush1.msra.mxu0 0.0
    %366 = vmatprep.subr.mxu0 0.0
    %367 = vmatpush1.msra.mxu0 0.0
    %368 = vmatprep.subr.mxu0 0.0
    %369 = vmatpush1.msra.mxu0 0.0
    %370 = vmatprep.subr.mxu0 0.0
    %371 = vmatpush1.msra.mxu0 0.0
    %372 = vmatprep.subr.mxu0 0.0
    %373 = vmatpush1.msra.mxu0 0.0
    %374 = vmatprep.mubr.f32.mxu0 0.0
    %375 = vmatmul.mubr.f32.gmra.mrb[0].mxu0 %v124
    %v376 = vpop.f32.mrb[0].mxu0
    %v377 = vadd.f32 %v193, %v376
    %v378 = vpop.f32.mrb[0].mxu0
    %379 = vmatprep.mubr.f32.mxu0 0.0
    %380 = vmatmul.mubr.f32.gmra.mrb[0].mxu0 %v125
    %v381 = vpop.f32.mrb[0].mxu0
    %v382 = vadd.f32 %v193, %v381
    %v383 = vpop.f32.mrb[0].mxu0
    %384 = vmatprep.mubr.f32.mxu0 0.0
    %385 = vmatmul.mubr.f32.gmra.mrb[0].mxu0 %v126
    %v386 = vpop.f32.mrb[0].mxu0
    %v387 = vadd.f32 %v193, %v386
    %v388 = vpop.f32.mrb[0].mxu0
    %389 = vmatprep.mubr.f32.mxu0 0.0
    %390 = vmatmul.mubr.f32.gmra.mrb[0].mxu0 %v127
    %v391 = vpop.f32.mrb[0].mxu0
    %v392 = vadd.f32 %v193, %v391
    %v393 = vpop.f32.mrb[0].mxu0
    %394 = vmatprep.mubr.f32.mxu0 0.0
    %395 = vmatmul.mubr.f32.gmra.mrb[0].mxu0 %v128
    %v396 = vpop.f32.mrb[0].mxu0
    %v397 = vadd.f32 %v193, %v396
    %v398 = vpop.f32.mrb[0].mxu0
    %399 = vmatprep.mubr.f32.mxu0 0.0
    %400 = vmatmul.mubr.f32.gmra.mrb[0].mxu0 %v129
    %v401 = vpop.f32.mrb[0].mxu0
    %v402 = vadd.f32 %v193, %v401
    %v403 = vpop.f32.mrb[0].mxu0
    %404 = vmatprep.mubr.f32.mxu0 0.0
    %405 = vmatmul.mubr.f32.gmra.mrb[0].mxu0 %v130
    %v406 = vpop.f32.mrb[0].mxu0
    %v407 = vadd.f32 %v193, %v406
    %v408 = vpop.f32.mrb[0].mxu0
    %409 = vmatprep.mubr.f32.mxu0 0.0
    %410 = vmatmul.mubr.f32.gmra.mrb[0].mxu0 %v131
    %v411 = vpop.f32.mrb[0].mxu0
    %v412 = vadd.f32 %v193, %v411
    %v413 = vpop.f32.mrb[0].mxu0
    %414 = vdwg.mxu0
    %415 = vst [vmem:[#allocation2] sm:$0xff] %v264
    %416 = vst [vmem:[#allocation2 + $0x8] sm:$0xff] %v266
    %417 = vst [vmem:[#allocation2 + $0x10] sm:$0xff] %v377
    %418 = vst [vmem:[#allocation2 + $0x18] sm:$0xff] %v270
    %419 = vst [vmem:[#allocation2 + $0x20] sm:$0xff] %v272
    %420 = vst [vmem:[#allocation2 + $0x28] sm:$0xff] %v382
    %421 = vst [vmem:[#allocation2 + $0x30] sm:$0xff] %v276
    %422 = vst [vmem:[#allocation2 + $0x38] sm:$0xff] %v278
    %423 = vst [vmem:[#allocation2 + $0x40] sm:$0xff] %v387
    %424 = vst [vmem:[#allocation2 + $0x48] sm:$0xff] %v282
    %425 = vst [vmem:[#allocation2 + $0x50] sm:$0xff] %v284
    %426 = vst [vmem:[#allocation2 + $0x58] sm:$0xff] %v392
    %427 = vst [vmem:[#allocation2 + $0x60] sm:$0xff] %v288
    %428 = vst [vmem:[#allocation2 + $0x68] sm:$0xff] %v290
    %429 = vst [vmem:[#allocation2 + $0x70] sm:$0xff] %v397
    %430 = vst [vmem:[#allocation2 + $0x78] sm:$0xff] %v294
    %431 = vst [vmem:[#allocation2 + $0x80] sm:$0xff] %v296
    %432 = vst [vmem:[#allocation2 + $0x88] sm:$0xff] %v402
    %433 = vst [vmem:[#allocation2 + $0x90] sm:$0xff] %v300
    %434 = vst [vmem:[#allocation2 + $0x98] sm:$0xff] %v302
    %435 = vst [vmem:[#allocation2 + $0xa0] sm:$0xff] %v407
    %436 = vst [vmem:[#allocation2 + $0xa8] sm:$0xff] %v306
    %437 = vst [vmem:[#allocation2 + $0xb0] sm:$0xff] %v308
    %438 = vst [vmem:[#allocation2 + $0xb8] sm:$0xff] %v412
    %v439 = vld [vmem:[%s4] sm:$0x7]
    %v440 = vld [vmem:[%s7] sm:$0xff]
    %v441 = vld [vmem:[#allocation2] sm:$0xff]
    %v442 = vld [vmem:[#allocation2 + $0x8] sm:$0xff]
    %v443 = vld [vmem:[#allocation2 + $0x10] sm:$0xff]
    %v444 = vld [vmem:[#allocation7] sm:$0xff]
    %v445 = vld [vmem:[#allocation7 + $0x8] sm:$0xff]
    %v446 = vld [vmem:[#allocation7 + $0x10] sm:$0xff]
    %v447 = vld [vmem:[#allocation7 + $0x18] sm:$0xff]
    %v448 = vld [vmem:[#allocation7 + $0x20] sm:$0xff]
    %v449 = vld [vmem:[#allocation7 + $0x28] sm:$0xff]
    %v450 = vld [vmem:[#allocation7 + $0x30] sm:$0xff]
    %v451 = vld [vmem:[#allocation7 + $0x38] sm:$0xff]
    %v452 = vld [vmem:[#allocation7 + $0x40] sm:$0xff]
    %v453 = vld [vmem:[#allocation7 + $0x48] sm:$0xff]
    %v454 = vld [vmem:[#allocation7 + $0x50] sm:$0xff]
    %v455 = vld [vmem:[#allocation7 + $0x58] sm:$0xff]
    %v456 = vld [vmem:[#allocation7 + $0x60] sm:$0xff]
    %v457 = vld [vmem:[#allocation7 + $0x68] sm:$0xff]
    %v458 = vld [vmem:[#allocation7 + $0x70] sm:$0xff]
    %v459 = vld [vmem:[#allocation7 + $0x78] sm:$0xff]
    %v460 = vld [vmem:[#allocation7 + $0x80] sm:$0xff]
    %v461 = vld [vmem:[#allocation7 + $0x88] sm:$0xff]
    %v462 = vld [vmem:[#allocation7 + $0x90] sm:$0xff]
    %v463 = vld [vmem:[#allocation7 + $0x98] sm:$0xff]
    %v464 = vld [vmem:[#allocation7 + $0xa0] sm:$0xff]
    %v465 = vld [vmem:[#allocation7 + $0xa8] sm:$0xff]
    %v466 = vld [vmem:[#allocation7 + $0xb0] sm:$0xff]
    %v467 = vld [vmem:[#allocation7 + $0xb8] sm:$0xff]
    %v468 = vld [vmem:[#allocation7 + $0xc0] sm:$0xff]
    %v469 = vld [vmem:[#allocation7 + $0xc8] sm:$0xff]
    %v470 = vld [vmem:[#allocation7 + $0xd0] sm:$0xff]
    %v471 = vld [vmem:[#allocation7 + $0xd8] sm:$0xff]
    %v472 = vld [vmem:[#allocation7 + $0xe0] sm:$0xff]
    %v473 = vld [vmem:[#allocation7 + $0xe8] sm:$0xff]
    %v474 = vld [vmem:[#allocation7 + $0xf0] sm:$0xff]
    %v475 = vld [vmem:[#allocation7 + $0xf8] sm:$0xff]
    %v476 = vld [vmem:[#allocation7 + $0x100] sm:$0xff]
    %v477 = vld [vmem:[#allocation7 + $0x108] sm:$0xff]
    %v478 = vld [vmem:[#allocation7 + $0x110] sm:$0xff]
    %v479 = vld [vmem:[#allocation7 + $0x118] sm:$0xff]
    %v480 = vld [vmem:[#allocation7 + $0x120] sm:$0xff]
    %v481 = vld [vmem:[#allocation7 + $0x128] sm:$0xff]
    %v482 = vld [vmem:[#allocation7 + $0x130] sm:$0xff]
    %v483 = vld [vmem:[#allocation7 + $0x138] sm:$0xff]
    %v484 = vld [vmem:[#allocation7 + $0x140] sm:$0xff]
    %v485 = vld [vmem:[#allocation7 + $0x148] sm:$0xff]
    %v486 = vld [vmem:[#allocation7 + $0x150] sm:$0xff]
    %v487 = vld [vmem:[#allocation7 + $0x158] sm:$0xff]
    %v488 = vld [vmem:[#allocation7 + $0x160] sm:$0xff]
    %v489 = vld [vmem:[#allocation7 + $0x168] sm:$0xff]
    %v490 = vld [vmem:[#allocation7 + $0x170] sm:$0xff]
    %v491 = vld [vmem:[#allocation7 + $0x178] sm:$0xff]
    %v493 = vlaneseq
    %v494 = vshrl.u32 %v493, 7
    %v495 = vsub.s32 0, %v494
    %v496 = vrot.slane %v439, %v495
    %v497 = vlaneseq
    %v498 = vshrl.u32 %v497, 7
    %v499 = vsub.s32 1, %v498
    %v500 = vrot.slane %v439, %v499
    %v501 = vlaneseq
    %v502 = vshrl.u32 %v501, 7
    %v503 = vsub.s32 2, %v502
    %v504 = vrot.slane %v439, %v503
    %508 = vmatprep.subr.mxu0 %v445
    %509 = vmatpush1.msra.mxu0 %v444
    %510 = vmatprep.subr.mxu0 %v448
    %511 = vmatpush1.msra.mxu0 %v447
    %512 = vmatprep.subr.mxu0 %v451
    %513 = vmatpush1.msra.mxu0 %v450
    %514 = vmatprep.subr.mxu0 %v454
    %515 = vmatpush1.msra.mxu0 %v453
    %516 = vmatprep.subr.mxu0 %v457
    %517 = vmatpush1.msra.mxu0 %v456
    %518 = vmatprep.subr.mxu0 %v460
    %519 = vmatpush1.msra.mxu0 %v459
    %520 = vmatprep.subr.mxu0 %v463
    %521 = vmatpush1.msra.mxu0 %v462
    %522 = vmatprep.subr.mxu0 %v466
    %523 = vmatpush1.msra.mxu0 %v465
    %524 = vmatprep.subr.mxu0 %v469
    %525 = vmatpush1.msra.mxu0 %v468
    %526 = vmatprep.subr.mxu0 %v472
    %527 = vmatpush1.msra.mxu0 %v471
    %528 = vmatprep.subr.mxu0 %v475
    %529 = vmatpush1.msra.mxu0 %v474
    %530 = vmatprep.subr.mxu0 %v478
    %531 = vmatpush1.msra.mxu0 %v477
    %532 = vmatprep.subr.mxu0 %v481
    %533 = vmatpush1.msra.mxu0 %v480
    %534 = vmatprep.subr.mxu0 %v484
    %535 = vmatpush1.msra.mxu0 %v483
    %536 = vmatprep.subr.mxu0 %v487
    %537 = vmatpush1.msra.mxu0 %v486
    %538 = vmatprep.subr.mxu0 %v490
    %539 = vmatpush1.msra.mxu0 %v489
    %540 = vmatprep.subr.mxu0 0.0
    %541 = vmatpush1.msra.mxu0 0.0
    %542 = vmatprep.subr.mxu0 0.0
    %543 = vmatpush1.msra.mxu0 0.0
    %544 = vmatprep.subr.mxu0 0.0
    %545 = vmatpush1.msra.mxu0 0.0
    %546 = vmatprep.subr.mxu0 0.0
    %547 = vmatpush1.msra.mxu0 0.0
    %548 = vmatprep.subr.mxu0 0.0
    %549 = vmatpush1.msra.mxu0 0.0
    %550 = vmatprep.subr.mxu0 0.0
    %551 = vmatpush1.msra.mxu0 0.0
    %552 = vmatprep.subr.mxu0 0.0
    %553 = vmatpush1.msra.mxu0 0.0
    %554 = vmatprep.subr.mxu0 0.0
    %555 = vmatpush1.msra.mxu0 0.0
    %556 = vmatprep.subr.mxu0 0.0
    %557 = vmatpush1.msra.mxu0 0.0
    %558 = vmatprep.subr.mxu0 0.0
    %559 = vmatpush1.msra.mxu0 0.0
    %560 = vmatprep.subr.mxu0 0.0
    %561 = vmatpush1.msra.mxu0 0.0
    %562 = vmatprep.subr.mxu0 0.0
    %563 = vmatpush1.msra.mxu0 0.0
    %564 = vmatprep.subr.mxu0 0.0
    %565 = vmatpush1.msra.mxu0 0.0
    %566 = vmatprep.subr.mxu0 0.0
    %567 = vmatpush1.msra.mxu0 0.0
    %568 = vmatprep.subr.mxu0 0.0
    %569 = vmatpush1.msra.mxu0 0.0
    %570 = vmatprep.subr.mxu0 0.0
    %571 = vmatpush1.msra.mxu0 0.0
    %572 = vmatprep.mubr.f32.mxu0 0.0
    %573 = vmatmul.mubr.f32.gmra.mrb[0].mxu0 %v440
    %v574 = vpop.f32.mrb[0].mxu0
    %v575 = vadd.f32 %v496, %v574
    %v576 = vpop.f32.mrb[0].mxu0
    %v577 = vadd.f32 %v500, %v576
    %578 = vdwg.mxu0
    %579 = vmatprep.subr.mxu0 0.0
    %580 = vmatpush1.msra.mxu0 %v446
    %581 = vmatprep.subr.mxu0 0.0
    %582 = vmatpush1.msra.mxu0 %v449
    %583 = vmatprep.subr.mxu0 0.0
    %584 = vmatpush1.msra.mxu0 %v452
    %585 = vmatprep.subr.mxu0 0.0
    %586 = vmatpush1.msra.mxu0 %v455
    %587 = vmatprep.subr.mxu0 0.0
    %588 = vmatpush1.msra.mxu0 %v458
    %589 = vmatprep.subr.mxu0 0.0
    %590 = vmatpush1.msra.mxu0 %v461
    %591 = vmatprep.subr.mxu0 0.0
    %592 = vmatpush1.msra.mxu0 %v464
    %593 = vmatprep.subr.mxu0 0.0
    %594 = vmatpush1.msra.mxu0 %v467
    %595 = vmatprep.subr.mxu0 0.0
    %596 = vmatpush1.msra.mxu0 %v470
    %597 = vmatprep.subr.mxu0 0.0
    %598 = vmatpush1.msra.mxu0 %v473
    %599 = vmatprep.subr.mxu0 0.0
    %600 = vmatpush1.msra.mxu0 %v476
    %601 = vmatprep.subr.mxu0 0.0
    %602 = vmatpush1.msra.mxu0 %v479
    %603 = vmatprep.subr.mxu0 0.0
    %604 = vmatpush1.msra.mxu0 %v482
    %605 = vmatprep.subr.mxu0 0.0
    %606 = vmatpush1.msra.mxu0 %v485
    %607 = vmatprep.subr.mxu0 0.0
    %608 = vmatpush1.msra.mxu0 %v488
    %609 = vmatprep.subr.mxu0 0.0
    %610 = vmatpush1.msra.mxu0 %v491
    %611 = vmatprep.subr.mxu0 0.0
    %612 = vmatpush1.msra.mxu0 0.0
    %613 = vmatprep.subr.mxu0 0.0
    %614 = vmatpush1.msra.mxu0 0.0
    %615 = vmatprep.subr.mxu0 0.0
    %616 = vmatpush1.msra.mxu0 0.0
    %617 = vmatprep.subr.mxu0 0.0
    %618 = vmatpush1.msra.mxu0 0.0
    %619 = vmatprep.subr.mxu0 0.0
    %620 = vmatpush1.msra.mxu0 0.0
    %621 = vmatprep.subr.mxu0 0.0
    %622 = vmatpush1.msra.mxu0 0.0
    %623 = vmatprep.subr.mxu0 0.0
    %624 = vmatpush1.msra.mxu0 0.0
    %625 = vmatprep.subr.mxu0 0.0
    %626 = vmatpush1.msra.mxu0 0.0
    %627 = vmatprep.subr.mxu0 0.0
    %628 = vmatpush1.msra.mxu0 0.0
    %629 = vmatprep.subr.mxu0 0.0
    %630 = vmatpush1.msra.mxu0 0.0
    %631 = vmatprep.subr.mxu0 0.0
    %632 = vmatpush1.msra.mxu0 0.0
    %633 = vmatprep.subr.mxu0 0.0
    %634 = vmatpush1.msra.mxu0 0.0
    %635 = vmatprep.subr.mxu0 0.0
    %636 = vmatpush1.msra.mxu0 0.0
    %637 = vmatprep.subr.mxu0 0.0
    %638 = vmatpush1.msra.mxu0 0.0
    %639 = vmatprep.subr.mxu0 0.0
    %640 = vmatpush1.msra.mxu0 0.0
    %641 = vmatprep.subr.mxu0 0.0
    %642 = vmatpush1.msra.mxu0 0.0
    %643 = vmatprep.mubr.f32.mxu0 0.0
    %644 = vmatmul.mubr.f32.gmra.mrb[0].mxu0 %v440
    %v645 = vpop.f32.mrb[0].mxu0
    %v646 = vadd.f32 %v504, %v645
    %v647 = vpop.f32.mrb[0].mxu0
    %648 = vdwg.mxu0
    %v649 = vadd.f32 %v441, %v575
    %v650 = vxor.u32 %v649, 2147483648
    %v651 = vmul.f32 %v650, 1.442695
    %v652 = vpow.pop %v651
    %v653 = vadd.f32 %v652, 1.0
    %v654 = vrcp.pop %v653
    %v655 = vmul.f32 1.0, %v654
    %v656 = vadd.f32 %v442, %v577
    %v657 = vxor.u32 %v656, 2147483648
    %v658 = vmul.f32 %v657, 1.442695
    %v659 = vpow.pop %v658
    %v660 = vadd.f32 %v659, 1.0
    %v661 = vrcp.pop %v660
    %v662 = vmul.f32 1.0, %v661
    %v663 = vmul.f32 %v655, %v646
    %v664 = vadd.f32 %v443, %v663
    %v665 = vtanh.pop %v664
    %v666 = vsub.f32 1.0, %v662
    %v667 = vmul.f32 %v666, %v665
    %v668 = vmul.f32 %v662, %v440
    %v669 = vadd.f32 %v667, %v668
    %670 = vst [vmem:[#allocation3] sm:$0xff] %v669
    %s671 = scalar_lea.vmem [#allocation2], 24
    %v672 = vld [vmem:[%s671] sm:$0xff]
    %v673 = vld [vmem:[%s671 + $0x8] sm:$0xff]
    %v674 = vld [vmem:[%s671 + $0x10] sm:$0xff]
    %v675 = vld [vmem:[#allocation7] sm:$0xff]
    %v676 = vld [vmem:[#allocation7 + $0x8] sm:$0xff]
    %v677 = vld [vmem:[#allocation7 + $0x10] sm:$0xff]
    %v678 = vld [vmem:[#allocation7 + $0x18] sm:$0xff]
    %v679 = vld [vmem:[#allocation7 + $0x20] sm:$0xff]
    %v680 = vld [vmem:[#allocation7 + $0x28] sm:$0xff]
    %v681 = vld [vmem:[#allocation7 + $0x30] sm:$0xff]
    %v682 = vld [vmem:[#allocation7 + $0x38] sm:$0xff]
    %v683 = vld [vmem:[#allocation7 + $0x40] sm:$0xff]
    %v684 = vld [vmem:[#allocation7 + $0x48] sm:$0xff]
    %v685 = vld [vmem:[#allocation7 + $0x50] sm:$0xff]
    %v686 = vld [vmem:[#allocation7 + $0x58] sm:$0xff]
    %v687 = vld [vmem:[#allocation7 + $0x60] sm:$0xff]
    %v688 = vld [vmem:[#allocation7 + $0x68] sm:$0xff]
    %v689 = vld [vmem:[#allocation7 + $0x70] sm:$0xff]
    %v690 = vld [vmem:[#allocation7 + $0x78] sm:$0xff]
    %v691 = vld [vmem:[#allocation7 + $0x80] sm:$0xff]
    %v692 = vld [vmem:[#allocation7 + $0x88] sm:$0xff]
    %v693 = vld [vmem:[#allocation7 + $0x90] sm:$0xff]
    %v694 = vld [vmem:[#allocation7 + $0x98] sm:$0xff]
    %v695 = vld [vmem:[#allocation7 + $0xa0] sm:$0xff]
    %v696 = vld [vmem:[#allocation7 + $0xa8] sm:$0xff]
    %v697 = vld [vmem:[#allocation7 + $0xb0] sm:$0xff]
    %v698 = vld [vmem:[#allocation7 + $0xb8] sm:$0xff]
    %v699 = vld [vmem:[#allocation7 + $0xc0] sm:$0xff]
    %v700 = vld [vmem:[#allocation7 + $0xc8] sm:$0xff]
    %v701 = vld [vmem:[#allocation7 + $0xd0] sm:$0xff]
    %v702 = vld [vmem:[#allocation7 + $0xd8] sm:$0xff]
    %v703 = vld [vmem:[#allocation7 + $0xe0] sm:$0xff]
    %v704 = vld [vmem:[#allocation7 + $0xe8] sm:$0xff]
    %v705 = vld [vmem:[#allocation7 + $0xf0] sm:$0xff]
    %v706 = vld [vmem:[#allocation7 + $0xf8] sm:$0xff]
    %v707 = vld [vmem:[#allocation7 + $0x100] sm:$0xff]
    %v708 = vld [vmem:[#allocation7 + $0x108] sm:$0xff]
    %v709 = vld [vmem:[#allocation7 + $0x110] sm:$0xff]
    %v710 = vld [vmem:[#allocation7 + $0x118] sm:$0xff]
    %v711 = vld [vmem:[#allocation7 + $0x120] sm:$0xff]
    %v712 = vld [vmem:[#allocation7 + $0x128] sm:$0xff]
    %v713 = vld [vmem:[#allocation7 + $0x130] sm:$0xff]
    %v714 = vld [vmem:[#allocation7 + $0x138] sm:$0xff]
    %v715 = vld [vmem:[#allocation7 + $0x140] sm:$0xff]
    %v716 = vld [vmem:[#allocation7 + $0x148] sm:$0xff]
    %v717 = vld [vmem:[#allocation7 + $0x150] sm:$0xff]
    %v718 = vld [vmem:[#allocation7 + $0x158] sm:$0xff]
    %v719 = vld [vmem:[#allocation7 + $0x160] sm:$0xff]
    %v720 = vld [vmem:[#allocation7 + $0x168] sm:$0xff]
    %v721 = vld [vmem:[#allocation7 + $0x170] sm:$0xff]
    %v722 = vld [vmem:[#allocation7 + $0x178] sm:$0xff]
    %723 = vmatprep.subr.mxu0 %v676
    %724 = vmatpush1.msra.mxu0 %v675
    %725 = vmatprep.subr.mxu0 %v679
    %726 = vmatpush1.msra.mxu0 %v678
    %727 = vmatprep.subr.mxu0 %v682
    %728 = vmatpush1.msra.mxu0 %v681
    %729 = vmatprep.subr.mxu0 %v685
    %730 = vmatpush1.msra.mxu0 %v684
    %731 = vmatprep.subr.mxu0 %v688
    %732 = vmatpush1.msra.mxu0 %v687
    %733 = vmatprep.subr.mxu0 %v691
    %734 = vmatpush1.msra.mxu0 %v690
    %735 = vmatprep.subr.mxu0 %v694
    %736 = vmatpush1.msra.mxu0 %v693
    %737 = vmatprep.subr.mxu0 %v697
    %738 = vmatpush1.msra.mxu0 %v696
    %739 = vmatprep.subr.mxu0 %v700
    %740 = vmatpush1.msra.mxu0 %v699
    %741 = vmatprep.subr.mxu0 %v703
    %742 = vmatpush1.msra.mxu0 %v702
    %743 = vmatprep.subr.mxu0 %v706
    %744 = vmatpush1.msra.mxu0 %v705
    %745 = vmatprep.subr.mxu0 %v709
    %746 = vmatpush1.msra.mxu0 %v708
    %747 = vmatprep.subr.mxu0 %v712
    %748 = vmatpush1.msra.mxu0 %v711
    %749 = vmatprep.subr.mxu0 %v715
    %750 = vmatpush1.msra.mxu0 %v714
    %751 = vmatprep.subr.mxu0 %v718
    %752 = vmatpush1.msra.mxu0 %v717
    %753 = vmatprep.subr.mxu0 %v721
    %754 = vmatpush1.msra.mxu0 %v720
    %755 = vmatprep.subr.mxu0 0.0
    %756 = vmatpush1.msra.mxu0 0.0
    %757 = vmatprep.subr.mxu0 0.0
    %758 = vmatpush1.msra.mxu0 0.0
    %759 = vmatprep.subr.mxu0 0.0
    %760 = vmatpush1.msra.mxu0 0.0
    %761 = vmatprep.subr.mxu0 0.0
    %762 = vmatpush1.msra.mxu0 0.0
    %763 = vmatprep.subr.mxu0 0.0
    %764 = vmatpush1.msra.mxu0 0.0
    %765 = vmatprep.subr.mxu0 0.0
    %766 = vmatpush1.msra.mxu0 0.0
    %767 = vmatprep.subr.mxu0 0.0
    %768 = vmatpush1.msra.mxu0 0.0
    %769 = vmatprep.subr.mxu0 0.0
    %770 = vmatpush1.msra.mxu0 0.0
    %771 = vmatprep.subr.mxu0 0.0
    %772 = vmatpush1.msra.mxu0 0.0
    %773 = vmatprep.subr.mxu0 0.0
    %774 = vmatpush1.msra.mxu0 0.0
    %775 = vmatprep.subr.mxu0 0.0
    %776 = vmatpush1.msra.mxu0 0.0
    %777 = vmatprep.subr.mxu0 0.0
    %778 = vmatpush1.msra.mxu0 0.0
    %779 = vmatprep.subr.mxu0 0.0
    %780 = vmatpush1.msra.mxu0 0.0
    %781 = vmatprep.subr.mxu0 0.0
    %782 = vmatpush1.msra.mxu0 0.0
    %783 = vmatprep.subr.mxu0 0.0
    %784 = vmatpush1.msra.mxu0 0.0
    %785 = vmatprep.subr.mxu0 0.0
    %786 = vmatpush1.msra.mxu0 0.0
    %787 = vmatprep.mubr.f32.mxu0 0.0
    %788 = vmatmul.mubr.f32.gmra.mrb[0].mxu0 %v669
    %v789 = vpop.f32.mrb[0].mxu0
    %v790 = vadd.f32 %v496, %v789
    %v791 = vpop.f32.mrb[0].mxu0
    %v792 = vadd.f32 %v500, %v791
    %793 = vdwg.mxu0
    %794 = vmatprep.subr.mxu0 0.0
    %795 = vmatpush1.msra.mxu0 %v677
    %796 = vmatprep.subr.mxu0 0.0
    %797 = vmatpush1.msra.mxu0 %v680
    %798 = vmatprep.subr.mxu0 0.0
    %799 = vmatpush1.msra.mxu0 %v683
    %800 = vmatprep.subr.mxu0 0.0
    %801 = vmatpush1.msra.mxu0 %v686
    %802 = vmatprep.subr.mxu0 0.0
    %803 = vmatpush1.msra.mxu0 %v689
    %804 = vmatprep.subr.mxu0 0.0
    %805 = vmatpush1.msra.mxu0 %v692
    %806 = vmatprep.subr.mxu0 0.0
    %807 = vmatpush1.msra.mxu0 %v695
    %808 = vmatprep.subr.mxu0 0.0
    %809 = vmatpush1.msra.mxu0 %v698
    %810 = vmatprep.subr.mxu0 0.0
    %811 = vmatpush1.msra.mxu0 %v701
    %812 = vmatprep.subr.mxu0 0.0
    %813 = vmatpush1.msra.mxu0 %v704
    %814 = vmatprep.subr.mxu0 0.0
    %815 = vmatpush1.msra.mxu0 %v707
    %816 = vmatprep.subr.mxu0 0.0
    %817 = vmatpush1.msra.mxu0 %v710
    %818 = vmatprep.subr.mxu0 0.0
    %819 = vmatpush1.msra.mxu0 %v713
    %820 = vmatprep.subr.mxu0 0.0
    %821 = vmatpush1.msra.mxu0 %v716
    %822 = vmatprep.subr.mxu0 0.0
    %823 = vmatpush1.msra.mxu0 %v719
    %824 = vmatprep.subr.mxu0 0.0
    %825 = vmatpush1.msra.mxu0 %v722
    %826 = vmatprep.subr.mxu0 0.0
    %827 = vmatpush1.msra.mxu0 0.0
    %828 = vmatprep.subr.mxu0 0.0
    %829 = vmatpush1.msra.mxu0 0.0
    %830 = vmatprep.subr.mxu0 0.0
    %831 = vmatpush1.msra.mxu0 0.0
    %832 = vmatprep.subr.mxu0 0.0
    %833 = vmatpush1.msra.mxu0 0.0
    %834 = vmatprep.subr.mxu0 0.0
    %835 = vmatpush1.msra.mxu0 0.0
    %836 = vmatprep.subr.mxu0 0.0
    %837 = vmatpush1.msra.mxu0 0.0
    %838 = vmatprep.subr.mxu0 0.0
    %839 = vmatpush1.msra.mxu0 0.0
    %840 = vmatprep.subr.mxu0 0.0
    %841 = vmatpush1.msra.mxu0 0.0
    %842 = vmatprep.subr.mxu0 0.0
    %843 = vmatpush1.msra.mxu0 0.0
    %844 = vmatprep.subr.mxu0 0.0
    %845 = vmatpush1.msra.mxu0 0.0
    %846 = vmatprep.subr.mxu0 0.0
    %847 = vmatpush1.msra.mxu0 0.0
    %848 = vmatprep.subr.mxu0 0.0
    %849 = vmatpush1.msra.mxu0 0.0
    %850 = vmatprep.subr.mxu0 0.0
    %851 = vmatpush1.msra.mxu0 0.0
    %852 = vmatprep.subr.mxu0 0.0
    %853 = vmatpush1.msra.mxu0 0.0
    %854 = vmatprep.subr.mxu0 0.0
    %855 = vmatpush1.msra.mxu0 0.0
    %856 = vmatprep.subr.mxu0 0.0
    %857 = vmatpush1.msra.mxu0 0.0
    %858 = vmatprep.mubr.f32.mxu0 0.0
    %859 = vmatmul.mubr.f32.gmra.mrb[0].mxu0 %v669
    %v860 = vpop.f32.mrb[0].mxu0
    %v861 = vadd.f32 %v504, %v860
    %v862 = vpop.f32.mrb[0].mxu0
    %863 = vdwg.mxu0
    %v864 = vadd.f32 %v672, %v790
    %v865 = vxor.u32 %v864, 2147483648
    %v866 = vmul.f32 %v865, 1.442695
    %v867 = vpow.pop %v866
    %v868 = vadd.f32 %v867, 1.0
    %v869 = vrcp.pop %v868
    %v870 = vmul.f32 1.0, %v869
    %v871 = vadd.f32 %v673, %v792
    %v872 = vxor.u32 %v871, 2147483648
    %v873 = vmul.f32 %v872, 1.442695
    %v874 = vpow.pop %v873
    %v875 = vadd.f32 %v874, 1.0
    %v876 = vrcp.pop %v875
    %v877 = vmul.f32 1.0, %v876
    %v878 = vmul.f32 %v870, %v861
    %v879 = vadd.f32 %v674, %v878
    %v880 = vtanh.pop %v879
    %v881 = vsub.f32 1.0, %v877
    %v882 = vmul.f32 %v881, %v880
    %v883 = vmul.f32 %v877, %v669
    %v884 = vadd.f32 %v882, %v883
    %s885 = scalar_lea.vmem [#allocation3], 8
    %886 = vst [vmem:[%s885] sm:$0xff] %v884
    %s887 = scalar_lea.vmem [#allocation2], 48
    %v888 = vld [vmem:[%s887] sm:$0xff]
    %v889 = vld [vmem:[%s887 + $0x8] sm:$0xff]
    %v890 = vld [vmem:[%s887 + $0x10] sm:$0xff]
    %v891 = vld [vmem:[#allocation7] sm:$0xff]
    %v892 = vld [vmem:[#allocation7 + $0x8] sm:$0xff]
    %v893 = vld [vmem:[#allocation7 + $0x10] sm:$0xff]
    %v894 = vld [vmem:[#allocation7 + $0x18] sm:$0xff]
    %v895 = vld [vmem:[#allocation7 + $0x20] sm:$0xff]
    %v896 = vld [vmem:[#allocation7 + $0x28] sm:$0xff]
    %v897 = vld [vmem:[#allocation7 + $0x30] sm:$0xff]
    %v898 = vld [vmem:[#allocation7 + $0x38] sm:$0xff]
    %v899 = vld [vmem:[#allocation7 + $0x40] sm:$0xff]
    %v900 = vld [vmem:[#allocation7 + $0x48] sm:$0xff]
    %v901 = vld [vmem:[#allocation7 + $0x50] sm:$0xff]
    %v902 = vld [vmem:[#allocation7 + $0x58] sm:$0xff]
    %v903 = vld [vmem:[#allocation7 + $0x60] sm:$0xff]
    %v904 = vld [vmem:[#allocation7 + $0x68] sm:$0xff]
    %v905 = vld [vmem:[#allocation7 + $0x70] sm:$0xff]
    %v906 = vld [vmem:[#allocation7 + $0x78] sm:$0xff]
    %v907 = vld [vmem:[#allocation7 + $0x80] sm:$0xff]
    %v908 = vld [vmem:[#allocation7 + $0x88] sm:$0xff]
    %v909 = vld [vmem:[#allocation7 + $0x90] sm:$0xff]
    %v910 = vld [vmem:[#allocation7 + $0x98] sm:$0xff]
    %v911 = vld [vmem:[#allocation7 + $0xa0] sm:$0xff]
    %v912 = vld [vmem:[#allocation7 + $0xa8] sm:$0xff]
    %v913 = vld [vmem:[#allocation7 + $0xb0] sm:$0xff]
    %v914 = vld [vmem:[#allocation7 + $0xb8] sm:$0xff]
    %v915 = vld [vmem:[#allocation7 + $0xc0] sm:$0xff]
    %v916 = vld [vmem:[#allocation7 + $0xc8] sm:$0xff]
    %v917 = vld [vmem:[#allocation7 + $0xd0] sm:$0xff]
    %v918 = vld [vmem:[#allocation7 + $0xd8] sm:$0xff]
    %v919 = vld [vmem:[#allocation7 + $0xe0] sm:$0xff]
    %v920 = vld [vmem:[#allocation7 + $0xe8] sm:$0xff]
    %v921 = vld [vmem:[#allocation7 + $0xf0] sm:$0xff]
    %v922 = vld [vmem:[#allocation7 + $0xf8] sm:$0xff]
    %v923 = vld [vmem:[#allocation7 + $0x100] sm:$0xff]
    %v924 = vld [vmem:[#allocation7 + $0x108] sm:$0xff]
    %v925 = vld [vmem:[#allocation7 + $0x110] sm:$0xff]
    %v926 = vld [vmem:[#allocation7 + $0x118] sm:$0xff]
    %v927 = vld [vmem:[#allocation7 + $0x120] sm:$0xff]
    %v928 = vld [vmem:[#allocation7 + $0x128] sm:$0xff]
    %v929 = vld [vmem:[#allocation7 + $0x130] sm:$0xff]
    %v930 = vld [vmem:[#allocation7 + $0x138] sm:$0xff]
    %v931 = vld [vmem:[#allocation7 + $0x140] sm:$0xff]
    %v932 = vld [vmem:[#allocation7 + $0x148] sm:$0xff]
    %v933 = vld [vmem:[#allocation7 + $0x150] sm:$0xff]
    %v934 = vld [vmem:[#allocation7 + $0x158] sm:$0xff]
    %v935 = vld [vmem:[#allocation7 + $0x160] sm:$0xff]
    %v936 = vld [vmem:[#allocation7 + $0x168] sm:$0xff]
    %v937 = vld [vmem:[#allocation7 + $0x170] sm:$0xff]
    %v938 = vld [vmem:[#allocation7 + $0x178] sm:$0xff]
    %939 = vmatprep.subr.mxu0 %v892
    %940 = vmatpush1.msra.mxu0 %v891
    %941 = vmatprep.subr.mxu0 %v895
    %942 = vmatpush1.msra.mxu0 %v894
    %943 = vmatprep.subr.mxu0 %v898
    %944 = vmatpush1.msra.mxu0 %v897
    %945 = vmatprep.subr.mxu0 %v901
    %946 = vmatpush1.msra.mxu0 %v900
    %947 = vmatprep.subr.mxu0 %v904
    %948 = vmatpush1.msra.mxu0 %v903
    %949 = vmatprep.subr.mxu0 %v907
    %950 = vmatpush1.msra.mxu0 %v906
    %951 = vmatprep.subr.mxu0 %v910
    %952 = vmatpush1.msra.mxu0 %v909
    %953 = vmatprep.subr.mxu0 %v913
    %954 = vmatpush1.msra.mxu0 %v912
    %955 = vmatprep.subr.mxu0 %v916
    %956 = vmatpush1.msra.mxu0 %v915
    %957 = vmatprep.subr.mxu0 %v919
    %958 = vmatpush1.msra.mxu0 %v918
    %959 = vmatprep.subr.mxu0 %v922
    %960 = vmatpush1.msra.mxu0 %v921
    %961 = vmatprep.subr.mxu0 %v925
    %962 = vmatpush1.msra.mxu0 %v924
    %963 = vmatprep.subr.mxu0 %v928
    %964 = vmatpush1.msra.mxu0 %v927
    %965 = vmatprep.subr.mxu0 %v931
    %966 = vmatpush1.msra.mxu0 %v930
    %967 = vmatprep.subr.mxu0 %v934
    %968 = vmatpush1.msra.mxu0 %v933
    %969 = vmatprep.subr.mxu0 %v937
    %970 = vmatpush1.msra.mxu0 %v936
    %971 = vmatprep.subr.mxu0 0.0
    %972 = vmatpush1.msra.mxu0 0.0
    %973 = vmatprep.subr.mxu0 0.0
    %974 = vmatpush1.msra.mxu0 0.0
    %975 = vmatprep.subr.mxu0 0.0
    %976 = vmatpush1.msra.mxu0 0.0
    %977 = vmatprep.subr.mxu0 0.0
    %978 = vmatpush1.msra.mxu0 0.0
    %979 = vmatprep.subr.mxu0 0.0
    %980 = vmatpush1.msra.mxu0 0.0
    %981 = vmatprep.subr.mxu0 0.0
    %982 = vmatpush1.msra.mxu0 0.0
    %983 = vmatprep.subr.mxu0 0.0
    %984 = vmatpush1.msra.mxu0 0.0
    %985 = vmatprep.subr.mxu0 0.0
    %986 = vmatpush1.msra.mxu0 0.0
    %987 = vmatprep.subr.mxu0 0.0
    %988 = vmatpush1.msra.mxu0 0.0
    %989 = vmatprep.subr.mxu0 0.0
    %990 = vmatpush1.msra.mxu0 0.0
    %991 = vmatprep.subr.mxu0 0.0
    %992 = vmatpush1.msra.mxu0 0.0
    %993 = vmatprep.subr.mxu0 0.0
    %994 = vmatpush1.msra.mxu0 0.0
    %995 = vmatprep.subr.mxu0 0.0
    %996 = vmatpush1.msra.mxu0 0.0
    %997 = vmatprep.subr.mxu0 0.0
    %998 = vmatpush1.msra.mxu0 0.0
    %999 = vmatprep.subr.mxu0 0.0
    %1000 = vmatpush1.msra.mxu0 0.0
    %1001 = vmatprep.subr.mxu0 0.0
    %1002 = vmatpush1.msra.mxu0 0.0
    %1003 = vmatprep.mubr.f32.mxu0 0.0
    %1004 = vmatmul.mubr.f32.gmra.mrb[0].mxu0 %v884
    %v1005 = vpop.f32.mrb[0].mxu0
    %v1006 = vadd.f32 %v496, %v1005
    %v1007 = vpop.f32.mrb[0].mxu0
    %v1008 = vadd.f32 %v500, %v1007
    %1009 = vdwg.mxu0
    %1010 = vmatprep.subr.mxu0 0.0
    %1011 = vmatpush1.msra.mxu0 %v893
    %1012 = vmatprep.subr.mxu0 0.0
    %1013 = vmatpush1.msra.mxu0 %v896
    %1014 = vmatprep.subr.mxu0 0.0
    %1015 = vmatpush1.msra.mxu0 %v899
    %1016 = vmatprep.subr.mxu0 0.0
    %1017 = vmatpush1.msra.mxu0 %v902
    %1018 = vmatprep.subr.mxu0 0.0
    %1019 = vmatpush1.msra.mxu0 %v905
    %1020 = vmatprep.subr.mxu0 0.0
    %1021 = vmatpush1.msra.mxu0 %v908
    %1022 = vmatprep.subr.mxu0 0.0
    %1023 = vmatpush1.msra.mxu0 %v911
    %1024 = vmatprep.subr.mxu0 0.0
    %1025 = vmatpush1.msra.mxu0 %v914
    %1026 = vmatprep.subr.mxu0 0.0
    %1027 = vmatpush1.msra.mxu0 %v917
    %1028 = vmatprep.subr.mxu0 0.0
    %1029 = vmatpush1.msra.mxu0 %v920
    %1030 = vmatprep.subr.mxu0 0.0
    %1031 = vmatpush1.msra.mxu0 %v923
    %1032 = vmatprep.subr.mxu0 0.0
    %1033 = vmatpush1.msra.mxu0 %v926
    %1034 = vmatprep.subr.mxu0 0.0
    %1035 = vmatpush1.msra.mxu0 %v929
    %1036 = vmatprep.subr.mxu0 0.0
    %1037 = vmatpush1.msra.mxu0 %v932
    %1038 = vmatprep.subr.mxu0 0.0
    %1039 = vmatpush1.msra.mxu0 %v935
    %1040 = vmatprep.subr.mxu0 0.0
    %1041 = vmatpush1.msra.mxu0 %v938
    %1042 = vmatprep.subr.mxu0 0.0
    %1043 = vmatpush1.msra.mxu0 0.0
    %1044 = vmatprep.subr.mxu0 0.0
    %1045 = vmatpush1.msra.mxu0 0.0
    %1046 = vmatprep.subr.mxu0 0.0
    %1047 = vmatpush1.msra.mxu0 0.0
    %1048 = vmatprep.subr.mxu0 0.0
    %1049 = vmatpush1.msra.mxu0 0.0
    %1050 = vmatprep.subr.mxu0 0.0
    %1051 = vmatpush1.msra.mxu0 0.0
    %1052 = vmatprep.subr.mxu0 0.0
    %1053 = vmatpush1.msra.mxu0 0.0
    %1054 = vmatprep.subr.mxu0 0.0
    %1055 = vmatpush1.msra.mxu0 0.0
    %1056 = vmatprep.subr.mxu0 0.0
    %1057 = vmatpush1.msra.mxu0 0.0
    %1058 = vmatprep.subr.mxu0 0.0
    %1059 = vmatpush1.msra.mxu0 0.0
    %1060 = vmatprep.subr.mxu0 0.0
    %1061 = vmatpush1.msra.mxu0 0.0
    %1062 = vmatprep.subr.mxu0 0.0
    %1063 = vmatpush1.msra.mxu0 0.0
    %1064 = vmatprep.subr.mxu0 0.0
    %1065 = vmatpush1.msra.mxu0 0.0
    %1066 = vmatprep.subr.mxu0 0.0
    %1067 = vmatpush1.msra.mxu0 0.0
    %1068 = vmatprep.subr.mxu0 0.0
    %1069 = vmatpush1.msra.mxu0 0.0
    %1070 = vmatprep.subr.mxu0 0.0
    %1071 = vmatpush1.msra.mxu0 0.0
    %1072 = vmatprep.subr.mxu0 0.0
    %1073 = vmatpush1.msra.mxu0 0.0
    %1074 = vmatprep.mubr.f32.mxu0 0.0
    %1075 = vmatmul.mubr.f32.gmra.mrb[0].mxu0 %v884
    %v1076 = vpop.f32.mrb[0].mxu0
    %v1077 = vadd.f32 %v504, %v1076
    %v1078 = vpop.f32.mrb[0].mxu0
    %1079 = vdwg.mxu0
    %v1080 = vadd.f32 %v888, %v1006
    %v1081 = vxor.u32 %v1080, 2147483648
    %v1082 = vmul.f32 %v1081, 1.442695
    %v1083 = vpow.pop %v1082
    %v1084 = vadd.f32 %v1083, 1.0
    %v1085 = vrcp.pop %v1084
    %v1086 = vmul.f32 1.0, %v1085
    %v1087 = vadd.f32 %v889, %v1008
    %v1088 = vxor.u32 %v1087, 2147483648
    %v1089 = vmul.f32 %v1088, 1.442695
    %v1090 = vpow.pop %v1089
    %v1091 = vadd.f32 %v1090, 1.0
    %v1092 = vrcp.pop %v1091
    %v1093 = vmul.f32 1.0, %v1092
    %v1094 = vmul.f32 %v1086, %v1077
    %v1095 = vadd.f32 %v890, %v1094
    %v1096 = vtanh.pop %v1095
    %v1097 = vsub.f32 1.0, %v1093
    %v1098 = vmul.f32 %v1097, %v1096
    %v1099 = vmul.f32 %v1093, %v884
    %v1100 = vadd.f32 %v1098, %v1099
    %s1101 = scalar_lea.vmem [#allocation3], 16
    %1102 = vst [vmem:[%s1101] sm:$0xff] %v1100
    %s1103 = scalar_lea.vmem [#allocation2], 72
    %v1104 = vld [vmem:[%s1103] sm:$0xff]
    %v1105 = vld [vmem:[%s1103 + $0x8] sm:$0xff]
    %v1106 = vld [vmem:[%s1103 + $0x10] sm:$0xff]
    %v1107 = vld [vmem:[#allocation7] sm:$0xff]
    %v1108 = vld [vmem:[#allocation7 + $0x8] sm:$0xff]
    %v1109 = vld [vmem:[#allocation7 + $0x10] sm:$0xff]
    %v1110 = vld [vmem:[#allocation7 + $0x18] sm:$0xff]
    %v1111 = vld [vmem:[#allocation7 + $0x20] sm:$0xff]
    %v1112 = vld [vmem:[#allocation7 + $0x28] sm:$0xff]
    %v1113 = vld [vmem:[#allocation7 + $0x30] sm:$0xff]
    %v1114 = vld [vmem:[#allocation7 + $0x38] sm:$0xff]
    %v1115 = vld [vmem:[#allocation7 + $0x40] sm:$0xff]
    %v1116 = vld [vmem:[#allocation7 + $0x48] sm:$0xff]
    %v1117 = vld [vmem:[#allocation7 + $0x50] sm:$0xff]
    %v1118 = vld [vmem:[#allocation7 + $0x58] sm:$0xff]
    %v1119 = vld [vmem:[#allocation7 + $0x60] sm:$0xff]
    %v1120 = vld [vmem:[#allocation7 + $0x68] sm:$0xff]
    %v1121 = vld [vmem:[#allocation7 + $0x70] sm:$0xff]
    %v1122 = vld [vmem:[#allocation7 + $0x78] sm:$0xff]
    %v1123 = vld [vmem:[#allocation7 + $0x80] sm:$0xff]
    %v1124 = vld [vmem:[#allocation7 + $0x88] sm:$0xff]
    %v1125 = vld [vmem:[#allocation7 + $0x90] sm:$0xff]
    %v1126 = vld [vmem:[#allocation7 + $0x98] sm:$0xff]
    %v1127 = vld [vmem:[#allocation7 + $0xa0] sm:$0xff]
    %v1128 = vld [vmem:[#allocation7 + $0xa8] sm:$0xff]
    %v1129 = vld [vmem:[#allocation7 + $0xb0] sm:$0xff]
    %v1130 = vld [vmem:[#allocation7 + $0xb8] sm:$0xff]
    %v1131 = vld [vmem:[#allocation7 + $0xc0] sm:$0xff]
    %v1132 = vld [vmem:[#allocation7 + $0xc8] sm:$0xff]
    %v1133 = vld [vmem:[#allocation7 + $0xd0] sm:$0xff]
    %v1134 = vld [vmem:[#allocation7 + $0xd8] sm:$0xff]
    %v1135 = vld [vmem:[#allocation7 + $0xe0] sm:$0xff]
    %v1136 = vld [vmem:[#allocation7 + $0xe8] sm:$0xff]
    %v1137 = vld [vmem:[#allocation7 + $0xf0] sm:$0xff]
    %v1138 = vld [vmem:[#allocation7 + $0xf8] sm:$0xff]
    %v1139 = vld [vmem:[#allocation7 + $0x100] sm:$0xff]
    %v1140 = vld [vmem:[#allocation7 + $0x108] sm:$0xff]
    %v1141 = vld [vmem:[#allocation7 + $0x110] sm:$0xff]
    %v1142 = vld [vmem:[#allocation7 + $0x118] sm:$0xff]
    %v1143 = vld [vmem:[#allocation7 + $0x120] sm:$0xff]
    %v1144 = vld [vmem:[#allocation7 + $0x128] sm:$0xff]
    %v1145 = vld [vmem:[#allocation7 + $0x130] sm:$0xff]
    %v1146 = vld [vmem:[#allocation7 + $0x138] sm:$0xff]
    %v1147 = vld [vmem:[#allocation7 + $0x140] sm:$0xff]
    %v1148 = vld [vmem:[#allocation7 + $0x148] sm:$0xff]
    %v1149 = vld [vmem:[#allocation7 + $0x150] sm:$0xff]
    %v1150 = vld [vmem:[#allocation7 + $0x158] sm:$0xff]
    %v1151 = vld [vmem:[#allocation7 + $0x160] sm:$0xff]
    %v1152 = vld [vmem:[#allocation7 + $0x168] sm:$0xff]
    %v1153 = vld [vmem:[#allocation7 + $0x170] sm:$0xff]
    %v1154 = vld [vmem:[#allocation7 + $0x178] sm:$0xff]
    %1155 = vmatprep.subr.mxu0 %v1108
    %1156 = vmatpush1.msra.mxu0 %v1107
    %1157 = vmatprep.subr.mxu0 %v1111
    %1158 = vmatpush1.msra.mxu0 %v1110
    %1159 = vmatprep.subr.mxu0 %v1114
    %1160 = vmatpush1.msra.mxu0 %v1113
    %1161 = vmatprep.subr.mxu0 %v1117
    %1162 = vmatpush1.msra.mxu0 %v1116
    %1163 = vmatprep.subr.mxu0 %v1120
    %1164 = vmatpush1.msra.mxu0 %v1119
    %1165 = vmatprep.subr.mxu0 %v1123
    %1166 = vmatpush1.msra.mxu0 %v1122
    %1167 = vmatprep.subr.mxu0 %v1126
    %1168 = vmatpush1.msra.mxu0 %v1125
    %1169 = vmatprep.subr.mxu0 %v1129
    %1170 = vmatpush1.msra.mxu0 %v1128
    %1171 = vmatprep.subr.mxu0 %v1132
    %1172 = vmatpush1.msra.mxu0 %v1131
    %1173 = vmatprep.subr.mxu0 %v1135
    %1174 = vmatpush1.msra.mxu0 %v1134
    %1175 = vmatprep.subr.mxu0 %v1138
    %1176 = vmatpush1.msra.mxu0 %v1137
    %1177 = vmatprep.subr.mxu0 %v1141
    %1178 = vmatpush1.msra.mxu0 %v1140
    %1179 = vmatprep.subr.mxu0 %v1144
    %1180 = vmatpush1.msra.mxu0 %v1143
    %1181 = vmatprep.subr.mxu0 %v1147
    %1182 = vmatpush1.msra.mxu0 %v1146
    %1183 = vmatprep.subr.mxu0 %v1150
    %1184 = vmatpush1.msra.mxu0 %v1149
    %1185 = vmatprep.subr.mxu0 %v1153
    %1186 = vmatpush1.msra.mxu0 %v1152
    %1187 = vmatprep.subr.mxu0 0.0
    %1188 = vmatpush1.msra.mxu0 0.0
    %1189 = vmatprep.subr.mxu0 0.0
    %1190 = vmatpush1.msra.mxu0 0.0
    %1191 = vmatprep.subr.mxu0 0.0
    %1192 = vmatpush1.msra.mxu0 0.0
    %1193 = vmatprep.subr.mxu0 0.0
    %1194 = vmatpush1.msra.mxu0 0.0
    %1195 = vmatprep.subr.mxu0 0.0
    %1196 = vmatpush1.msra.mxu0 0.0
    %1197 = vmatprep.subr.mxu0 0.0
    %1198 = vmatpush1.msra.mxu0 0.0
    %1199 = vmatprep.subr.mxu0 0.0
    %1200 = vmatpush1.msra.mxu0 0.0
    %1201 = vmatprep.subr.mxu0 0.0
    %1202 = vmatpush1.msra.mxu0 0.0
    %1203 = vmatprep.subr.mxu0 0.0
    %1204 = vmatpush1.msra.mxu0 0.0
    %1205 = vmatprep.subr.mxu0 0.0
    %1206 = vmatpush1.msra.mxu0 0.0
    %1207 = vmatprep.subr.mxu0 0.0
    %1208 = vmatpush1.msra.mxu0 0.0
    %1209 = vmatprep.subr.mxu0 0.0
    %1210 = vmatpush1.msra.mxu0 0.0
    %1211 = vmatprep.subr.mxu0 0.0
    %1212 = vmatpush1.msra.mxu0 0.0
    %1213 = vmatprep.subr.mxu0 0.0
    %1214 = vmatpush1.msra.mxu0 0.0
    %1215 = vmatprep.subr.mxu0 0.0
    %1216 = vmatpush1.msra.mxu0 0.0
    %1217 = vmatprep.subr.mxu0 0.0
    %1218 = vmatpush1.msra.mxu0 0.0
    %1219 = vmatprep.mubr.f32.mxu0 0.0
    %1220 = vmatmul.mubr.f32.gmra.mrb[0].mxu0 %v1100
    %v1221 = vpop.f32.mrb[0].mxu0
    %v1222 = vadd.f32 %v496, %v1221
    %v1223 = vpop.f32.mrb[0].mxu0
    %v1224 = vadd.f32 %v500, %v1223
    %1225 = vdwg.mxu0
    %1226 = vmatprep.subr.mxu0 0.0
    %1227 = vmatpush1.msra.mxu0 %v1109
    %1228 = vmatprep.subr.mxu0 0.0
    %1229 = vmatpush1.msra.mxu0 %v1112
    %1230 = vmatprep.subr.mxu0 0.0
    %1231 = vmatpush1.msra.mxu0 %v1115
    %1232 = vmatprep.subr.mxu0 0.0
    %1233 = vmatpush1.msra.mxu0 %v1118
    %1234 = vmatprep.subr.mxu0 0.0
    %1235 = vmatpush1.msra.mxu0 %v1121
    %1236 = vmatprep.subr.mxu0 0.0
    %1237 = vmatpush1.msra.mxu0 %v1124
    %1238 = vmatprep.subr.mxu0 0.0
    %1239 = vmatpush1.msra.mxu0 %v1127
    %1240 = vmatprep.subr.mxu0 0.0
    %1241 = vmatpush1.msra.mxu0 %v1130
    %1242 = vmatprep.subr.mxu0 0.0
    %1243 = vmatpush1.msra.mxu0 %v1133
    %1244 = vmatprep.subr.mxu0 0.0
    %1245 = vmatpush1.msra.mxu0 %v1136
    %1246 = vmatprep.subr.mxu0 0.0
    %1247 = vmatpush1.msra.mxu0 %v1139
    %1248 = vmatprep.subr.mxu0 0.0
    %1249 = vmatpush1.msra.mxu0 %v1142
    %1250 = vmatprep.subr.mxu0 0.0
    %1251 = vmatpush1.msra.mxu0 %v1145
    %1252 = vmatprep.subr.mxu0 0.0
    %1253 = vmatpush1.msra.mxu0 %v1148
    %1254 = vmatprep.subr.mxu0 0.0
    %1255 = vmatpush1.msra.mxu0 %v1151
    %1256 = vmatprep.subr.mxu0 0.0
    %1257 = vmatpush1.msra.mxu0 %v1154
    %1258 = vmatprep.subr.mxu0 0.0
    %1259 = vmatpush1.msra.mxu0 0.0
    %1260 = vmatprep.subr.mxu0 0.0
    %1261 = vmatpush1.msra.mxu0 0.0
    %1262 = vmatprep.subr.mxu0 0.0
    %1263 = vmatpush1.msra.mxu0 0.0
    %1264 = vmatprep.subr.mxu0 0.0
    %1265 = vmatpush1.msra.mxu0 0.0
    %1266 = vmatprep.subr.mxu0 0.0
    %1267 = vmatpush1.msra.mxu0 0.0
    %1268 = vmatprep.subr.mxu0 0.0
    %1269 = vmatpush1.msra.mxu0 0.0
    %1270 = vmatprep.subr.mxu0 0.0
    %1271 = vmatpush1.msra.mxu0 0.0
    %1272 = vmatprep.subr.mxu0 0.0
    %1273 = vmatpush1.msra.mxu0 0.0
    %1274 = vmatprep.subr.mxu0 0.0
    %1275 = vmatpush1.msra.mxu0 0.0
    %1276 = vmatprep.subr.mxu0 0.0
    %1277 = vmatpush1.msra.mxu0 0.0
    %1278 = vmatprep.subr.mxu0 0.0
    %1279 = vmatpush1.msra.mxu0 0.0
    %1280 = vmatprep.subr.mxu0 0.0
    %1281 = vmatpush1.msra.mxu0 0.0
    %1282 = vmatprep.subr.mxu0 0.0
    %1283 = vmatpush1.msra.mxu0 0.0
    %1284 = vmatprep.subr.mxu0 0.0
    %1285 = vmatpush1.msra.mxu0 0.0
    %1286 = vmatprep.subr.mxu0 0.0
    %1287 = vmatpush1.msra.mxu0 0.0
    %1288 = vmatprep.subr.mxu0 0.0
    %1289 = vmatpush1.msra.mxu0 0.0
    %1290 = vmatprep.mubr.f32.mxu0 0.0
    %1291 = vmatmul.mubr.f32.gmra.mrb[0].mxu0 %v1100
    %v1292 = vpop.f32.mrb[0].mxu0
    %v1293 = vadd.f32 %v504, %v1292
    %v1294 = vpop.f32.mrb[0].mxu0
    %1295 = vdwg.mxu0
    %v1296 = vadd.f32 %v1104, %v1222
    %v1297 = vxor.u32 %v1296, 2147483648
    %v1298 = vmul.f32 %v1297, 1.442695
    %v1299 = vpow.pop %v1298
    %v1300 = vadd.f32 %v1299, 1.0
    %v1301 = vrcp.pop %v1300
    %v1302 = vmul.f32 1.0, %v1301
    %v1303 = vadd.f32 %v1105, %v1224
    %v1304 = vxor.u32 %v1303, 2147483648
    %v1305 = vmul.f32 %v1304, 1.442695
    %v1306 = vpow.pop %v1305
    %v1307 = vadd.f32 %v1306, 1.0
    %v1308 = vrcp.pop %v1307
    %v1309 = vmul.f32 1.0, %v1308
    %v1310 = vmul.f32 %v1302, %v1293
    %v1311 = vadd.f32 %v1106, %v1310
    %v1312 = vtanh.pop %v1311
    %v1313 = vsub.f32 1.0, %v1309
    %v1314 = vmul.f32 %v1313, %v1312
    %v1315 = vmul.f32 %v1309, %v1100
    %v1316 = vadd.f32 %v1314, %v1315
    %s1317 = scalar_lea.vmem [#allocation3], 24
    %1318 = vst [vmem:[%s1317] sm:$0xff] %v1316
    %s1319 = scalar_lea.vmem [#allocation2], 96
    %v1320 = vld [vmem:[%s1319] sm:$0xff]
    %v1321 = vld [vmem:[%s1319 + $0x8] sm:$0xff]
    %v1322 = vld [vmem:[%s1319 + $0x10] sm:$0xff]
    %v1323 = vld [vmem:[#allocation7] sm:$0xff]
    %v1324 = vld [vmem:[#allocation7 + $0x8] sm:$0xff]
    %v1325 = vld [vmem:[#allocation7 + $0x10] sm:$0xff]
    %v1326 = vld [vmem:[#allocation7 + $0x18] sm:$0xff]
    %v1327 = vld [vmem:[#allocation7 + $0x20] sm:$0xff]
    %v1328 = vld [vmem:[#allocation7 + $0x28] sm:$0xff]
    %v1329 = vld [vmem:[#allocation7 + $0x30] sm:$0xff]
    %v1330 = vld [vmem:[#allocation7 + $0x38] sm:$0xff]
    %v1331 = vld [vmem:[#allocation7 + $0x40] sm:$0xff]
    %v1332 = vld [vmem:[#allocation7 + $0x48] sm:$0xff]
    %v1333 = vld [vmem:[#allocation7 + $0x50] sm:$0xff]
    %v1334 = vld [vmem:[#allocation7 + $0x58] sm:$0xff]
    %v1335 = vld [vmem:[#allocation7 + $0x60] sm:$0xff]
    %v1336 = vld [vmem:[#allocation7 + $0x68] sm:$0xff]
    %v1337 = vld [vmem:[#allocation7 + $0x70] sm:$0xff]
    %v1338 = vld [vmem:[#allocation7 + $0x78] sm:$0xff]
    %v1339 = vld [vmem:[#allocation7 + $0x80] sm:$0xff]
    %v1340 = vld [vmem:[#allocation7 + $0x88] sm:$0xff]
    %v1341 = vld [vmem:[#allocation7 + $0x90] sm:$0xff]
    %v1342 = vld [vmem:[#allocation7 + $0x98] sm:$0xff]
    %v1343 = vld [vmem:[#allocation7 + $0xa0] sm:$0xff]
    %v1344 = vld [vmem:[#allocation7 + $0xa8] sm:$0xff]
    %v1345 = vld [vmem:[#allocation7 + $0xb0] sm:$0xff]
    %v1346 = vld [vmem:[#allocation7 + $0xb8] sm:$0xff]
    %v1347 = vld [vmem:[#allocation7 + $0xc0] sm:$0xff]
    %v1348 = vld [vmem:[#allocation7 + $0xc8] sm:$0xff]
    %v1349 = vld [vmem:[#allocation7 + $0xd0] sm:$0xff]
    %v1350 = vld [vmem:[#allocation7 + $0xd8] sm:$0xff]
    %v1351 = vld [vmem:[#allocation7 + $0xe0] sm:$0xff]
    %v1352 = vld [vmem:[#allocation7 + $0xe8] sm:$0xff]
    %v1353 = vld [vmem:[#allocation7 + $0xf0] sm:$0xff]
    %v1354 = vld [vmem:[#allocation7 + $0xf8] sm:$0xff]
    %v1355 = vld [vmem:[#allocation7 + $0x100] sm:$0xff]
    %v1356 = vld [vmem:[#allocation7 + $0x108] sm:$0xff]
    %v1357 = vld [vmem:[#allocation7 + $0x110] sm:$0xff]
    %v1358 = vld [vmem:[#allocation7 + $0x118] sm:$0xff]
    %v1359 = vld [vmem:[#allocation7 + $0x120] sm:$0xff]
    %v1360 = vld [vmem:[#allocation7 + $0x128] sm:$0xff]
    %v1361 = vld [vmem:[#allocation7 + $0x130] sm:$0xff]
    %v1362 = vld [vmem:[#allocation7 + $0x138] sm:$0xff]
    %v1363 = vld [vmem:[#allocation7 + $0x140] sm:$0xff]
    %v1364 = vld [vmem:[#allocation7 + $0x148] sm:$0xff]
    %v1365 = vld [vmem:[#allocation7 + $0x150] sm:$0xff]
    %v1366 = vld [vmem:[#allocation7 + $0x158] sm:$0xff]
    %v1367 = vld [vmem:[#allocation7 + $0x160] sm:$0xff]
    %v1368 = vld [vmem:[#allocation7 + $0x168] sm:$0xff]
    %v1369 = vld [vmem:[#allocation7 + $0x170] sm:$0xff]
    %v1370 = vld [vmem:[#allocation7 + $0x178] sm:$0xff]
    %1371 = vmatprep.subr.mxu0 %v1324
    %1372 = vmatpush1.msra.mxu0 %v1323
    %1373 = vmatprep.subr.mxu0 %v1327
    %1374 = vmatpush1.msra.mxu0 %v1326
    %1375 = vmatprep.subr.mxu0 %v1330
    %1376 = vmatpush1.msra.mxu0 %v1329
    %1377 = vmatprep.subr.mxu0 %v1333
    %1378 = vmatpush1.msra.mxu0 %v1332
    %1379 = vmatprep.subr.mxu0 %v1336
    %1380 = vmatpush1.msra.mxu0 %v1335
    %1381 = vmatprep.subr.mxu0 %v1339
    %1382 = vmatpush1.msra.mxu0 %v1338
    %1383 = vmatprep.subr.mxu0 %v1342
    %1384 = vmatpush1.msra.mxu0 %v1341
    %1385 = vmatprep.subr.mxu0 %v1345
    %1386 = vmatpush1.msra.mxu0 %v1344
    %1387 = vmatprep.subr.mxu0 %v1348
    %1388 = vmatpush1.msra.mxu0 %v1347
    %1389 = vmatprep.subr.mxu0 %v1351
    %1390 = vmatpush1.msra.mxu0 %v1350
    %1391 = vmatprep.subr.mxu0 %v1354
    %1392 = vmatpush1.msra.mxu0 %v1353
    %1393 = vmatprep.subr.mxu0 %v1357
    %1394 = vmatpush1.msra.mxu0 %v1356
    %1395 = vmatprep.subr.mxu0 %v1360
    %1396 = vmatpush1.msra.mxu0 %v1359
    %1397 = vmatprep.subr.mxu0 %v1363
    %1398 = vmatpush1.msra.mxu0 %v1362
    %1399 = vmatprep.subr.mxu0 %v1366
    %1400 = vmatpush1.msra.mxu0 %v1365
    %1401 = vmatprep.subr.mxu0 %v1369
    %1402 = vmatpush1.msra.mxu0 %v1368
    %1403 = vmatprep.subr.mxu0 0.0
    %1404 = vmatpush1.msra.mxu0 0.0
    %1405 = vmatprep.subr.mxu0 0.0
    %1406 = vmatpush1.msra.mxu0 0.0
    %1407 = vmatprep.subr.mxu0 0.0
    %1408 = vmatpush1.msra.mxu0 0.0
    %1409 = vmatprep.subr.mxu0 0.0
    %1410 = vmatpush1.msra.mxu0 0.0
    %1411 = vmatprep.subr.mxu0 0.0
    %1412 = vmatpush1.msra.mxu0 0.0
    %1413 = vmatprep.subr.mxu0 0.0
    %1414 = vmatpush1.msra.mxu0 0.0
    %1415 = vmatprep.subr.mxu0 0.0
    %1416 = vmatpush1.msra.mxu0 0.0
    %1417 = vmatprep.subr.mxu0 0.0
    %1418 = vmatpush1.msra.mxu0 0.0
    %1419 = vmatprep.subr.mxu0 0.0
    %1420 = vmatpush1.msra.mxu0 0.0
    %1421 = vmatprep.subr.mxu0 0.0
    %1422 = vmatpush1.msra.mxu0 0.0
    %1423 = vmatprep.subr.mxu0 0.0
    %1424 = vmatpush1.msra.mxu0 0.0
    %1425 = vmatprep.subr.mxu0 0.0
    %1426 = vmatpush1.msra.mxu0 0.0
    %1427 = vmatprep.subr.mxu0 0.0
    %1428 = vmatpush1.msra.mxu0 0.0
    %1429 = vmatprep.subr.mxu0 0.0
    %1430 = vmatpush1.msra.mxu0 0.0
    %1431 = vmatprep.subr.mxu0 0.0
    %1432 = vmatpush1.msra.mxu0 0.0
    %1433 = vmatprep.subr.mxu0 0.0
    %1434 = vmatpush1.msra.mxu0 0.0
    %1435 = vmatprep.mubr.f32.mxu0 0.0
    %1436 = vmatmul.mubr.f32.gmra.mrb[0].mxu0 %v1316
    %v1437 = vpop.f32.mrb[0].mxu0
    %v1438 = vadd.f32 %v496, %v1437
    %v1439 = vpop.f32.mrb[0].mxu0
    %v1440 = vadd.f32 %v500, %v1439
    %1441 = vdwg.mxu0
    %1442 = vmatprep.subr.mxu0 0.0
    %1443 = vmatpush1.msra.mxu0 %v1325
    %1444 = vmatprep.subr.mxu0 0.0
    %1445 = vmatpush1.msra.mxu0 %v1328
    %1446 = vmatprep.subr.mxu0 0.0
    %1447 = vmatpush1.msra.mxu0 %v1331
    %1448 = vmatprep.subr.mxu0 0.0
    %1449 = vmatpush1.msra.mxu0 %v1334
    %1450 = vmatprep.subr.mxu0 0.0
    %1451 = vmatpush1.msra.mxu0 %v1337
    %1452 = vmatprep.subr.mxu0 0.0
    %1453 = vmatpush1.msra.mxu0 %v1340
    %1454 = vmatprep.subr.mxu0 0.0
    %1455 = vmatpush1.msra.mxu0 %v1343
    %1456 = vmatprep.subr.mxu0 0.0
    %1457 = vmatpush1.msra.mxu0 %v1346
    %1458 = vmatprep.subr.mxu0 0.0
    %1459 = vmatpush1.msra.mxu0 %v1349
    %1460 = vmatprep.subr.mxu0 0.0
    %1461 = vmatpush1.msra.mxu0 %v1352
    %1462 = vmatprep.subr.mxu0 0.0
    %1463 = vmatpush1.msra.mxu0 %v1355
    %1464 = vmatprep.subr.mxu0 0.0
    %1465 = vmatpush1.msra.mxu0 %v1358
    %1466 = vmatprep.subr.mxu0 0.0
    %1467 = vmatpush1.msra.mxu0 %v1361
    %1468 = vmatprep.subr.mxu0 0.0
    %1469 = vmatpush1.msra.mxu0 %v1364
    %1470 = vmatprep.subr.mxu0 0.0
    %1471 = vmatpush1.msra.mxu0 %v1367
    %1472 = vmatprep.subr.mxu0 0.0
    %1473 = vmatpush1.msra.mxu0 %v1370
    %1474 = vmatprep.subr.mxu0 0.0
    %1475 = vmatpush1.msra.mxu0 0.0
    %1476 = vmatprep.subr.mxu0 0.0
    %1477 = vmatpush1.msra.mxu0 0.0
    %1478 = vmatprep.subr.mxu0 0.0
    %1479 = vmatpush1.msra.mxu0 0.0
    %1480 = vmatprep.subr.mxu0 0.0
    %1481 = vmatpush1.msra.mxu0 0.0
    %1482 = vmatprep.subr.mxu0 0.0
    %1483 = vmatpush1.msra.mxu0 0.0
    %1484 = vmatprep.subr.mxu0 0.0
    %1485 = vmatpush1.msra.mxu0 0.0
    %1486 = vmatprep.subr.mxu0 0.0
    %1487 = vmatpush1.msra.mxu0 0.0
    %1488 = vmatprep.subr.mxu0 0.0
    %1489 = vmatpush1.msra.mxu0 0.0
    %1490 = vmatprep.subr.mxu0 0.0
    %1491 = vmatpush1.msra.mxu0 0.0
    %1492 = vmatprep.subr.mxu0 0.0
    %1493 = vmatpush1.msra.mxu0 0.0
    %1494 = vmatprep.subr.mxu0 0.0
    %1495 = vmatpush1.msra.mxu0 0.0
    %1496 = vmatprep.subr.mxu0 0.0
    %1497 = vmatpush1.msra.mxu0 0.0
    %1498 = vmatprep.subr.mxu0 0.0
    %1499 = vmatpush1.msra.mxu0 0.0
    %1500 = vmatprep.subr.mxu0 0.0
    %1501 = vmatpush1.msra.mxu0 0.0
    %1502 = vmatprep.subr.mxu0 0.0
    %1503 = vmatpush1.msra.mxu0 0.0
    %1504 = vmatprep.subr.mxu0 0.0
    %1505 = vmatpush1.msra.mxu0 0.0
    %1506 = vmatprep.mubr.f32.mxu0 0.0
    %1507 = vmatmul.mubr.f32.gmra.mrb[0].mxu0 %v1316
    %v1508 = vpop.f32.mrb[0].mxu0
    %v1509 = vadd.f32 %v504, %v1508
    %v1510 = vpop.f32.mrb[0].mxu0
    %1511 = vdwg.mxu0
    %v1512 = vadd.f32 %v1320, %v1438
    %v1513 = vxor.u32 %v1512, 2147483648
    %v1514 = vmul.f32 %v1513, 1.442695
    %v1515 = vpow.pop %v1514
    %v1516 = vadd.f32 %v1515, 1.0
    %v1517 = vrcp.pop %v1516
    %v1518 = vmul.f32 1.0, %v1517
    %v1519 = vadd.f32 %v1321, %v1440
    %v1520 = vxor.u32 %v1519, 2147483648
    %v1521 = vmul.f32 %v1520, 1.442695
    %v1522 = vpow.pop %v1521
    %v1523 = vadd.f32 %v1522, 1.0
    %v1524 = vrcp.pop %v1523
    %v1525 = vmul.f32 1.0, %v1524
    %v1526 = vmul.f32 %v1518, %v1509
    %v1527 = vadd.f32 %v1322, %v1526
    %v1528 = vtanh.pop %v1527
    %v1529 = vsub.f32 1.0, %v1525
    %v1530 = vmul.f32 %v1529, %v1528
    %v1531 = vmul.f32 %v1525, %v1316
    %v1532 = vadd.f32 %v1530, %v1531
    %s1533 = scalar_lea.vmem [#allocation3], 32
    %1534 = vst [vmem:[%s1533] sm:$0xff] %v1532
    %s1535 = scalar_lea.vmem [#allocation2], 120
    %v1536 = vld [vmem:[%s1535] sm:$0xff]
    %v1537 = vld [vmem:[%s1535 + $0x8] sm:$0xff]
    %v1538 = vld [vmem:[%s1535 + $0x10] sm:$0xff]
    %v1539 = vld [vmem:[#allocation7] sm:$0xff]
    %v1540 = vld [vmem:[#allocation7 + $0x8] sm:$0xff]
    %v1541 = vld [vmem:[#allocation7 + $0x10] sm:$0xff]
    %v1542 = vld [vmem:[#allocation7 + $0x18] sm:$0xff]
    %v1543 = vld [vmem:[#allocation7 + $0x20] sm:$0xff]
    %v1544 = vld [vmem:[#allocation7 + $0x28] sm:$0xff]
    %v1545 = vld [vmem:[#allocation7 + $0x30] sm:$0xff]
    %v1546 = vld [vmem:[#allocation7 + $0x38] sm:$0xff]
    %v1547 = vld [vmem:[#allocation7 + $0x40] sm:$0xff]
    %v1548 = vld [vmem:[#allocation7 + $0x48] sm:$0xff]
    %v1549 = vld [vmem:[#allocation7 + $0x50] sm:$0xff]
    %v1550 = vld [vmem:[#allocation7 + $0x58] sm:$0xff]
    %v1551 = vld [vmem:[#allocation7 + $0x60] sm:$0xff]
    %v1552 = vld [vmem:[#allocation7 + $0x68] sm:$0xff]
    %v1553 = vld [vmem:[#allocation7 + $0x70] sm:$0xff]
    %v1554 = vld [vmem:[#allocation7 + $0x78] sm:$0xff]
    %v1555 = vld [vmem:[#allocation7 + $0x80] sm:$0xff]
    %v1556 = vld [vmem:[#allocation7 + $0x88] sm:$0xff]
    %v1557 = vld [vmem:[#allocation7 + $0x90] sm:$0xff]
    %v1558 = vld [vmem:[#allocation7 + $0x98] sm:$0xff]
    %v1559 = vld [vmem:[#allocation7 + $0xa0] sm:$0xff]
    %v1560 = vld [vmem:[#allocation7 + $0xa8] sm:$0xff]
    %v1561 = vld [vmem:[#allocation7 + $0xb0] sm:$0xff]
    %v1562 = vld [vmem:[#allocation7 + $0xb8] sm:$0xff]
    %v1563 = vld [vmem:[#allocation7 + $0xc0] sm:$0xff]
    %v1564 = vld [vmem:[#allocation7 + $0xc8] sm:$0xff]
    %v1565 = vld [vmem:[#allocation7 + $0xd0] sm:$0xff]
    %v1566 = vld [vmem:[#allocation7 + $0xd8] sm:$0xff]
    %v1567 = vld [vmem:[#allocation7 + $0xe0] sm:$0xff]
    %v1568 = vld [vmem:[#allocation7 + $0xe8] sm:$0xff]
    %v1569 = vld [vmem:[#allocation7 + $0xf0] sm:$0xff]
    %v1570 = vld [vmem:[#allocation7 + $0xf8] sm:$0xff]
    %v1571 = vld [vmem:[#allocation7 + $0x100] sm:$0xff]
    %v1572 = vld [vmem:[#allocation7 + $0x108] sm:$0xff]
    %v1573 = vld [vmem:[#allocation7 + $0x110] sm:$0xff]
    %v1574 = vld [vmem:[#allocation7 + $0x118] sm:$0xff]
    %v1575 = vld [vmem:[#allocation7 + $0x120] sm:$0xff]
    %v1576 = vld [vmem:[#allocation7 + $0x128] sm:$0xff]
    %v1577 = vld [vmem:[#allocation7 + $0x130] sm:$0xff]
    %v1578 = vld [vmem:[#allocation7 + $0x138] sm:$0xff]
    %v1579 = vld [vmem:[#allocation7 + $0x140] sm:$0xff]
    %v1580 = vld [vmem:[#allocation7 + $0x148] sm:$0xff]
    %v1581 = vld [vmem:[#allocation7 + $0x150] sm:$0xff]
    %v1582 = vld [vmem:[#allocation7 + $0x158] sm:$0xff]
    %v1583 = vld [vmem:[#allocation7 + $0x160] sm:$0xff]
    %v1584 = vld [vmem:[#allocation7 + $0x168] sm:$0xff]
    %v1585 = vld [vmem:[#allocation7 + $0x170] sm:$0xff]
    %v1586 = vld [vmem:[#allocation7 + $0x178] sm:$0xff]
    %1587 = vmatprep.subr.mxu0 %v1540
    %1588 = vmatpush1.msra.mxu0 %v1539
    %1589 = vmatprep.subr.mxu0 %v1543
    %1590 = vmatpush1.msra.mxu0 %v1542
    %1591 = vmatprep.subr.mxu0 %v1546
    %1592 = vmatpush1.msra.mxu0 %v1545
    %1593 = vmatprep.subr.mxu0 %v1549
    %1594 = vmatpush1.msra.mxu0 %v1548
    %1595 = vmatprep.subr.mxu0 %v1552
    %1596 = vmatpush1.msra.mxu0 %v1551
    %1597 = vmatprep.subr.mxu0 %v1555
    %1598 = vmatpush1.msra.mxu0 %v1554
    %1599 = vmatprep.subr.mxu0 %v1558
    %1600 = vmatpush1.msra.mxu0 %v1557
    %1601 = vmatprep.subr.mxu0 %v1561
    %1602 = vmatpush1.msra.mxu0 %v1560
    %1603 = vmatprep.subr.mxu0 %v1564
    %1604 = vmatpush1.msra.mxu0 %v1563
    %1605 = vmatprep.subr.mxu0 %v1567
    %1606 = vmatpush1.msra.mxu0 %v1566
    %1607 = vmatprep.subr.mxu0 %v1570
    %1608 = vmatpush1.msra.mxu0 %v1569
    %1609 = vmatprep.subr.mxu0 %v1573
    %1610 = vmatpush1.msra.mxu0 %v1572
    %1611 = vmatprep.subr.mxu0 %v1576
    %1612 = vmatpush1.msra.mxu0 %v1575
    %1613 = vmatprep.subr.mxu0 %v1579
    %1614 = vmatpush1.msra.mxu0 %v1578
    %1615 = vmatprep.subr.mxu0 %v1582
    %1616 = vmatpush1.msra.mxu0 %v1581
    %1617 = vmatprep.subr.mxu0 %v1585
    %1618 = vmatpush1.msra.mxu0 %v1584
    %1619 = vmatprep.subr.mxu0 0.0
    %1620 = vmatpush1.msra.mxu0 0.0
    %1621 = vmatprep.subr.mxu0 0.0
    %1622 = vmatpush1.msra.mxu0 0.0
    %1623 = vmatprep.subr.mxu0 0.0
    %1624 = vmatpush1.msra.mxu0 0.0
    %1625 = vmatprep.subr.mxu0 0.0
    %1626 = vmatpush1.msra.mxu0 0.0
    %1627 = vmatprep.subr.mxu0 0.0
    %1628 = vmatpush1.msra.mxu0 0.0
    %1629 = vmatprep.subr.mxu0 0.0
    %1630 = vmatpush1.msra.mxu0 0.0
    %1631 = vmatprep.subr.mxu0 0.0
    %1632 = vmatpush1.msra.mxu0 0.0
    %1633 = vmatprep.subr.mxu0 0.0
    %1634 = vmatpush1.msra.mxu0 0.0
    %1635 = vmatprep.subr.mxu0 0.0
    %1636 = vmatpush1.msra.mxu0 0.0
    %1637 = vmatprep.subr.mxu0 0.0
    %1638 = vmatpush1.msra.mxu0 0.0
    %1639 = vmatprep.subr.mxu0 0.0
    %1640 = vmatpush1.msra.mxu0 0.0
    %1641 = vmatprep.subr.mxu0 0.0
    %1642 = vmatpush1.msra.mxu0 0.0
    %1643 = vmatprep.subr.mxu0 0.0
    %1644 = vmatpush1.msra.mxu0 0.0
    %1645 = vmatprep.subr.mxu0 0.0
    %1646 = vmatpush1.msra.mxu0 0.0
    %1647 = vmatprep.subr.mxu0 0.0
    %1648 = vmatpush1.msra.mxu0 0.0
    %1649 = vmatprep.subr.mxu0 0.0
    %1650 = vmatpush1.msra.mxu0 0.0
    %1651 = vmatprep.mubr.f32.mxu0 0.0
    %1652 = vmatmul.mubr.f32.gmra.mrb[0].mxu0 %v1532
    %v1653 = vpop.f32.mrb[0].mxu0
    %v1654 = vadd.f32 %v496, %v1653
    %v1655 = vpop.f32.mrb[0].mxu0
    %v1656 = vadd.f32 %v500, %v1655
    %1657 = vdwg.mxu0
    %1658 = vmatprep.subr.mxu0 0.0
    %1659 = vmatpush1.msra.mxu0 %v1541
    %1660 = vmatprep.subr.mxu0 0.0
    %1661 = vmatpush1.msra.mxu0 %v1544
    %1662 = vmatprep.subr.mxu0 0.0
    %1663 = vmatpush1.msra.mxu0 %v1547
    %1664 = vmatprep.subr.mxu0 0.0
    %1665 = vmatpush1.msra.mxu0 %v1550
    %1666 = vmatprep.subr.mxu0 0.0
    %1667 = vmatpush1.msra.mxu0 %v1553
    %1668 = vmatprep.subr.mxu0 0.0
    %1669 = vmatpush1.msra.mxu0 %v1556
    %1670 = vmatprep.subr.mxu0 0.0
    %1671 = vmatpush1.msra.mxu0 %v1559
    %1672 = vmatprep.subr.mxu0 0.0
    %1673 = vmatpush1.msra.mxu0 %v1562
    %1674 = vmatprep.subr.mxu0 0.0
    %1675 = vmatpush1.msra.mxu0 %v1565
    %1676 = vmatprep.subr.mxu0 0.0
    %1677 = vmatpush1.msra.mxu0 %v1568
    %1678 = vmatprep.subr.mxu0 0.0
    %1679 = vmatpush1.msra.mxu0 %v1571
    %1680 = vmatprep.subr.mxu0 0.0
    %1681 = vmatpush1.msra.mxu0 %v1574
    %1682 = vmatprep.subr.mxu0 0.0
    %1683 = vmatpush1.msra.mxu0 %v1577
    %1684 = vmatprep.subr.mxu0 0.0
    %1685 = vmatpush1.msra.mxu0 %v1580
    %1686 = vmatprep.subr.mxu0 0.0
    %1687 = vmatpush1.msra.mxu0 %v1583
    %1688 = vmatprep.subr.mxu0 0.0
    %1689 = vmatpush1.msra.mxu0 %v1586
    %1690 = vmatprep.subr.mxu0 0.0
    %1691 = vmatpush1.msra.mxu0 0.0
    %1692 = vmatprep.subr.mxu0 0.0
    %1693 = vmatpush1.msra.mxu0 0.0
    %1694 = vmatprep.subr.mxu0 0.0
    %1695 = vmatpush1.msra.mxu0 0.0
    %1696 = vmatprep.subr.mxu0 0.0
    %1697 = vmatpush1.msra.mxu0 0.0
    %1698 = vmatprep.subr.mxu0 0.0
    %1699 = vmatpush1.msra.mxu0 0.0
    %1700 = vmatprep.subr.mxu0 0.0
    %1701 = vmatpush1.msra.mxu0 0.0
    %1702 = vmatprep.subr.mxu0 0.0
    %1703 = vmatpush1.msra.mxu0 0.0
    %1704 = vmatprep.subr.mxu0 0.0
    %1705 = vmatpush1.msra.mxu0 0.0
    %1706 = vmatprep.subr.mxu0 0.0
    %1707 = vmatpush1.msra.mxu0 0.0
    %1708 = vmatprep.subr.mxu0 0.0
    %1709 = vmatpush1.msra.mxu0 0.0
    %1710 = vmatprep.subr.mxu0 0.0
    %1711 = vmatpush1.msra.mxu0 0.0
    %1712 = vmatprep.subr.mxu0 0.0
    %1713 = vmatpush1.msra.mxu0 0.0
    %1714 = vmatprep.subr.mxu0 0.0
    %1715 = vmatpush1.msra.mxu0 0.0
    %1716 = vmatprep.subr.mxu0 0.0
    %1717 = vmatpush1.msra.mxu0 0.0
    %1718 = vmatprep.subr.mxu0 0.0
    %1719 = vmatpush1.msra.mxu0 0.0
    %1720 = vmatprep.subr.mxu0 0.0
    %1721 = vmatpush1.msra.mxu0 0.0
    %1722 = vmatprep.mubr.f32.mxu0 0.0
    %1723 = vmatmul.mubr.f32.gmra.mrb[0].mxu0 %v1532
    %v1724 = vpop.f32.mrb[0].mxu0
    %v1725 = vadd.f32 %v504, %v1724
    %v1726 = vpop.f32.mrb[0].mxu0
    %1727 = vdwg.mxu0
    %v1728 = vadd.f32 %v1536, %v1654
    %v1729 = vxor.u32 %v1728, 2147483648
    %v1730 = vmul.f32 %v1729, 1.442695
    %v1731 = vpow.pop %v1730
    %v1732 = vadd.f32 %v1731, 1.0
    %v1733 = vrcp.pop %v1732
    %v1734 = vmul.f32 1.0, %v1733
    %v1735 = vadd.f32 %v1537, %v1656
    %v1736 = vxor.u32 %v1735, 2147483648
    %v1737 = vmul.f32 %v1736, 1.442695
    %v1738 = vpow.pop %v1737
    %v1739 = vadd.f32 %v1738, 1.0
    %v1740 = vrcp.pop %v1739
    %v1741 = vmul.f32 1.0, %v1740
    %v1742 = vmul.f32 %v1734, %v1725
    %v1743 = vadd.f32 %v1538, %v1742
    %v1744 = vtanh.pop %v1743
    %v1745 = vsub.f32 1.0, %v1741
    %v1746 = vmul.f32 %v1745, %v1744
    %v1747 = vmul.f32 %v1741, %v1532
    %v1748 = vadd.f32 %v1746, %v1747
    %s1749 = scalar_lea.vmem [#allocation3], 40
    %1750 = vst [vmem:[%s1749] sm:$0xff] %v1748
    %s1751 = scalar_lea.vmem [#allocation2], 144
    %v1752 = vld [vmem:[%s1751] sm:$0xff]
    %v1753 = vld [vmem:[%s1751 + $0x8] sm:$0xff]
    %v1754 = vld [vmem:[%s1751 + $0x10] sm:$0xff]
    %v1755 = vld [vmem:[#allocation7] sm:$0xff]
    %v1756 = vld [vmem:[#allocation7 + $0x8] sm:$0xff]
    %v1757 = vld [vmem:[#allocation7 + $0x10] sm:$0xff]
    %v1758 = vld [vmem:[#allocation7 + $0x18] sm:$0xff]
    %v1759 = vld [vmem:[#allocation7 + $0x20] sm:$0xff]
    %v1760 = vld [vmem:[#allocation7 + $0x28] sm:$0xff]
    %v1761 = vld [vmem:[#allocation7 + $0x30] sm:$0xff]
    %v1762 = vld [vmem:[#allocation7 + $0x38] sm:$0xff]
    %v1763 = vld [vmem:[#allocation7 + $0x40] sm:$0xff]
    %v1764 = vld [vmem:[#allocation7 + $0x48] sm:$0xff]
    %v1765 = vld [vmem:[#allocation7 + $0x50] sm:$0xff]
    %v1766 = vld [vmem:[#allocation7 + $0x58] sm:$0xff]
    %v1767 = vld [vmem:[#allocation7 + $0x60] sm:$0xff]
    %v1768 = vld [vmem:[#allocation7 + $0x68] sm:$0xff]
    %v1769 = vld [vmem:[#allocation7 + $0x70] sm:$0xff]
    %v1770 = vld [vmem:[#allocation7 + $0x78] sm:$0xff]
    %v1771 = vld [vmem:[#allocation7 + $0x80] sm:$0xff]
    %v1772 = vld [vmem:[#allocation7 + $0x88] sm:$0xff]
    %v1773 = vld [vmem:[#allocation7 + $0x90] sm:$0xff]
    %v1774 = vld [vmem:[#allocation7 + $0x98] sm:$0xff]
    %v1775 = vld [vmem:[#allocation7 + $0xa0] sm:$0xff]
    %v1776 = vld [vmem:[#allocation7 + $0xa8] sm:$0xff]
    %v1777 = vld [vmem:[#allocation7 + $0xb0] sm:$0xff]
    %v1778 = vld [vmem:[#allocation7 + $0xb8] sm:$0xff]
    %v1779 = vld [vmem:[#allocation7 + $0xc0] sm:$0xff]
    %v1780 = vld [vmem:[#allocation7 + $0xc8] sm:$0xff]
    %v1781 = vld [vmem:[#allocation7 + $0xd0] sm:$0xff]
    %v1782 = vld [vmem:[#allocation7 + $0xd8] sm:$0xff]
    %v1783 = vld [vmem:[#allocation7 + $0xe0] sm:$0xff]
    %v1784 = vld [vmem:[#allocation7 + $0xe8] sm:$0xff]
    %v1785 = vld [vmem:[#allocation7 + $0xf0] sm:$0xff]
    %v1786 = vld [vmem:[#allocation7 + $0xf8] sm:$0xff]
    %v1787 = vld [vmem:[#allocation7 + $0x100] sm:$0xff]
    %v1788 = vld [vmem:[#allocation7 + $0x108] sm:$0xff]
    %v1789 = vld [vmem:[#allocation7 + $0x110] sm:$0xff]
    %v1790 = vld [vmem:[#allocation7 + $0x118] sm:$0xff]
    %v1791 = vld [vmem:[#allocation7 + $0x120] sm:$0xff]
    %v1792 = vld [vmem:[#allocation7 + $0x128] sm:$0xff]
    %v1793 = vld [vmem:[#allocation7 + $0x130] sm:$0xff]
    %v1794 = vld [vmem:[#allocation7 + $0x138] sm:$0xff]
    %v1795 = vld [vmem:[#allocation7 + $0x140] sm:$0xff]
    %v1796 = vld [vmem:[#allocation7 + $0x148] sm:$0xff]
    %v1797 = vld [vmem:[#allocation7 + $0x150] sm:$0xff]
    %v1798 = vld [vmem:[#allocation7 + $0x158] sm:$0xff]
    %v1799 = vld [vmem:[#allocation7 + $0x160] sm:$0xff]
    %v1800 = vld [vmem:[#allocation7 + $0x168] sm:$0xff]
    %v1801 = vld [vmem:[#allocation7 + $0x170] sm:$0xff]
    %v1802 = vld [vmem:[#allocation7 + $0x178] sm:$0xff]
    %1803 = vmatprep.subr.mxu0 %v1756
    %1804 = vmatpush1.msra.mxu0 %v1755
    %1805 = vmatprep.subr.mxu0 %v1759
    %1806 = vmatpush1.msra.mxu0 %v1758
    %1807 = vmatprep.subr.mxu0 %v1762
    %1808 = vmatpush1.msra.mxu0 %v1761
    %1809 = vmatprep.subr.mxu0 %v1765
    %1810 = vmatpush1.msra.mxu0 %v1764
    %1811 = vmatprep.subr.mxu0 %v1768
    %1812 = vmatpush1.msra.mxu0 %v1767
    %1813 = vmatprep.subr.mxu0 %v1771
    %1814 = vmatpush1.msra.mxu0 %v1770
    %1815 = vmatprep.subr.mxu0 %v1774
    %1816 = vmatpush1.msra.mxu0 %v1773
    %1817 = vmatprep.subr.mxu0 %v1777
    %1818 = vmatpush1.msra.mxu0 %v1776
    %1819 = vmatprep.subr.mxu0 %v1780
    %1820 = vmatpush1.msra.mxu0 %v1779
    %1821 = vmatprep.subr.mxu0 %v1783
    %1822 = vmatpush1.msra.mxu0 %v1782
    %1823 = vmatprep.subr.mxu0 %v1786
    %1824 = vmatpush1.msra.mxu0 %v1785
    %1825 = vmatprep.subr.mxu0 %v1789
    %1826 = vmatpush1.msra.mxu0 %v1788
    %1827 = vmatprep.subr.mxu0 %v1792
    %1828 = vmatpush1.msra.mxu0 %v1791
    %1829 = vmatprep.subr.mxu0 %v1795
    %1830 = vmatpush1.msra.mxu0 %v1794
    %1831 = vmatprep.subr.mxu0 %v1798
    %1832 = vmatpush1.msra.mxu0 %v1797
    %1833 = vmatprep.subr.mxu0 %v1801
    %1834 = vmatpush1.msra.mxu0 %v1800
    %1835 = vmatprep.subr.mxu0 0.0
    %1836 = vmatpush1.msra.mxu0 0.0
    %1837 = vmatprep.subr.mxu0 0.0
    %1838 = vmatpush1.msra.mxu0 0.0
    %1839 = vmatprep.subr.mxu0 0.0
    %1840 = vmatpush1.msra.mxu0 0.0
    %1841 = vmatprep.subr.mxu0 0.0
    %1842 = vmatpush1.msra.mxu0 0.0
    %1843 = vmatprep.subr.mxu0 0.0
    %1844 = vmatpush1.msra.mxu0 0.0
    %1845 = vmatprep.subr.mxu0 0.0
    %1846 = vmatpush1.msra.mxu0 0.0
    %1847 = vmatprep.subr.mxu0 0.0
    %1848 = vmatpush1.msra.mxu0 0.0
    %1849 = vmatprep.subr.mxu0 0.0
    %1850 = vmatpush1.msra.mxu0 0.0
    %1851 = vmatprep.subr.mxu0 0.0
    %1852 = vmatpush1.msra.mxu0 0.0
    %1853 = vmatprep.subr.mxu0 0.0
    %1854 = vmatpush1.msra.mxu0 0.0
    %1855 = vmatprep.subr.mxu0 0.0
    %1856 = vmatpush1.msra.mxu0 0.0
    %1857 = vmatprep.subr.mxu0 0.0
    %1858 = vmatpush1.msra.mxu0 0.0
    %1859 = vmatprep.subr.mxu0 0.0
    %1860 = vmatpush1.msra.mxu0 0.0
    %1861 = vmatprep.subr.mxu0 0.0
    %1862 = vmatpush1.msra.mxu0 0.0
    %1863 = vmatprep.subr.mxu0 0.0
    %1864 = vmatpush1.msra.mxu0 0.0
    %1865 = vmatprep.subr.mxu0 0.0
    %1866 = vmatpush1.msra.mxu0 0.0
    %1867 = vmatprep.mubr.f32.mxu0 0.0
    %1868 = vmatmul.mubr.f32.gmra.mrb[0].mxu0 %v1748
    %v1869 = vpop.f32.mrb[0].mxu0
    %v1870 = vadd.f32 %v496, %v1869
    %v1871 = vpop.f32.mrb[0].mxu0
    %v1872 = vadd.f32 %v500, %v1871
    %1873 = vdwg.mxu0
    %1874 = vmatprep.subr.mxu0 0.0
    %1875 = vmatpush1.msra.mxu0 %v1757
    %1876 = vmatprep.subr.mxu0 0.0
    %1877 = vmatpush1.msra.mxu0 %v1760
    %1878 = vmatprep.subr.mxu0 0.0
    %1879 = vmatpush1.msra.mxu0 %v1763
    %1880 = vmatprep.subr.mxu0 0.0
    %1881 = vmatpush1.msra.mxu0 %v1766
    %1882 = vmatprep.subr.mxu0 0.0
    %1883 = vmatpush1.msra.mxu0 %v1769
    %1884 = vmatprep.subr.mxu0 0.0
    %1885 = vmatpush1.msra.mxu0 %v1772
    %1886 = vmatprep.subr.mxu0 0.0
    %1887 = vmatpush1.msra.mxu0 %v1775
    %1888 = vmatprep.subr.mxu0 0.0
    %1889 = vmatpush1.msra.mxu0 %v1778
    %1890 = vmatprep.subr.mxu0 0.0
    %1891 = vmatpush1.msra.mxu0 %v1781
    %1892 = vmatprep.subr.mxu0 0.0
    %1893 = vmatpush1.msra.mxu0 %v1784
    %1894 = vmatprep.subr.mxu0 0.0
    %1895 = vmatpush1.msra.mxu0 %v1787
    %1896 = vmatprep.subr.mxu0 0.0
    %1897 = vmatpush1.msra.mxu0 %v1790
    %1898 = vmatprep.subr.mxu0 0.0
    %1899 = vmatpush1.msra.mxu0 %v1793
    %1900 = vmatprep.subr.mxu0 0.0
    %1901 = vmatpush1.msra.mxu0 %v1796
    %1902 = vmatprep.subr.mxu0 0.0
    %1903 = vmatpush1.msra.mxu0 %v1799
    %1904 = vmatprep.subr.mxu0 0.0
    %1905 = vmatpush1.msra.mxu0 %v1802
    %1906 = vmatprep.subr.mxu0 0.0
    %1907 = vmatpush1.msra.mxu0 0.0
    %1908 = vmatprep.subr.mxu0 0.0
    %1909 = vmatpush1.msra.mxu0 0.0
    %1910 = vmatprep.subr.mxu0 0.0
    %1911 = vmatpush1.msra.mxu0 0.0
    %1912 = vmatprep.subr.mxu0 0.0
    %1913 = vmatpush1.msra.mxu0 0.0
    %1914 = vmatprep.subr.mxu0 0.0
    %1915 = vmatpush1.msra.mxu0 0.0
    %1916 = vmatprep.subr.mxu0 0.0
    %1917 = vmatpush1.msra.mxu0 0.0
    %1918 = vmatprep.subr.mxu0 0.0
    %1919 = vmatpush1.msra.mxu0 0.0
    %1920 = vmatprep.subr.mxu0 0.0
    %1921 = vmatpush1.msra.mxu0 0.0
    %1922 = vmatprep.subr.mxu0 0.0
    %1923 = vmatpush1.msra.mxu0 0.0
    %1924 = vmatprep.subr.mxu0 0.0
    %1925 = vmatpush1.msra.mxu0 0.0
    %1926 = vmatprep.subr.mxu0 0.0
    %1927 = vmatpush1.msra.mxu0 0.0
    %1928 = vmatprep.subr.mxu0 0.0
    %1929 = vmatpush1.msra.mxu0 0.0
    %1930 = vmatprep.subr.mxu0 0.0
    %1931 = vmatpush1.msra.mxu0 0.0
    %1932 = vmatprep.subr.mxu0 0.0
    %1933 = vmatpush1.msra.mxu0 0.0
    %1934 = vmatprep.subr.mxu0 0.0
    %1935 = vmatpush1.msra.mxu0 0.0
    %1936 = vmatprep.subr.mxu0 0.0
    %1937 = vmatpush1.msra.mxu0 0.0
    %1938 = vmatprep.mubr.f32.mxu0 0.0
    %1939 = vmatmul.mubr.f32.gmra.mrb[0].mxu0 %v1748
    %v1940 = vpop.f32.mrb[0].mxu0
    %v1941 = vadd.f32 %v504, %v1940
    %v1942 = vpop.f32.mrb[0].mxu0
    %1943 = vdwg.mxu0
    %v1944 = vadd.f32 %v1752, %v1870
    %v1945 = vxor.u32 %v1944, 2147483648
    %v1946 = vmul.f32 %v1945, 1.442695
    %v1947 = vpow.pop %v1946
    %v1948 = vadd.f32 %v1947, 1.0
    %v1949 = vrcp.pop %v1948
    %v1950 = vmul.f32 1.0, %v1949
    %v1951 = vadd.f32 %v1753, %v1872
    %v1952 = vxor.u32 %v1951, 2147483648
    %v1953 = vmul.f32 %v1952, 1.442695
    %v1954 = vpow.pop %v1953
    %v1955 = vadd.f32 %v1954, 1.0
    %v1956 = vrcp.pop %v1955
    %v1957 = vmul.f32 1.0, %v1956
    %v1958 = vmul.f32 %v1950, %v1941
    %v1959 = vadd.f32 %v1754, %v1958
    %v1960 = vtanh.pop %v1959
    %v1961 = vsub.f32 1.0, %v1957
    %v1962 = vmul.f32 %v1961, %v1960
    %v1963 = vmul.f32 %v1957, %v1748
    %v1964 = vadd.f32 %v1962, %v1963
    %s1965 = scalar_lea.vmem [#allocation3], 48
    %1966 = vst [vmem:[%s1965] sm:$0xff] %v1964
    %s1967 = scalar_lea.vmem [#allocation2], 168
    %v1968 = vld [vmem:[%s1967] sm:$0xff]
    %v1969 = vld [vmem:[%s1967 + $0x8] sm:$0xff]
    %v1970 = vld [vmem:[%s1967 + $0x10] sm:$0xff]
    %v1971 = vld [vmem:[#allocation7] sm:$0xff]
    %v1972 = vld [vmem:[#allocation7 + $0x8] sm:$0xff]
    %v1973 = vld [vmem:[#allocation7 + $0x10] sm:$0xff]
    %v1974 = vld [vmem:[#allocation7 + $0x18] sm:$0xff]
    %v1975 = vld [vmem:[#allocation7 + $0x20] sm:$0xff]
    %v1976 = vld [vmem:[#allocation7 + $0x28] sm:$0xff]
    %v1977 = vld [vmem:[#allocation7 + $0x30] sm:$0xff]
    %v1978 = vld [vmem:[#allocation7 + $0x38] sm:$0xff]
    %v1979 = vld [vmem:[#allocation7 + $0x40] sm:$0xff]
    %v1980 = vld [vmem:[#allocation7 + $0x48] sm:$0xff]
    %v1981 = vld [vmem:[#allocation7 + $0x50] sm:$0xff]
    %v1982 = vld [vmem:[#allocation7 + $0x58] sm:$0xff]
    %v1983 = vld [vmem:[#allocation7 + $0x60] sm:$0xff]
    %v1984 = vld [vmem:[#allocation7 + $0x68] sm:$0xff]
    %v1985 = vld [vmem:[#allocation7 + $0x70] sm:$0xff]
    %v1986 = vld [vmem:[#allocation7 + $0x78] sm:$0xff]
    %v1987 = vld [vmem:[#allocation7 + $0x80] sm:$0xff]
    %v1988 = vld [vmem:[#allocation7 + $0x88] sm:$0xff]
    %v1989 = vld [vmem:[#allocation7 + $0x90] sm:$0xff]
    %v1990 = vld [vmem:[#allocation7 + $0x98] sm:$0xff]
    %v1991 = vld [vmem:[#allocation7 + $0xa0] sm:$0xff]
    %v1992 = vld [vmem:[#allocation7 + $0xa8] sm:$0xff]
    %v1993 = vld [vmem:[#allocation7 + $0xb0] sm:$0xff]
    %v1994 = vld [vmem:[#allocation7 + $0xb8] sm:$0xff]
    %v1995 = vld [vmem:[#allocation7 + $0xc0] sm:$0xff]
    %v1996 = vld [vmem:[#allocation7 + $0xc8] sm:$0xff]
    %v1997 = vld [vmem:[#allocation7 + $0xd0] sm:$0xff]
    %v1998 = vld [vmem:[#allocation7 + $0xd8] sm:$0xff]
    %v1999 = vld [vmem:[#allocation7 + $0xe0] sm:$0xff]
    %v2000 = vld [vmem:[#allocation7 + $0xe8] sm:$0xff]
    %v2001 = vld [vmem:[#allocation7 + $0xf0] sm:$0xff]
    %v2002 = vld [vmem:[#allocation7 + $0xf8] sm:$0xff]
    %v2003 = vld [vmem:[#allocation7 + $0x100] sm:$0xff]
    %v2004 = vld [vmem:[#allocation7 + $0x108] sm:$0xff]
    %v2005 = vld [vmem:[#allocation7 + $0x110] sm:$0xff]
    %v2006 = vld [vmem:[#allocation7 + $0x118] sm:$0xff]
    %v2007 = vld [vmem:[#allocation7 + $0x120] sm:$0xff]
    %v2008 = vld [vmem:[#allocation7 + $0x128] sm:$0xff]
    %v2009 = vld [vmem:[#allocation7 + $0x130] sm:$0xff]
    %v2010 = vld [vmem:[#allocation7 + $0x138] sm:$0xff]
    %v2011 = vld [vmem:[#allocation7 + $0x140] sm:$0xff]
    %v2012 = vld [vmem:[#allocation7 + $0x148] sm:$0xff]
    %v2013 = vld [vmem:[#allocation7 + $0x150] sm:$0xff]
    %v2014 = vld [vmem:[#allocation7 + $0x158] sm:$0xff]
    %v2015 = vld [vmem:[#allocation7 + $0x160] sm:$0xff]
    %v2016 = vld [vmem:[#allocation7 + $0x168] sm:$0xff]
    %v2017 = vld [vmem:[#allocation7 + $0x170] sm:$0xff]
    %v2018 = vld [vmem:[#allocation7 + $0x178] sm:$0xff]
    %2019 = vmatprep.subr.mxu0 %v1972
    %2020 = vmatpush1.msra.mxu0 %v1971
    %2021 = vmatprep.subr.mxu0 %v1975
    %2022 = vmatpush1.msra.mxu0 %v1974
    %2023 = vmatprep.subr.mxu0 %v1978
    %2024 = vmatpush1.msra.mxu0 %v1977
    %2025 = vmatprep.subr.mxu0 %v1981
    %2026 = vmatpush1.msra.mxu0 %v1980
    %2027 = vmatprep.subr.mxu0 %v1984
    %2028 = vmatpush1.msra.mxu0 %v1983
    %2029 = vmatprep.subr.mxu0 %v1987
    %2030 = vmatpush1.msra.mxu0 %v1986
    %2031 = vmatprep.subr.mxu0 %v1990
    %2032 = vmatpush1.msra.mxu0 %v1989
    %2033 = vmatprep.subr.mxu0 %v1993
    %2034 = vmatpush1.msra.mxu0 %v1992
    %2035 = vmatprep.subr.mxu0 %v1996
    %2036 = vmatpush1.msra.mxu0 %v1995
    %2037 = vmatprep.subr.mxu0 %v1999
    %2038 = vmatpush1.msra.mxu0 %v1998
    %2039 = vmatprep.subr.mxu0 %v2002
    %2040 = vmatpush1.msra.mxu0 %v2001
    %2041 = vmatprep.subr.mxu0 %v2005
    %2042 = vmatpush1.msra.mxu0 %v2004
    %2043 = vmatprep.subr.mxu0 %v2008
    %2044 = vmatpush1.msra.mxu0 %v2007
    %2045 = vmatprep.subr.mxu0 %v2011
    %2046 = vmatpush1.msra.mxu0 %v2010
    %2047 = vmatprep.subr.mxu0 %v2014
    %2048 = vmatpush1.msra.mxu0 %v2013
    %2049 = vmatprep.subr.mxu0 %v2017
    %2050 = vmatpush1.msra.mxu0 %v2016
    %2051 = vmatprep.subr.mxu0 0.0
    %2052 = vmatpush1.msra.mxu0 0.0
    %2053 = vmatprep.subr.mxu0 0.0
    %2054 = vmatpush1.msra.mxu0 0.0
    %2055 = vmatprep.subr.mxu0 0.0
    %2056 = vmatpush1.msra.mxu0 0.0
    %2057 = vmatprep.subr.mxu0 0.0
    %2058 = vmatpush1.msra.mxu0 0.0
    %2059 = vmatprep.subr.mxu0 0.0
    %2060 = vmatpush1.msra.mxu0 0.0
    %2061 = vmatprep.subr.mxu0 0.0
    %2062 = vmatpush1.msra.mxu0 0.0
    %2063 = vmatprep.subr.mxu0 0.0
    %2064 = vmatpush1.msra.mxu0 0.0
    %2065 = vmatprep.subr.mxu0 0.0
    %2066 = vmatpush1.msra.mxu0 0.0
    %2067 = vmatprep.subr.mxu0 0.0
    %2068 = vmatpush1.msra.mxu0 0.0
    %2069 = vmatprep.subr.mxu0 0.0
    %2070 = vmatpush1.msra.mxu0 0.0
    %2071 = vmatprep.subr.mxu0 0.0
    %2072 = vmatpush1.msra.mxu0 0.0
    %2073 = vmatprep.subr.mxu0 0.0
    %2074 = vmatpush1.msra.mxu0 0.0
    %2075 = vmatprep.subr.mxu0 0.0
    %2076 = vmatpush1.msra.mxu0 0.0
    %2077 = vmatprep.subr.mxu0 0.0
    %2078 = vmatpush1.msra.mxu0 0.0
    %2079 = vmatprep.subr.mxu0 0.0
    %2080 = vmatpush1.msra.mxu0 0.0
    %2081 = vmatprep.subr.mxu0 0.0
    %2082 = vmatpush1.msra.mxu0 0.0
    %2083 = vmatprep.mubr.f32.mxu0 0.0
    %2084 = vmatmul.mubr.f32.gmra.mrb[0].mxu0 %v1964
    %v2085 = vpop.f32.mrb[0].mxu0
    %v2086 = vadd.f32 %v496, %v2085
    %v2087 = vpop.f32.mrb[0].mxu0
    %v2088 = vadd.f32 %v500, %v2087
    %2089 = vdwg.mxu0
    %2090 = vmatprep.subr.mxu0 0.0
    %2091 = vmatpush1.msra.mxu0 %v1973
    %2092 = vmatprep.subr.mxu0 0.0
    %2093 = vmatpush1.msra.mxu0 %v1976
    %2094 = vmatprep.subr.mxu0 0.0
    %2095 = vmatpush1.msra.mxu0 %v1979
    %2096 = vmatprep.subr.mxu0 0.0
    %2097 = vmatpush1.msra.mxu0 %v1982
    %2098 = vmatprep.subr.mxu0 0.0
    %2099 = vmatpush1.msra.mxu0 %v1985
    %2100 = vmatprep.subr.mxu0 0.0
    %2101 = vmatpush1.msra.mxu0 %v1988
    %2102 = vmatprep.subr.mxu0 0.0
    %2103 = vmatpush1.msra.mxu0 %v1991
    %2104 = vmatprep.subr.mxu0 0.0
    %2105 = vmatpush1.msra.mxu0 %v1994
    %2106 = vmatprep.subr.mxu0 0.0
    %2107 = vmatpush1.msra.mxu0 %v1997
    %2108 = vmatprep.subr.mxu0 0.0
    %2109 = vmatpush1.msra.mxu0 %v2000
    %2110 = vmatprep.subr.mxu0 0.0
    %2111 = vmatpush1.msra.mxu0 %v2003
    %2112 = vmatprep.subr.mxu0 0.0
    %2113 = vmatpush1.msra.mxu0 %v2006
    %2114 = vmatprep.subr.mxu0 0.0
    %2115 = vmatpush1.msra.mxu0 %v2009
    %2116 = vmatprep.subr.mxu0 0.0
    %2117 = vmatpush1.msra.mxu0 %v2012
    %2118 = vmatprep.subr.mxu0 0.0
    %2119 = vmatpush1.msra.mxu0 %v2015
    %2120 = vmatprep.subr.mxu0 0.0
    %2121 = vmatpush1.msra.mxu0 %v2018
    %2122 = vmatprep.subr.mxu0 0.0
    %2123 = vmatpush1.msra.mxu0 0.0
    %2124 = vmatprep.subr.mxu0 0.0
    %2125 = vmatpush1.msra.mxu0 0.0
    %2126 = vmatprep.subr.mxu0 0.0
    %2127 = vmatpush1.msra.mxu0 0.0
    %2128 = vmatprep.subr.mxu0 0.0
    %2129 = vmatpush1.msra.mxu0 0.0
    %2130 = vmatprep.subr.mxu0 0.0
    %2131 = vmatpush1.msra.mxu0 0.0
    %2132 = vmatprep.subr.mxu0 0.0
    %2133 = vmatpush1.msra.mxu0 0.0
    %2134 = vmatprep.subr.mxu0 0.0
    %2135 = vmatpush1.msra.mxu0 0.0
    %2136 = vmatprep.subr.mxu0 0.0
    %2137 = vmatpush1.msra.mxu0 0.0
    %2138 = vmatprep.subr.mxu0 0.0
    %2139 = vmatpush1.msra.mxu0 0.0
    %2140 = vmatprep.subr.mxu0 0.0
    %2141 = vmatpush1.msra.mxu0 0.0
    %2142 = vmatprep.subr.mxu0 0.0
    %2143 = vmatpush1.msra.mxu0 0.0
    %2144 = vmatprep.subr.mxu0 0.0
    %2145 = vmatpush1.msra.mxu0 0.0
    %2146 = vmatprep.subr.mxu0 0.0
    %2147 = vmatpush1.msra.mxu0 0.0
    %2148 = vmatprep.subr.mxu0 0.0
    %2149 = vmatpush1.msra.mxu0 0.0
    %2150 = vmatprep.subr.mxu0 0.0
    %2151 = vmatpush1.msra.mxu0 0.0
    %2152 = vmatprep.subr.mxu0 0.0
    %2153 = vmatpush1.msra.mxu0 0.0
    %2154 = vmatprep.mubr.f32.mxu0 0.0
    %2155 = vmatmul.mubr.f32.gmra.mrb[0].mxu0 %v1964
    %v2156 = vpop.f32.mrb[0].mxu0
    %v2157 = vadd.f32 %v504, %v2156
    %v2158 = vpop.f32.mrb[0].mxu0
    %2159 = vdwg.mxu0
    %v2160 = vadd.f32 %v1968, %v2086
    %v2161 = vxor.u32 %v2160, 2147483648
    %v2162 = vmul.f32 %v2161, 1.442695
    %v2163 = vpow.pop %v2162
    %v2164 = vadd.f32 %v2163, 1.0
    %v2165 = vrcp.pop %v2164
    %v2166 = vmul.f32 1.0, %v2165
    %v2167 = vadd.f32 %v1969, %v2088
    %v2168 = vxor.u32 %v2167, 2147483648
    %v2169 = vmul.f32 %v2168, 1.442695
    %v2170 = vpow.pop %v2169
    %v2171 = vadd.f32 %v2170, 1.0
    %v2172 = vrcp.pop %v2171
    %v2173 = vmul.f32 1.0, %v2172
    %v2174 = vmul.f32 %v2166, %v2157
    %v2175 = vadd.f32 %v1970, %v2174
    %v2176 = vtanh.pop %v2175
    %v2177 = vsub.f32 1.0, %v2173
    %v2178 = vmul.f32 %v2177, %v2176
    %v2179 = vmul.f32 %v2173, %v1964
    %v2180 = vadd.f32 %v2178, %v2179
    %s2181 = scalar_lea.vmem [#allocation3], 56
    %2182 = vst [vmem:[%s2181] sm:$0xff] %v2180
    %v2183 = vld [vmem:[#allocation3] sm:$0xff]
    %v2184 = vld [vmem:[#allocation3 + $0x8] sm:$0xff]
    %v2185 = vld [vmem:[#allocation3 + $0x10] sm:$0xff]
    %v2186 = vld [vmem:[#allocation3 + $0x18] sm:$0xff]
    %v2187 = vld [vmem:[#allocation3 + $0x20] sm:$0xff]
    %v2188 = vld [vmem:[#allocation3 + $0x28] sm:$0xff]
    %v2189 = vld [vmem:[#allocation3 + $0x30] sm:$0xff]
    %v2190 = vld [vmem:[#allocation3 + $0x38] sm:$0xff]
    %v2191 = vld [vmem:[#allocation9] sm:$0xff]
    %v2192 = vld [vmem:[#allocation9 + $0x8] sm:$0xff]
    %v2193 = vld [vmem:[#allocation9 + $0x10] sm:$0xff]
    %v2194 = vld [vmem:[#allocation9 + $0x18] sm:$0xff]
    %v2195 = vld [vmem:[#allocation9 + $0x20] sm:$0xff]
    %v2196 = vld [vmem:[#allocation9 + $0x28] sm:$0xff]
    %v2197 = vld [vmem:[#allocation9 + $0x30] sm:$0xff]
    %v2198 = vld [vmem:[#allocation9 + $0x38] sm:$0xff]
    %v2199 = vld [vmem:[#allocation9 + $0x40] sm:$0xff]
    %v2200 = vld [vmem:[#allocation9 + $0x48] sm:$0xff]
    %v2201 = vld [vmem:[#allocation9 + $0x50] sm:$0xff]
    %v2202 = vld [vmem:[#allocation9 + $0x58] sm:$0xff]
    %v2203 = vld [vmem:[#allocation9 + $0x60] sm:$0xff]
    %v2204 = vld [vmem:[#allocation9 + $0x68] sm:$0xff]
    %v2205 = vld [vmem:[#allocation9 + $0x70] sm:$0xff]
    %v2206 = vld [vmem:[#allocation9 + $0x78] sm:$0xff]
    %v2207 = vld [vmem:[%s6] sm:$0x1]
    %v2209 = vlaneseq
    %v2210 = vshrl.u32 %v2209, 7
    %v2211 = vsub.s32 0, %v2210
    %v2212 = vrot.slane %v2207, %v2211
    %2214 = vmatprep.subr.mxu0 0.0
    %2215 = vmatpush1.msra.mxu0 %v2191
    %2216 = vmatprep.subr.mxu0 0.0
    %2217 = vmatpush1.msra.mxu0 %v2192
    %2218 = vmatprep.subr.mxu0 0.0
    %2219 = vmatpush1.msra.mxu0 %v2193
    %2220 = vmatprep.subr.mxu0 0.0
    %2221 = vmatpush1.msra.mxu0 %v2194
    %2222 = vmatprep.subr.mxu0 0.0
    %2223 = vmatpush1.msra.mxu0 %v2195
    %2224 = vmatprep.subr.mxu0 0.0
    %2225 = vmatpush1.msra.mxu0 %v2196
    %2226 = vmatprep.subr.mxu0 0.0
    %2227 = vmatpush1.msra.mxu0 %v2197
    %2228 = vmatprep.subr.mxu0 0.0
    %2229 = vmatpush1.msra.mxu0 %v2198
    %2230 = vmatprep.subr.mxu0 0.0
    %2231 = vmatpush1.msra.mxu0 %v2199
    %2232 = vmatprep.subr.mxu0 0.0
    %2233 = vmatpush1.msra.mxu0 %v2200
    %2234 = vmatprep.subr.mxu0 0.0
    %2235 = vmatpush1.msra.mxu0 %v2201
    %2236 = vmatprep.subr.mxu0 0.0
    %2237 = vmatpush1.msra.mxu0 %v2202
    %2238 = vmatprep.subr.mxu0 0.0
    %2239 = vmatpush1.msra.mxu0 %v2203
    %2240 = vmatprep.subr.mxu0 0.0
    %2241 = vmatpush1.msra.mxu0 %v2204
    %2242 = vmatprep.subr.mxu0 0.0
    %2243 = vmatpush1.msra.mxu0 %v2205
    %2244 = vmatprep.subr.mxu0 0.0
    %2245 = vmatpush1.msra.mxu0 %v2206
    %2246 = vmatprep.subr.mxu0 0.0
    %2247 = vmatpush1.msra.mxu0 0.0
    %2248 = vmatprep.subr.mxu0 0.0
    %2249 = vmatpush1.msra.mxu0 0.0
    %2250 = vmatprep.subr.mxu0 0.0
    %2251 = vmatpush1.msra.mxu0 0.0
    %2252 = vmatprep.subr.mxu0 0.0
    %2253 = vmatpush1.msra.mxu0 0.0
    %2254 = vmatprep.subr.mxu0 0.0
    %2255 = vmatpush1.msra.mxu0 0.0
    %2256 = vmatprep.subr.mxu0 0.0
    %2257 = vmatpush1.msra.mxu0 0.0
    %2258 = vmatprep.subr.mxu0 0.0
    %2259 = vmatpush1.msra.mxu0 0.0
    %2260 = vmatprep.subr.mxu0 0.0
    %2261 = vmatpush1.msra.mxu0 0.0
    %2262 = vmatprep.subr.mxu0 0.0
    %2263 = vmatpush1.msra.mxu0 0.0
    %2264 = vmatprep.subr.mxu0 0.0
    %2265 = vmatpush1.msra.mxu0 0.0
    %2266 = vmatprep.subr.mxu0 0.0
    %2267 = vmatpush1.msra.mxu0 0.0
    %2268 = vmatprep.subr.mxu0 0.0
    %2269 = vmatpush1.msra.mxu0 0.0
    %2270 = vmatprep.subr.mxu0 0.0
    %2271 = vmatpush1.msra.mxu0 0.0
    %2272 = vmatprep.subr.mxu0 0.0
    %2273 = vmatpush1.msra.mxu0 0.0
    %2274 = vmatprep.subr.mxu0 0.0
    %2275 = vmatpush1.msra.mxu0 0.0
    %2276 = vmatprep.subr.mxu0 0.0
    %2277 = vmatpush1.msra.mxu0 0.0
    %2278 = vmatprep.mubr.f32.mxu0 0.0
    %2279 = vmatmul.mubr.f32.gmra.mrb[0].mxu0 %v2183
    %v2280 = vpop.f32.mrb[0].mxu0
    %v2281 = vadd.f32 %v2212, %v2280
    %v2282 = vpop.f32.mrb[0].mxu0
    %2283 = vmatprep.mubr.f32.mxu0 0.0
    %2284 = vmatmul.mubr.f32.gmra.mrb[0].mxu0 %v2184
    %v2285 = vpop.f32.mrb[0].mxu0
    %v2286 = vadd.f32 %v2212, %v2285
    %v2287 = vpop.f32.mrb[0].mxu0
    %2288 = vmatprep.mubr.f32.mxu0 0.0
    %2289 = vmatmul.mubr.f32.gmra.mrb[0].mxu0 %v2185
    %v2290 = vpop.f32.mrb[0].mxu0
    %v2291 = vadd.f32 %v2212, %v2290
    %v2292 = vpop.f32.mrb[0].mxu0
    %2293 = vmatprep.mubr.f32.mxu0 0.0
    %2294 = vmatmul.mubr.f32.gmra.mrb[0].mxu0 %v2186
    %v2295 = vpop.f32.mrb[0].mxu0
    %v2296 = vadd.f32 %v2212, %v2295
    %v2297 = vpop.f32.mrb[0].mxu0
    %2298 = vmatprep.mubr.f32.mxu0 0.0
    %2299 = vmatmul.mubr.f32.gmra.mrb[0].mxu0 %v2187
    %v2300 = vpop.f32.mrb[0].mxu0
    %v2301 = vadd.f32 %v2212, %v2300
    %v2302 = vpop.f32.mrb[0].mxu0
    %2303 = vmatprep.mubr.f32.mxu0 0.0
    %2304 = vmatmul.mubr.f32.gmra.mrb[0].mxu0 %v2188
    %v2305 = vpop.f32.mrb[0].mxu0
    %v2306 = vadd.f32 %v2212, %v2305
    %v2307 = vpop.f32.mrb[0].mxu0
    %2308 = vmatprep.mubr.f32.mxu0 0.0
    %2309 = vmatmul.mubr.f32.gmra.mrb[0].mxu0 %v2189
    %v2310 = vpop.f32.mrb[0].mxu0
    %v2311 = vadd.f32 %v2212, %v2310
    %v2312 = vpop.f32.mrb[0].mxu0
    %2313 = vmatprep.mubr.f32.mxu0 0.0
    %2314 = vmatmul.mubr.f32.gmra.mrb[0].mxu0 %v2190
    %v2315 = vpop.f32.mrb[0].mxu0
    %v2316 = vadd.f32 %v2212, %v2315
    %v2317 = vpop.f32.mrb[0].mxu0
    %2318 = vdwg.mxu0
    %2319 = vst [vmem:[#allocation10] sm:$0xff] %v2281
    %2320 = vst [vmem:[#allocation10 + $0x8] sm:$0xff] %v2286
    %2321 = vst [vmem:[#allocation10 + $0x10] sm:$0xff] %v2291
    %2322 = vst [vmem:[#allocation10 + $0x18] sm:$0xff] %v2296
    %2323 = vst [vmem:[#allocation10 + $0x20] sm:$0xff] %v2301
    %2324 = vst [vmem:[#allocation10 + $0x28] sm:$0xff] %v2306
    %2325 = vst [vmem:[#allocation10 + $0x30] sm:$0xff] %v2311
    %2326 = vst [vmem:[#allocation10 + $0x38] sm:$0xff] %v2316
    %2327 = vst [vmem:[#allocation11] sm:$0xff] %v2180
    // Predicated region
    $region46: #{tpu_custom_call.1} parent=1 // pred_check
      _
    $region47: #{tpu_custom_call.1} parent=1 // pred_check_branch
      %2329 = sbr.rel (0) target = $region49
    $region48: #{tpu_custom_call.1} parent=1 // pred_region
      %s2331 = ssub.s32 1024, 1024
      %2332 = vsyncadd [#allocation6], %s2331
      %s2333 = sshll.u32 [#allocation10], 4
      %s2334 = int_to_ptr.vmem [resolvable:$true] %s2333
      %2339 = dma.vmem_to_hbm [thread:$0]  %s2334, 1024, %s8, [#allocation6], 128, 128, 8
    $region49: #{tpu_custom_call.1} parent=1 // pred_fallthru
      _
    // Predicated region
    $region50: #{tpu_custom_call.1} parent=1 // pred_check
      _
    $region51: #{tpu_custom_call.1} parent=1 // pred_check_branch
      %2341 = sbr.rel (0) target = $region53
    $region52: #{tpu_custom_call.1} parent=1 // pred_region
      %s2343 = ssub.s32 128, 128
      %2344 = vsyncadd [#allocation12], %s2343
      %s2346 = sshll.u32 [#allocation11], 4
      %s2347 = int_to_ptr.vmem [resolvable:$true] %s2346
      %2349 = dma.vmem_to_hbm [thread:$0]  %s2347, 128, %s9, [#allocation12]
    $region53: #{tpu_custom_call.1} parent=1 // pred_fallthru
      _
    // Predicated region
    $region54: #{tpu_custom_call.1} parent=1 // pred_check
      _
    $region55: #{tpu_custom_call.1} parent=1 // pred_check_branch
      %2351 = sbr.rel (0) target = $region57
    $region56: #{tpu_custom_call.1} parent=1 // pred_region
      %2352 = dma.done [#allocation6], 1024
    $region57: #{tpu_custom_call.1} parent=1 // pred_fallthru
      _
    // Predicated region
    $region58: #{tpu_custom_call.1} parent=1 // pred_check
      _
    $region59: #{tpu_custom_call.1} parent=1 // pred_check_branch
      %2354 = sbr.rel (0) target = $region61
    $region60: #{tpu_custom_call.1} parent=1 // pred_region
      %2355 = dma.done [#allocation12], 128
    $region61: #{tpu_custom_call.1} parent=1 // pred_fallthru
      _
    %2356 = vsyncpa [#allocation5], 1
    %2357 = vsyncpa [#allocation8], 1
    %2358 = vsyncpa [#allocation6], 1
    %2359 = vsyncpa [#allocation12], 1

</llo_original>
